<compile_context>
chip_gen: v7x
topology: tpu7x:2x2x1
jax: 0.10.0
libtpu: 0.0.40
codegen_flags: <defaults>
</compile_context>

<pallas_src>
import math

import numpy as np
import jax
import jax.numpy as jnp
from jax.experimental import pallas as pl
from jax.experimental.pallas import tpu as pltpu


# ----------------------------------------------------------------------------
# Host-side constant precomputation (mirrors sympy bessel_basis / real_sph_harm)
# ----------------------------------------------------------------------------
def _np_sph_jl(l, t):
    """Spherical Bessel function of the first kind j_l (numpy, float64)."""
    t = np.asarray(t, dtype=np.float64)
    j0 = np.sin(t) / t
    if l == 0:
        return j0
    j1 = np.sin(t) / (t * t) - np.cos(t) / t
    if l == 1:
        return j1
    jm1, jc = j0, j1
    for n in range(1, l):
        jm1, jc = jc, (2 * n + 1) / t * jc - jm1
    return jc


def _bessel_zeros(num_spherical, num_radial):
    """First num_radial zeros of j_l for l = 0..num_spherical-1 (bisection)."""
    n, k = num_spherical, num_radial
    zeros = np.zeros((n, k), dtype=np.float64)
    zeros[0] = np.arange(1, k + 1) * np.pi
    points = np.arange(1, k + n) * np.pi
    racines = np.zeros(k + n - 1, dtype=np.float64)
    for l in range(1, n):
        for j in range(k + n - 1 - l):
            lo, hi = points[j], points[j + 1]
            flo = float(_np_sph_jl(l, lo))
            for _ in range(200):
                mid = 0.5 * (lo + hi)
                fm = float(_np_sph_jl(l, mid))
                if flo * fm <= 0.0:
                    hi = mid
                else:
                    lo, flo = mid, fm
            racines[j] = 0.5 * (lo + hi)
        points = racines.copy()
        zeros[l, :k] = racines[:k]
    return zeros


def _bessel_constants(num_spherical, num_radial):
    zeros = _bessel_zeros(num_spherical, num_radial)
    norms = np.zeros_like(zeros)
    for l in range(num_spherical):
        for i in range(num_radial):
            norms[l, i] = 1.0 / math.sqrt(
                0.5 * float(_np_sph_jl(l + 1, zeros[l, i])) ** 2)
    return zeros, norms


def _sph_prefactors(num_spherical):
    return [[math.sqrt((2 * l + 1) * math.factorial(l - m)
                       / (4.0 * math.pi * math.factorial(l + m)))
             for m in range(l + 1)]
            for l in range(num_spherical)]


# ----------------------------------------------------------------------------
# Pallas implementation of TensorBasisLayer (efficient=False path), fused kernel
# ----------------------------------------------------------------------------
class TensorBasisLayerPallas:
    def __init__(self, num_spherical, num_radial, cutoff, envelope_exponent=5,
                 quad_tile=256, out_dtype=jnp.float32):
        assert num_radial <= 64
        self.num_spherical = L = num_spherical
        self.num_radial = R = num_radial
        self.cutoff = float(cutoff)
        self.inv_cutoff = 1.0 / cutoff
        self.norm_const = self.inv_cutoff ** 1.5
        # Envelope(exponent): p = exponent + 1
        p = envelope_exponent + 1
        self.env_p = p
        self.env_a = -(p + 1) * (p + 2) / 2.0
        self.env_b = float(p * (p + 2))
        self.env_c = -p * (p + 1) / 2.0
        zeros, norms = _bessel_constants(L, R)
        self.bessel_zeros = zeros            # z_{l,n}
        self.bessel_norms = norms            # N_{l,n}
        self.prefac = _sph_prefactors(L)
        self.quad_tile = int(quad_tile)
        assert self.quad_tile % 128 == 0
        self.out_dtype = out_dtype

        self.lr = L * R                      # compact radial width
        self.l2 = L * L                      # number of real harmonics
        self.lsq_r = L * L * R               # true output basis width
        # pad basis axis to a lane-dense multiple of 128 (review item: lane-dense stores)
        self.nb_pad = max(128, ((self.lsq_r + 127) // 128) * 128)

        # --- constant operands shipped to the kernel -------------------------
        # flattened Bessel zeros, row = l*R + n                        (LR, 1)
        self.zeros_flat = jnp.asarray(zeros.reshape(self.lr, 1),
                                      dtype=jnp.float32)
        # radial expansion (repeat-interleave over 2l+1 orders), with
        # norm_const * bessel_norm baked in                        (NBpad, LR)
        e_rbf = np.zeros((self.nb_pad, self.lr), np.float32)
        # angular expansion (repeat-interleave over num_radial), with
        # sqrt(2) * spherical-harmonic prefactor baked in          (NBpad, L2)
        e_sph = np.zeros((self.nb_pad, self.l2), np.float32)
        sqrt2 = math.sqrt(2.0)
        for l in range(L):
            for m_idx in range(2 * l + 1):
                m_abs = m_idx if m_idx <= l else 2 * l + 1 - m_idx
                coef = self.prefac[l][m_abs] * (1.0 if m_abs == 0 else sqrt2)
                for n in range(R):
                    row = (l * l + m_idx) * R + n
                    e_rbf[row, l * R + n] = self.norm_const * norms[l, n]
                    e_sph[row, l * l + m_idx] = coef
        self.e_rbf = jnp.asarray(e_rbf)
        self.e_sph = jnp.asarray(e_sph)

    # ------------------------------------------------------------------ kernel
    def _kernel(self, d_ref, al_ref, th_ref, z_ref, erbf_ref, esph_ref,
                out_ref, y_scr):
        L, R = self.num_spherical, self.num_radial
        LR = self.lr

        d = d_ref[...]                        # (1, TQ)  D_ca[id4_reduce_ca]
        al = al_ref[...]                      # (1, TQ)  Alpha_cab (polar)
        th = th_ref[...]                      # (1, TQ)  Theta_cabd (azimuth)

        # ------------------ envelope u(d_scaled), Horner form ----------------
        ds = d * self.inv_cutoff
        inv_ds = 1.0 / ds
        poly = ds ** (self.env_p - 1) * (
            self.env_a + ds * (self.env_b + self.env_c * ds))
        u = jnp.where(ds < 1.0, inv_ds + poly, 0.0)               # (1, TQ)

        # ------------- radial: lane-dense spherical Bessel recursion ---------
        # t[row, q] = z_{l(row), n(row)} * ds[q]; one sin + one cos sweep total.
        t = z_ref[...] * ds                                       # (LR, TQ)
        inv_t = 1.0 / t
        sin_t = jnp.sin(t)
        cos_t = jnp.cos(t)
        j_prev = sin_t * inv_t                                    # j_0
        j_cur = (sin_t * inv_t - cos_t) * inv_t                   # j_1
        row_id = jax.lax.broadcasted_iota(jnp.int32, (LR, 1), 0)
        radial = jnp.where(row_id < R, j_prev, 0.0)
        if L > 1:
            radial = jnp.where((row_id >= R) & (row_id < 2 * R), j_cur, radial)
        for l in range(2, L):
            j_prev, j_cur = j_cur, (2 * l - 1) * inv_t * j_cur - j_prev
            radial = jnp.where((row_id >= l * R) & (row_id < (l + 1) * R),
                               j_cur, radial)
        rbf_env_T = radial * u                # (LR, TQ); norms live in e_rbf

        # ---------------- angular: real spherical harmonics ------------------
        ct, st = jnp.cos(al), jnp.sin(al)
        x = st * jnp.cos(th)                  # C_m = Re((x+iy)^m)
        y = st * jnp.sin(th)                  # S_m = Im((x+iy)^m)
        C = [jnp.ones_like(al)]
        S = [jnp.zeros_like(al)]
        for m in range(1, L):
            C.append(x * C[m - 1] - y * S[m - 1])
            S.append(x * S[m - 1] + y * C[m - 1])
        # Reduced associated Legendre polynomials (Condon-Shortley phase
        # included; sin^m(alpha) factor carried by C_m / S_m).
        P = [[None] * (l + 1) for l in range(L)]
        P[0][0] = jnp.ones_like(al)
        if L > 1:
            P[1][0] = ct
            for j in range(2, L):
                P[j][0] = ((2 * j - 1) * ct * P[j - 1][0]
                           - (j - 1) * P[j - 2][0]) * (1.0 / j)
            for i in range(1, L):
                P[i][i] = (1 - 2 * i) * P[i - 1][i - 1]
                if i + 1 < L:
                    P[i + 1][i] = (2 * i + 1) * ct * P[i][i]
                for j in range(i + 2, L):
                    P[j][i] = ((2 * j - 1) * ct * P[j - 1][i]
                               - (i + j - 1) * P[j - 2][i]) * (1.0 / (j - i))
        # Assemble Y^T (L^2, TQ): row l*l -> m=0, row l*l+m -> +m,
        # row l*l+2l+1-m -> -m.  Prefactors (incl. sqrt(2)) are baked in e_sph.
        for l in range(L):
            y_scr[pl.ds(l * l, 1), :] = P[l][0]
            for m in range(1, l + 1):
                y_scr[pl.ds(l * l + m, 1), :] = C[m] * P[l][m]
                y_scr[pl.ds(l * l + 2 * l + 1 - m, 1), :] = S[m] * P[l][m]
        y_T = y_scr[...]                                           # (L2, TQ)

        # --------- repeat-interleave expansions as MXU matmuls + combine -----
        rbf_exp_T = jnp.dot(erbf_ref[...], rbf_env_T,
                            preferred_element_type=jnp.float32)   # (NBpad, TQ)
        sph_exp_T = jnp.dot(esph_ref[...], y_T,
                            preferred_element_type=jnp.float32)   # (NBpad, TQ)
        out_T = rbf_exp_T * sph_exp_T
        # Single tile-aligned transpose -> lane-dense (TQ, NBpad) store.
        out_ref[...] = jnp.transpose(out_T).astype(out_ref.dtype)

    # ----------------------------------------------------------------- forward
    def __call__(self, D_ca, Alpha_cab, Theta_cabd, id4_reduce_ca, Kidx=None):
        # TODO(synk): efficient=True branch ((rbf_env, sph2) scatter output by
        # (id4_reduce_ca, Kidx)) not implemented; efficient=False path only.
        nQuad = int(Alpha_cab.shape[0])
        NB, NBp = self.lsq_r, self.nb_pad
        if nQuad == 0:
            return jnp.zeros((0, NB), self.out_dtype)
        TQ = self.quad_tile

        # Gather fusion: gather only 4 B/quad of distances (instead of a
        # 4*L^2*R B/quad rbf_env row gather) and recompute the radial basis
        # in-kernel — removes the (nQuad, L^2*R) HBM intermediate entirely.
        d_q = jnp.take(jnp.asarray(D_ca, jnp.float32), id4_reduce_ca, axis=0)
        al = jnp.asarray(Alpha_cab, jnp.float32)
        th = jnp.asarray(Theta_cabd, jnp.float32)

        n_pad = pl.cdiv(nQuad, TQ) * TQ
        if n_pad != nQuad:
            pad = n_pad - nQuad
            # pad distances with the cutoff (envelope -> 0, no 1/0 NaNs).
            d_q = jnp.pad(d_q, (0, pad), constant_values=self.cutoff)
            al = jnp.pad(al, (0, pad))
            th = jnp.pad(th, (0, pad))
        d2 = d_q.reshape(1, n_pad)
        a2 = al.reshape(1, n_pad)
        t2 = th.reshape(1, n_pad)

        cost = pl.CostEstimate(
            flops=int(n_pad * (2 * NBp * (self.lr + self.l2)
                               + 14 * self.lr + 10 * self.l2 + NBp + 64)),
            transcendentals=int(n_pad * (2 * self.lr + 4)),
            bytes_accessed=int(n_pad * (12 + 4 * NBp)
                               + 4 * (self.lr + NBp * (self.lr + self.l2))),
        )

        out = pl.pallas_call(
            self._kernel,
            out_shape=jax.ShapeDtypeStruct((n_pad, NBp), self.out_dtype),
            grid=(n_pad // TQ,),
            in_specs=[
                pl.BlockSpec((1, TQ), lambda i: (0, i)),           # D_ca[id4]
                pl.BlockSpec((1, TQ), lambda i: (0, i)),           # Alpha_cab
                pl.BlockSpec((1, TQ), lambda i: (0, i)),           # Theta_cabd
                pl.BlockSpec((self.lr, 1), lambda i: (0, 0)),      # bessel zeros
                pl.BlockSpec((NBp, self.lr), lambda i: (0, 0)),    # e_rbf
                pl.BlockSpec((NBp, self.l2), lambda i: (0, 0)),    # e_sph
            ],
            out_specs=pl.BlockSpec((TQ, NBp), lambda i: (i, 0)),
            scratch_shapes=[pltpu.VMEM((self.l2, TQ), jnp.float32)],
            compiler_params=pltpu.CompilerParams(
                dimension_semantics=("parallel",)),
            cost_estimate=cost,
        )(d2, a2, t2, self.zeros_flat, self.e_rbf, self.e_sph)

        if n_pad != nQuad or NBp != NB:
            out = out[:nQuad, :NB]
        return out


# ----------------------------------------------------------------------------
# Plain numpy reference (same closed forms, float64) for plumbing validation
# ----------------------------------------------------------------------------
def _reference(layer, D, Alpha, Theta, id4):
    L, R = layer.num_spherical, layer.num_radial
    D = np.asarray(D, np.float64)
    A = np.asarray(Alpha, np.float64)
    T = np.asarray(Theta, np.float64)
    ds = D * layer.inv_cutoff
    p = layer.env_p
    u = np.where(ds < 1.0,
                 1 / ds + layer.env_a * ds ** (p - 1)
                 + layer.env_b * ds ** p + layer.env_c * ds ** (p + 1), 0.0)
    rbf = np.stack([layer.bessel_norms[l, n]
                    * _np_sph_jl(l, layer.bessel_zeros[l, n] * ds)
                    for l in range(L) for n in range(R)], axis=1)
    rbf = rbf * layer.norm_const
    rbf_env = (u[:, None] * rbf).reshape(-1, L, R)
    rbf_env = np.repeat(rbf_env, np.arange(L) * 2 + 1, axis=1).reshape(-1, L * L * R)
    rbf_env = rbf_env[np.asarray(id4)]
    ct, st = np.cos(A), np.sin(A)
    x, y = st * np.cos(T), st * np.sin(T)
    C, S = [np.ones_like(A)], [np.zeros_like(A)]
    for m in range(1, L):
        C.append(x * C[m - 1] - y * S[m - 1])
        S.append(x * S[m - 1] + y * C[m - 1])
    P = [[None] * (l + 1) for l in range(L)]
    P[0][0] = np.ones_like(A)
    if L > 1:
        P[1][0] = ct
        for j in range(2, L):
            P[j][0] = ((2 * j - 1) * ct * P[j - 1][0] - (j - 1) * P[j - 2][0]) / j
        for i in range(1, L):
            P[i][i] = (1 - 2 * i) * P[i - 1][i - 1]
            if i + 1 < L:
                P[i + 1][i] = (2 * i + 1) * ct * P[i][i]
            for j in range(i + 2, L):
                P[j][i] = ((2 * j - 1) * ct * P[j - 1][i]
                           - (i + j - 1) * P[j - 2][i]) / (j - i)
    sqrt2 = math.sqrt(2.0)
    cols = []
    for l in range(L):
        ylm = [None] * (2 * l + 1)
        ylm[0] = layer.prefac[l][0] * P[l][0]
        for m in range(1, l + 1):
            ylm[m] = sqrt2 * layer.prefac[l][m] * C[m] * P[l][m]
            ylm[2 * l + 1 - m] = sqrt2 * layer.prefac[l][m] * S[m] * P[l][m]
        cols.extend(ylm)
    sph = np.repeat(np.stack(cols, axis=1), R, axis=1)
    return rbf_env * sph


if __name__ == "__main__":
    num_spherical, num_radial, cutoff = 4, 8, 5.0       # L^2 * R = 128 lanes
    nEdges, nQuad = 128, 512

    key = jax.random.PRNGKey(0)
    k1, k2, k3, k4 = jax.random.split(key, 4)
    D_ca = jax.random.uniform(k1, (nEdges,), jnp.float32, 0.5, cutoff - 0.1)
    Alpha_cab = jax.random.uniform(k2, (nQuad,), jnp.float32, 0.0, math.pi)
    Theta_cabd = jax.random.uniform(k3, (nQuad,), jnp.float32, 0.0, 2.0 * math.pi)
    id4_reduce_ca = jax.random.randint(k4, (nQuad,), 0, nEdges)
    Kidx = jnp.zeros((nQuad,), jnp.int32)               # unused (efficient=False)

    layer = TensorBasisLayerPallas(num_spherical, num_radial, cutoff,
                                   envelope_exponent=5, quad_tile=256)
    out = layer(D_ca, Alpha_cab, Theta_cabd, id4_reduce_ca, Kidx)
    out = jax.block_until_ready(out)

    assert out.shape == (nQuad, num_spherical ** 2 * num_radial)
    ref = _reference(layer, D_ca, Alpha_cab, Theta_cabd, id4_reduce_ca)
    if not np.allclose(np.asarray(out, np.float64), ref, rtol=1e-3, atol=1e-3):
        err = float(np.max(np.abs(np.asarray(out, np.float64) - ref)))
        raise SystemExit("mismatch vs reference (max abs err %.3e)" % err)
    print("KERNEL_OK")
</pallas_src>

<mosaic_0001>
module attributes {stable_mosaic.version = 11 : i64} {
  func.func @_kernel(%arg0: i32, %arg1: memref<1x256xf32, #tpu.memory_space<vmem>>, %arg2: memref<1x256xf32, #tpu.memory_space<vmem>>, %arg3: memref<1x256xf32, #tpu.memory_space<vmem>>, %arg4: memref<32x1xf32, #tpu.memory_space<vmem>>, %arg5: memref<128x32xf32, #tpu.memory_space<vmem>>, %arg6: memref<128x16xf32, #tpu.memory_space<vmem>>, %arg7: memref<256x128xf32, #tpu.memory_space<vmem>>, %arg8: memref<16x256xf32, #tpu.memory_space<vmem>>) attributes {dimension_semantics = [#tpu.dimension_semantics<parallel>], iteration_bounds = array<i64: 2>, scalar_prefetch = 0 : i64, scratch_operands = 1 : i64, tpu.core_type = #tpu.core_type<tc>, window_params = [{transform_indices = @transform_0, window_bounds = array<i64: 1, 256>}, {transform_indices = @transform_1, window_bounds = array<i64: 1, 256>}, {transform_indices = @transform_2, window_bounds = array<i64: 1, 256>}, {pipeline_mode = #tpu.pipeline_mode<synchronous>, transform_indices = @transform_3, window_bounds = array<i64: 32, 1>}, {pipeline_mode = #tpu.pipeline_mode<synchronous>, transform_indices = @transform_4, window_bounds = array<i64: 128, 32>}, {pipeline_mode = #tpu.pipeline_mode<synchronous>, transform_indices = @transform_5, window_bounds = array<i64: 128, 16>}, {transform_indices = @transform_6, window_bounds = array<i64: 256, 128>}]} {
    %c0 = arith.constant 0 : index
    %c0_0 = arith.constant 0 : index
    %0 = vector.load %arg1[%c0, %c0_0] : memref<1x256xf32, #tpu.memory_space<vmem>>, vector<1x256xf32>
    %c0_1 = arith.constant 0 : index
    %c0_2 = arith.constant 0 : index
    %1 = vector.load %arg2[%c0_1, %c0_2] : memref<1x256xf32, #tpu.memory_space<vmem>>, vector<1x256xf32>
    %c0_3 = arith.constant 0 : index
    %c0_4 = arith.constant 0 : index
    %2 = vector.load %arg3[%c0_3, %c0_4] : memref<1x256xf32, #tpu.memory_space<vmem>>, vector<1x256xf32>
    %cst = arith.constant 2.000000e-01 : f32
    %3 = vector.broadcast %cst : f32 to vector<1x256xf32>
    %4 = arith.mulf %0, %3 : vector<1x256xf32>
    %cst_5 = arith.constant 1.000000e+00 : f32
    %5 = vector.broadcast %cst_5 : f32 to vector<1x256xf32>
    %6 = arith.divf %5, %4 : vector<1x256xf32>
    %7 = arith.mulf %4, %4 : vector<1x256xf32>
    %8 = arith.mulf %7, %7 : vector<1x256xf32>
    %9 = arith.mulf %4, %8 : vector<1x256xf32>
    %cst_6 = arith.constant -2.100000e+01 : f32
    %10 = vector.broadcast %cst_6 : f32 to vector<1x256xf32>
    %11 = arith.mulf %10, %4 : vector<1x256xf32>
    %cst_7 = arith.constant 4.800000e+01 : f32
    %12 = vector.broadcast %cst_7 : f32 to vector<1x256xf32>
    %13 = arith.addf %12, %11 : vector<1x256xf32>
    %14 = arith.mulf %4, %13 : vector<1x256xf32>
    %cst_8 = arith.constant -2.800000e+01 : f32
    %15 = vector.broadcast %cst_8 : f32 to vector<1x256xf32>
    %16 = arith.addf %15, %14 : vector<1x256xf32>
    %17 = arith.mulf %9, %16 : vector<1x256xf32>
    %cst_9 = arith.constant 1.000000e+00 : f32
    %18 = vector.broadcast %cst_9 : f32 to vector<1x256xf32>
    %19 = arith.cmpf olt, %4, %18 : vector<1x256xf32>
    %20 = arith.addf %6, %17 : vector<1x256xf32>
    %cst_10 = arith.constant 0.000000e+00 : f32
    %21 = vector.broadcast %cst_10 : f32 to vector<1x256xf32>
    %22 = arith.select %19, %20, %21 : vector<1x256xi1>, vector<1x256xf32>
    %c0_11 = arith.constant 0 : index
    %c0_12 = arith.constant 0 : index
    %23 = vector.load %arg4[%c0_11, %c0_12] : memref<32x1xf32, #tpu.memory_space<vmem>>, vector<32x1xf32>
    %24 = vector.broadcast %23 : vector<32x1xf32> to vector<32x256xf32>
    %25 = vector.broadcast %4 : vector<1x256xf32> to vector<32x256xf32>
    %26 = arith.mulf %24, %25 : vector<32x256xf32>
    %cst_13 = arith.constant 1.000000e+00 : f32
    %27 = vector.broadcast %cst_13 : f32 to vector<32x256xf32>
    %28 = arith.divf %27, %26 : vector<32x256xf32>
    %29 = math.sin %26 : vector<32x256xf32>
    %30 = math.cos %26 : vector<32x256xf32>
    %31 = arith.mulf %29, %28 : vector<32x256xf32>
    %32 = arith.mulf %29, %28 : vector<32x256xf32>
    %33 = arith.subf %32, %30 : vector<32x256xf32>
    %34 = arith.mulf %33, %28 : vector<32x256xf32>
    %35 = tpu.iota {dimensions = array<i32: 0>} : vector<32x1xi32>
    %c8_i32 = arith.constant 8 : i32
    %36 = vector.broadcast %c8_i32 : i32 to vector<32x1xi32>
    %37 = arith.cmpi slt, %35, %36 : vector<32x1xi32>
    %cst_14 = arith.constant 0.000000e+00 : f32
    %38 = vector.shape_cast %37 : vector<32x1xi1> to vector<32x1xi1>
    %39 = vector.broadcast %38 : vector<32x1xi1> to vector<32x256xi1>
    %40 = vector.broadcast %cst_14 : f32 to vector<32x256xf32>
    %41 = arith.select %39, %31, %40 : vector<32x256xi1>, vector<32x256xf32>
    %c8_i32_15 = arith.constant 8 : i32
    %42 = vector.broadcast %c8_i32_15 : i32 to vector<32x1xi32>
    %43 = arith.cmpi sge, %35, %42 : vector<32x1xi32>
    %c16_i32 = arith.constant 16 : i32
    %44 = vector.broadcast %c16_i32 : i32 to vector<32x1xi32>
    %45 = arith.cmpi slt, %35, %44 : vector<32x1xi32>
    %46 = arith.andi %43, %45 : vector<32x1xi1>
    %47 = vector.shape_cast %46 : vector<32x1xi1> to vector<32x1xi1>
    %48 = vector.broadcast %47 : vector<32x1xi1> to vector<32x256xi1>
    %49 = arith.select %48, %34, %41 : vector<32x256xi1>, vector<32x256xf32>
    %cst_16 = arith.constant 3.000000e+00 : f32
    %50 = vector.broadcast %cst_16 : f32 to vector<32x256xf32>
    %51 = arith.mulf %50, %28 : vector<32x256xf32>
    %52 = arith.mulf %51, %34 : vector<32x256xf32>
    %53 = arith.subf %52, %31 : vector<32x256xf32>
    %c16_i32_17 = arith.constant 16 : i32
    %54 = vector.broadcast %c16_i32_17 : i32 to vector<32x1xi32>
    %55 = arith.cmpi sge, %35, %54 : vector<32x1xi32>
    %c24_i32 = arith.constant 24 : i32
    %56 = vector.broadcast %c24_i32 : i32 to vector<32x1xi32>
    %57 = arith.cmpi slt, %35, %56 : vector<32x1xi32>
    %58 = arith.andi %55, %57 : vector<32x1xi1>
    %59 = vector.shape_cast %58 : vector<32x1xi1> to vector<32x1xi1>
    %60 = vector.broadcast %59 : vector<32x1xi1> to vector<32x256xi1>
    %61 = arith.select %60, %53, %49 : vector<32x256xi1>, vector<32x256xf32>
    %cst_18 = arith.constant 5.000000e+00 : f32
    %62 = vector.broadcast %cst_18 : f32 to vector<32x256xf32>
    %63 = arith.mulf %62, %28 : vector<32x256xf32>
    %64 = arith.mulf %63, %53 : vector<32x256xf32>
    %65 = arith.subf %64, %34 : vector<32x256xf32>
    %c24_i32_19 = arith.constant 24 : i32
    %66 = vector.broadcast %c24_i32_19 : i32 to vector<32x1xi32>
    %67 = arith.cmpi sge, %35, %66 : vector<32x1xi32>
    %c32_i32 = arith.constant 32 : i32
    %68 = vector.broadcast %c32_i32 : i32 to vector<32x1xi32>
    %69 = arith.cmpi slt, %35, %68 : vector<32x1xi32>
    %70 = arith.andi %67, %69 : vector<32x1xi1>
    %71 = vector.shape_cast %70 : vector<32x1xi1> to vector<32x1xi1>
    %72 = vector.broadcast %71 : vector<32x1xi1> to vector<32x256xi1>
    %73 = arith.select %72, %65, %61 : vector<32x256xi1>, vector<32x256xf32>
    %74 = vector.broadcast %22 : vector<1x256xf32> to vector<32x256xf32>
    %75 = arith.mulf %73, %74 : vector<32x256xf32>
    %76 = math.cos %1 : vector<1x256xf32>
    %77 = math.sin %1 : vector<1x256xf32>
    %78 = math.cos %2 : vector<1x256xf32>
    %79 = arith.mulf %77, %78 : vector<1x256xf32>
    %80 = math.sin %2 : vector<1x256xf32>
    %81 = arith.mulf %77, %80 : vector<1x256xf32>
    %cst_20 = arith.constant 1.000000e+00 : f32
    %82 = vector.broadcast %cst_20 : f32 to vector<1x256xf32>
    %cst_21 = arith.constant 0.000000e+00 : f32
    %83 = vector.broadcast %cst_21 : f32 to vector<1x256xf32>
    %84 = arith.mulf %79, %82 : vector<1x256xf32>
    %85 = arith.mulf %81, %83 : vector<1x256xf32>
    %86 = arith.subf %84, %85 : vector<1x256xf32>
    %87 = arith.mulf %79, %83 : vector<1x256xf32>
    %88 = arith.mulf %81, %82 : vector<1x256xf32>
    %89 = arith.addf %87, %88 : vector<1x256xf32>
    %90 = arith.mulf %79, %86 : vector<1x256xf32>
    %91 = arith.mulf %81, %89 : vector<1x256xf32>
    %92 = arith.subf %90, %91 : vector<1x256xf32>
    %93 = arith.mulf %79, %89 : vector<1x256xf32>
    %94 = arith.mulf %81, %86 : vector<1x256xf32>
    %95 = arith.addf %93, %94 : vector<1x256xf32>
    %96 = arith.mulf %79, %92 : vector<1x256xf32>
    %97 = arith.mulf %81, %95 : vector<1x256xf32>
    %98 = arith.subf %96, %97 : vector<1x256xf32>
    %99 = arith.mulf %79, %95 : vector<1x256xf32>
    %100 = arith.mulf %81, %92 : vector<1x256xf32>
    %101 = arith.addf %99, %100 : vector<1x256xf32>
    %cst_22 = arith.constant 1.000000e+00 : f32
    %102 = vector.broadcast %cst_22 : f32 to vector<1x256xf32>
    %cst_23 = arith.constant 3.000000e+00 : f32
    %103 = vector.broadcast %cst_23 : f32 to vector<1x256xf32>
    %104 = arith.mulf %103, %76 : vector<1x256xf32>
    %105 = arith.mulf %104, %76 : vector<1x256xf32>
    %cst_24 = arith.constant 1.000000e+00 : f32
    %106 = vector.broadcast %cst_24 : f32 to vector<1x256xf32>
    %107 = arith.mulf %106, %102 : vector<1x256xf32>
    %108 = arith.subf %105, %107 : vector<1x256xf32>
    %cst_25 = arith.constant 5.000000e-01 : f32
    %109 = vector.broadcast %cst_25 : f32 to vector<1x256xf32>
    %110 = arith.mulf %108, %109 : vector<1x256xf32>
    %cst_26 = arith.constant 5.000000e+00 : f32
    %111 = vector.broadcast %cst_26 : f32 to vector<1x256xf32>
    %112 = arith.mulf %111, %76 : vector<1x256xf32>
    %113 = arith.mulf %112, %110 : vector<1x256xf32>
    %cst_27 = arith.constant 2.000000e+00 : f32
    %114 = vector.broadcast %cst_27 : f32 to vector<1x256xf32>
    %115 = arith.mulf %114, %76 : vector<1x256xf32>
    %116 = arith.subf %113, %115 : vector<1x256xf32>
    %cst_28 = arith.constant 0.333333343 : f32
    %117 = vector.broadcast %cst_28 : f32 to vector<1x256xf32>
    %118 = arith.mulf %116, %117 : vector<1x256xf32>
    %cst_29 = arith.constant -1.000000e+00 : f32
    %119 = vector.broadcast %cst_29 : f32 to vector<1x256xf32>
    %120 = arith.mulf %119, %102 : vector<1x256xf32>
    %cst_30 = arith.constant 3.000000e+00 : f32
    %121 = vector.broadcast %cst_30 : f32 to vector<1x256xf32>
    %122 = arith.mulf %121, %76 : vector<1x256xf32>
    %123 = arith.mulf %122, %120 : vector<1x256xf32>
    %cst_31 = arith.constant 5.000000e+00 : f32
    %124 = vector.broadcast %cst_31 : f32 to vector<1x256xf32>
    %125 = arith.mulf %124, %76 : vector<1x256xf32>
    %126 = arith.mulf %125, %123 : vector<1x256xf32>
    %cst_32 = arith.constant 3.000000e+00 : f32
    %127 = vector.broadcast %cst_32 : f32 to vector<1x256xf32>
    %128 = arith.mulf %127, %120 : vector<1x256xf32>
    %129 = arith.subf %126, %128 : vector<1x256xf32>
    %cst_33 = arith.constant 5.000000e-01 : f32
    %130 = vector.broadcast %cst_33 : f32 to vector<1x256xf32>
    %131 = arith.mulf %129, %130 : vector<1x256xf32>
    %cst_34 = arith.constant -3.000000e+00 : f32
    %132 = vector.broadcast %cst_34 : f32 to vector<1x256xf32>
    %133 = arith.mulf %132, %120 : vector<1x256xf32>
    %cst_35 = arith.constant 5.000000e+00 : f32
    %134 = vector.broadcast %cst_35 : f32 to vector<1x256xf32>
    %135 = arith.mulf %134, %76 : vector<1x256xf32>
    %136 = arith.mulf %135, %133 : vector<1x256xf32>
    %cst_36 = arith.constant -5.000000e+00 : f32
    %137 = vector.broadcast %cst_36 : f32 to vector<1x256xf32>
    %138 = arith.mulf %137, %133 : vector<1x256xf32>
    %c0_37 = arith.constant 0 : index
    %c0_38 = arith.constant 0 : index
    %139 = vector.load %arg8[%c0_37, %c0_38] : memref<16x256xf32, #tpu.memory_space<vmem>>, vector<1x256xf32>
    tpu.vector_store %arg8[%c0_37, %c0_38], %102 {strides = array<i32>} : memref<16x256xf32, #tpu.memory_space<vmem>>, vector<1x256xf32>,
    %c1 = arith.constant 1 : index
    %c0_39 = arith.constant 0 : index
    %140 = vector.load %arg8[%c1, %c0_39] : memref<16x256xf32, #tpu.memory_space<vmem>>, vector<1x256xf32>
    tpu.vector_store %arg8[%c1, %c0_39], %76 {strides = array<i32>} : memref<16x256xf32, #tpu.memory_space<vmem>>, vector<1x256xf32>,
    %141 = arith.mulf %86, %120 : vector<1x256xf32>
    %c2 = arith.constant 2 : index
    %c0_40 = arith.constant 0 : index
    %142 = vector.load %arg8[%c2, %c0_40] : memref<16x256xf32, #tpu.memory_space<vmem>>, vector<1x256xf32>
    tpu.vector_store %arg8[%c2, %c0_40], %141 {strides = array<i32>} : memref<16x256xf32, #tpu.memory_space<vmem>>, vector<1x256xf32>,
    %143 = arith.mulf %89, %120 : vector<1x256xf32>
    %c3 = arith.constant 3 : index
    %c0_41 = arith.constant 0 : index
    %144 = vector.load %arg8[%c3, %c0_41] : memref<16x256xf32, #tpu.memory_space<vmem>>, vector<1x256xf32>
    tpu.vector_store %arg8[%c3, %c0_41], %143 {strides = array<i32>} : memref<16x256xf32, #tpu.memory_space<vmem>>, vector<1x256xf32>,
    %c4 = arith.constant 4 : index
    %c0_42 = arith.constant 0 : index
    %145 = vector.load %arg8[%c4, %c0_42] : memref<16x256xf32, #tpu.memory_space<vmem>>, vector<1x256xf32>
    tpu.vector_store %arg8[%c4, %c0_42], %110 {strides = array<i32>} : memref<16x256xf32, #tpu.memory_space<vmem>>, vector<1x256xf32>,
    %146 = arith.mulf %86, %123 : vector<1x256xf32>
    %c5 = arith.constant 5 : index
    %c0_43 = arith.constant 0 : index
    %147 = vector.load %arg8[%c5, %c0_43] : memref<16x256xf32, #tpu.memory_space<vmem>>, vector<1x256xf32>
    tpu.vector_store %arg8[%c5, %c0_43], %146 {strides = array<i32>} : memref<16x256xf32, #tpu.memory_space<vmem>>, vector<1x256xf32>,
    %148 = arith.mulf %89, %123 : vector<1x256xf32>
    %c8 = arith.constant 8 : index
    %c0_44 = arith.constant 0 : index
    %149 = vector.load %arg8[%c8, %c0_44] : memref<16x256xf32, #tpu.memory_space<vmem>>, vector<1x256xf32>
    tpu.vector_store %arg8[%c8, %c0_44], %148 {strides = array<i32>} : memref<16x256xf32, #tpu.memory_space<vmem>>, vector<1x256xf32>,
    %150 = arith.mulf %92, %133 : vector<1x256xf32>
    %c6 = arith.constant 6 : index
    %c0_45 = arith.constant 0 : index
    %151 = vector.load %arg8[%c6, %c0_45] : memref<16x256xf32, #tpu.memory_space<vmem>>, vector<1x256xf32>
    tpu.vector_store %arg8[%c6, %c0_45], %150 {strides = array<i32>} : memref<16x256xf32, #tpu.memory_space<vmem>>, vector<1x256xf32>,
    %152 = arith.mulf %95, %133 : vector<1x256xf32>
    %c7 = arith.constant 7 : index
    %c0_46 = arith.constant 0 : index
    %153 = vector.load %arg8[%c7, %c0_46] : memref<16x256xf32, #tpu.memory_space<vmem>>, vector<1x256xf32>
    tpu.vector_store %arg8[%c7, %c0_46], %152 {strides = array<i32>} : memref<16x256xf32, #tpu.memory_space<vmem>>, vector<1x256xf32>,
    %c9 = arith.constant 9 : index
    %c0_47 = arith.constant 0 : index
    %154 = vector.load %arg8[%c9, %c0_47] : memref<16x256xf32, #tpu.memory_space<vmem>>, vector<1x256xf32>
    tpu.vector_store %arg8[%c9, %c0_47], %118 {strides = array<i32>} : memref<16x256xf32, #tpu.memory_space<vmem>>, vector<1x256xf32>,
    %155 = arith.mulf %86, %131 : vector<1x256xf32>
    %c10 = arith.constant 10 : index
    %c0_48 = arith.constant 0 : index
    %156 = vector.load %arg8[%c10, %c0_48] : memref<16x256xf32, #tpu.memory_space<vmem>>, vector<1x256xf32>
    tpu.vector_store %arg8[%c10, %c0_48], %155 {strides = array<i32>} : memref<16x256xf32, #tpu.memory_space<vmem>>, vector<1x256xf32>,
    %157 = arith.mulf %89, %131 : vector<1x256xf32>
    %c15 = arith.constant 15 : index
    %c0_49 = arith.constant 0 : index
    %158 = vector.load %arg8[%c15, %c0_49] : memref<16x256xf32, #tpu.memory_space<vmem>>, vector<1x256xf32>
    tpu.vector_store %arg8[%c15, %c0_49], %157 {strides = array<i32>} : memref<16x256xf32, #tpu.memory_space<vmem>>, vector<1x256xf32>,
    %159 = arith.mulf %92, %136 : vector<1x256xf32>
    %c11 = arith.constant 11 : index
    %c0_50 = arith.constant 0 : index
    %160 = vector.load %arg8[%c11, %c0_50] : memref<16x256xf32, #tpu.memory_space<vmem>>, vector<1x256xf32>
    tpu.vector_store %arg8[%c11, %c0_50], %159 {strides = array<i32>} : memref<16x256xf32, #tpu.memory_space<vmem>>, vector<1x256xf32>,
    %161 = arith.mulf %95, %136 : vector<1x256xf32>
    %c14 = arith.constant 14 : index
    %c0_51 = arith.constant 0 : index
    %162 = vector.load %arg8[%c14, %c0_51] : memref<16x256xf32, #tpu.memory_space<vmem>>, vector<1x256xf32>
    tpu.vector_store %arg8[%c14, %c0_51], %161 {strides = array<i32>} : memref<16x256xf32, #tpu.memory_space<vmem>>, vector<1x256xf32>,
    %163 = arith.mulf %98, %138 : vector<1x256xf32>
    %c12 = arith.constant 12 : index
    %c0_52 = arith.constant 0 : index
    %164 = vector.load %arg8[%c12, %c0_52] : memref<16x256xf32, #tpu.memory_space<vmem>>, vector<1x256xf32>
    tpu.vector_store %arg8[%c12, %c0_52], %163 {strides = array<i32>} : memref<16x256xf32, #tpu.memory_space<vmem>>, vector<1x256xf32>,
    %165 = arith.mulf %101, %138 : vector<1x256xf32>
    %c13 = arith.constant 13 : index
    %c0_53 = arith.constant 0 : index
    %166 = vector.load %arg8[%c13, %c0_53] : memref<16x256xf32, #tpu.memory_space<vmem>>, vector<1x256xf32>
    tpu.vector_store %arg8[%c13, %c0_53], %165 {strides = array<i32>} : memref<16x256xf32, #tpu.memory_space<vmem>>, vector<1x256xf32>,
    %c0_54 = arith.constant 0 : index
    %c0_55 = arith.constant 0 : index
    %167 = vector.load %arg8[%c0_54, %c0_55] : memref<16x256xf32, #tpu.memory_space<vmem>>, vector<16x256xf32>
    %c0_56 = arith.constant 0 : index
    %c0_57 = arith.constant 0 : index
    %168 = vector.load %arg5[%c0_56, %c0_57] : memref<128x32xf32, #tpu.memory_space<vmem>>, vector<128x32xf32>
    %cst_58 = arith.constant dense<0.000000e+00> : vector<128x256xf32>
    %169 = tpu.matmul %168, %75, %cst_58 {dimension_numbers = #tpu.dot_dimension_numbers<[1], [0], [0], [1], [0, 0, 1, 1], [], []>} : vector<128x32xf32>, vector<32x256xf32>, vector<128x256xf32> -> vector<128x256xf32>
    %c0_59 = arith.constant 0 : index
    %c0_60 = arith.constant 0 : index
    %170 = vector.load %arg6[%c0_59, %c0_60] : memref<128x16xf32, #tpu.memory_space<vmem>>, vector<128x16xf32>
    %cst_61 = arith.constant dense<0.000000e+00> : vector<128x256xf32>
    %171 = tpu.matmul %170, %167, %cst_61 {dimension_numbers = #tpu.dot_dimension_numbers<[1], [0], [0], [1], [0, 0, 1, 1], [], []>} : vector<128x16xf32>, vector<16x256xf32>, vector<128x256xf32> -> vector<128x256xf32>
    %172 = arith.mulf %169, %171 : vector<128x256xf32>
    %173 = tpu.transpose %172, [1, 0] : vector<128x256xf32> -> vector<256x128xf32>
    %c0_62 = arith.constant 0 : index
    %c0_63 = arith.constant 0 : index
    %174 = vector.load %arg7[%c0_62, %c0_63] : memref<256x128xf32, #tpu.memory_space<vmem>>, vector<256x128xf32>
    tpu.vector_store %arg7[%c0_62, %c0_63], %173 {strides = array<i32>} : memref<256x128xf32, #tpu.memory_space<vmem>>, vector<256x128xf32>,
    return
  }
  func.func @transform_0(%arg0: i32) -> (i32, i32) {
    %c0_i32 = arith.constant 0 : i32
    %c0_i32_0 = arith.constant 0 : i32
    return %c0_i32, %arg0 : i32, i32
  }
  func.func @transform_1(%arg0: i32) -> (i32, i32) {
    %c0_i32 = arith.constant 0 : i32
    %c0_i32_0 = arith.constant 0 : i32
    return %c0_i32, %arg0 : i32, i32
  }
  func.func @transform_2(%arg0: i32) -> (i32, i32) {
    %c0_i32 = arith.constant 0 : i32
    %c0_i32_0 = arith.constant 0 : i32
    return %c0_i32, %arg0 : i32, i32
  }
  func.func @transform_3(%arg0: i32) -> (i32, i32) {
    %c0_i32 = arith.constant 0 : i32
    %c0_i32_0 = arith.constant 0 : i32
    %c0_i32_1 = arith.constant 0 : i32
    return %c0_i32, %c0_i32_0 : i32, i32
  }
  func.func @transform_4(%arg0: i32) -> (i32, i32) {
    %c0_i32 = arith.constant 0 : i32
    %c0_i32_0 = arith.constant 0 : i32
    %c0_i32_1 = arith.constant 0 : i32
    return %c0_i32, %c0_i32_0 : i32, i32
  }
  func.func @transform_5(%arg0: i32) -> (i32, i32) {
    %c0_i32 = arith.constant 0 : i32
    %c0_i32_0 = arith.constant 0 : i32
    %c0_i32_1 = arith.constant 0 : i32
    return %c0_i32, %c0_i32_0 : i32, i32
  }
  func.func @transform_6(%arg0: i32) -> (i32, i32) {
    %c0_i32 = arith.constant 0 : i32
    %c0_i32_0 = arith.constant 0 : i32
    return %arg0, %c0_i32 : i32, i32
  }
}

</mosaic_0001>

<llo_original>
// kernel: tpu_custom_call.1
$region0: #{tpu_custom_call.1}
  #allocation0 [shape = 'u32[]', space=smem, size = 0x4, offset = 0x4, fixed_abs, tag = 'smem constant byte address 0x4 - core index']
  #allocation1 [shape = 'u32[144,128]{1,0:T(1,128)}', space=vmem, size = 0x12000, scoped, tag = 'internal scratch']
  #allocation2 [shape = 'f32[16,256]{1,0:T(8,128)}', space=vmem, size = 0x4000, scoped, tag = 'scratch operand']
  %s0 = inlined_call_operand.vmem [shape: f32[1,512], index: 0, kind: input, shape index: {}]
  %s1 = inlined_call_operand.vmem [shape: f32[1,512], index: 1, kind: input, shape index: {}]
  %s2 = inlined_call_operand.vmem [shape: f32[1,512], index: 2, kind: input, shape index: {}]
  %s3 = inlined_call_operand.vmem [shape: f32[32,1], index: 3, kind: input, shape index: {}]
  %s4 = inlined_call_operand.vmem [shape: f32[128,32], index: 4, kind: input, shape index: {}]
  %s5 = inlined_call_operand.vmem [shape: f32[128,16], index: 5, kind: input, shape index: {}]
  %s6 = inlined_call_operand.hbm [shape: f32[512,128], index: 6, kind: output, shape index: {}]
  %s7 = sld [smem:[#allocation0]]
  $region57: #{tpu_custom_call.1} parent=0
    _
  %s9 = ssub.s32 1, %s7
  %s10 = scalar_select 0, %s9, %s7
  $region1: #{tpu_custom_call.1} parent=0
    #allocation3 [shape = 'u8[262144]{0}', space=vmem, size = 0x40000, scoped, tag = 'output window, operand 0']
    #allocation4 [shape = 's32[2]{0}', space=sflag, size = 0x8, scoped, tag = 'scoped memory for tpu_custom_call.1']
    %11 = vsyncpa [#allocation4], 0
    %s12 = scalar_lea.sflag [#allocation4], 1
    %13 = vsyncpa %s12, 0
    loop: start=0, step=1, limit=4
    $region2: #{tpu_custom_call.1} parent=1 // loop_pre_header
      _
    $region3: #{tpu_custom_call.1} parent=1 // loop_header
      %s15 = sphi 0, %s19
      %p16 = scmp.ge.s32.totalorder %s15, 4
      %s25 = sphi 0, %s27
      %s28 = sphi 0, %s25
      %s29 = sphi 0, %s28
      %s45 = sphi 0, %s29
      %s51 = sphi 0, %s53
      %s54 = sphi 0, %s51
      %s55 = sphi 0, %s54
      %s71 = sphi 0, %s55
      %s77 = sphi 0, %s79
      %s80 = sphi 0, %s77
      %s81 = sphi 0, %s80
      %s97 = sphi 0, %s81
      %s101 = sphi 0, %s101
      %s103 = sphi 0, %s101
      %s104 = sphi 0, %s103
      %s118 = sphi 0, %s104
      %s122 = sphi 0, %s122
      %s124 = sphi 0, %s122
      %s125 = sphi 0, %s124
      %s139 = sphi 0, %s125
      %s143 = sphi 0, %s143
      %s145 = sphi 0, %s143
      %s146 = sphi 0, %s145
      %s160 = sphi 0, %s146
      %s166 = sphi 0, %s168
      %s169 = sphi 0, %s166
      %s170 = sphi 0, %s169
      %s186 = sphi 0, %s170
    $region4: #{tpu_custom_call.1} parent=1 // loop_header_branch
      %18 = sbr.rel (%p16) target = $region8
    $region5: #{tpu_custom_call.1} parent=1 // loop_body
      %s20 = ssub.s32 %s15, 1
      %s21 = ssub.s32 %s15, 2
      %s22 = sadd.s32 %s15, 1
      %s23 = ssub.s32 %s15, %s22
      %p24 = scmp.eq.s32.totalorder %s23, 0
      %s26 = sadd.s32 %s25, 1
      %s27 = scalar_select %p24, %s25, %s26
      %p30 = pneg %p24
      %p31 = scmp.eq.s32.totalorder %s15, 1
      %p32 = por %p30, %p31
      %p33 = scmp.ne.s32.totalorder %s25, %s28
      %p34 = scmp.eq.s32.totalorder %s15, 0
      %p35 = por %p33, %p34
      %p36 = scmp.ne.s32.totalorder %s25, %s28
      %p37 = scmp.eq.s32.totalorder %s20, 1
      %p38 = por %p36, %p37
      %p39 = scmp.ne.s32.totalorder %s28, %s29
      %p40 = scmp.eq.s32.totalorder %s20, 0
      %p41 = por %p39, %p40
      %p42 = scmp.ne.s32.totalorder %s28, %s29
      %p43 = scmp.eq.s32.totalorder %s21, 1
      %p44 = por %p42, %p43
      %p46 = scmp.ne.s32.totalorder %s29, %s45
      %p47 = scmp.eq.s32.totalorder %s21, 0
      %p48 = por %p46, %p47
      %s49 = ssub.s32 %s15, %s22
      %p50 = scmp.eq.s32.totalorder %s49, 0
      %s52 = sadd.s32 %s51, 1
      %s53 = scalar_select %p50, %s51, %s52
      %p56 = pneg %p50
      %p57 = scmp.eq.s32.totalorder %s15, 1
      %p58 = por %p56, %p57
      %p59 = scmp.ne.s32.totalorder %s51, %s54
      %p60 = scmp.eq.s32.totalorder %s15, 0
      %p61 = por %p59, %p60
      %p62 = scmp.ne.s32.totalorder %s51, %s54
      %p63 = scmp.eq.s32.totalorder %s20, 1
      %p64 = por %p62, %p63
      %p65 = scmp.ne.s32.totalorder %s54, %s55
      %p66 = scmp.eq.s32.totalorder %s20, 0
      %p67 = por %p65, %p66
      %p68 = scmp.ne.s32.totalorder %s54, %s55
      %p69 = scmp.eq.s32.totalorder %s21, 1
      %p70 = por %p68, %p69
      %p72 = scmp.ne.s32.totalorder %s55, %s71
      %p73 = scmp.eq.s32.totalorder %s21, 0
      %p74 = por %p72, %p73
      %s75 = ssub.s32 %s15, %s22
      %p76 = scmp.eq.s32.totalorder %s75, 0
      %s78 = sadd.s32 %s77, 1
      %s79 = scalar_select %p76, %s77, %s78
      %p82 = pneg %p76
      %p83 = scmp.eq.s32.totalorder %s15, 1
      %p84 = por %p82, %p83
      %p85 = scmp.ne.s32.totalorder %s77, %s80
      %p86 = scmp.eq.s32.totalorder %s15, 0
      %p87 = por %p85, %p86
      %p88 = scmp.ne.s32.totalorder %s77, %s80
      %p89 = scmp.eq.s32.totalorder %s20, 1
      %p90 = por %p88, %p89
      %p91 = scmp.ne.s32.totalorder %s80, %s81
      %p92 = scmp.eq.s32.totalorder %s20, 0
      %p93 = por %p91, %p92
      %p94 = scmp.ne.s32.totalorder %s80, %s81
      %p95 = scmp.eq.s32.totalorder %s21, 1
      %p96 = por %p94, %p95
      %p98 = scmp.ne.s32.totalorder %s81, %s97
      %p99 = scmp.eq.s32.totalorder %s21, 0
      %p100 = por %p98, %p99
      %s102 = sadd.s32 %s101, 1
      %p105 = scmp.eq.s32.totalorder %s15, 1
      %p106 = scmp.ne.s32.totalorder %s101, %s103
      %p107 = scmp.eq.s32.totalorder %s15, 0
      %p108 = por %p106, %p107
      %p109 = scmp.ne.s32.totalorder %s101, %s103
      %p110 = scmp.eq.s32.totalorder %s20, 1
      %p111 = por %p109, %p110
      %p112 = scmp.ne.s32.totalorder %s103, %s104
      %p113 = scmp.eq.s32.totalorder %s20, 0
      %p114 = por %p112, %p113
      %p115 = scmp.ne.s32.totalorder %s103, %s104
      %p116 = scmp.eq.s32.totalorder %s21, 1
      %p117 = por %p115, %p116
      %p119 = scmp.ne.s32.totalorder %s104, %s118
      %p120 = scmp.eq.s32.totalorder %s21, 0
      %p121 = por %p119, %p120
      %s123 = sadd.s32 %s122, 1
      %p126 = scmp.eq.s32.totalorder %s15, 1
      %p127 = scmp.ne.s32.totalorder %s122, %s124
      %p128 = scmp.eq.s32.totalorder %s15, 0
      %p129 = por %p127, %p128
      %p130 = scmp.ne.s32.totalorder %s122, %s124
      %p131 = scmp.eq.s32.totalorder %s20, 1
      %p132 = por %p130, %p131
      %p133 = scmp.ne.s32.totalorder %s124, %s125
      %p134 = scmp.eq.s32.totalorder %s20, 0
      %p135 = por %p133, %p134
      %p136 = scmp.ne.s32.totalorder %s124, %s125
      %p137 = scmp.eq.s32.totalorder %s21, 1
      %p138 = por %p136, %p137
      %p140 = scmp.ne.s32.totalorder %s125, %s139
      %p141 = scmp.eq.s32.totalorder %s21, 0
      %p142 = por %p140, %p141
      %s144 = sadd.s32 %s143, 1
      %p147 = scmp.eq.s32.totalorder %s15, 1
      %p148 = scmp.ne.s32.totalorder %s143, %s145
      %p149 = scmp.eq.s32.totalorder %s15, 0
      %p150 = por %p148, %p149
      %p151 = scmp.ne.s32.totalorder %s143, %s145
      %p152 = scmp.eq.s32.totalorder %s20, 1
      %p153 = por %p151, %p152
      %p154 = scmp.ne.s32.totalorder %s145, %s146
      %p155 = scmp.eq.s32.totalorder %s20, 0
      %p156 = por %p154, %p155
      %p157 = scmp.ne.s32.totalorder %s145, %s146
      %p158 = scmp.eq.s32.totalorder %s21, 1
      %p159 = por %p157, %p158
      %p161 = scmp.ne.s32.totalorder %s146, %s160
      %p162 = scmp.eq.s32.totalorder %s21, 0
      %p163 = por %p161, %p162
      %s164 = ssub.s32 %s15, %s22
      %p165 = scmp.eq.s32.totalorder %s164, 0
      %s167 = sadd.s32 %s166, 1
      %s168 = scalar_select %p165, %s166, %s167
      %p171 = pneg %p165
      %p172 = scmp.eq.s32.totalorder %s15, 1
      %p173 = por %p171, %p172
      %p174 = scmp.ne.s32.totalorder %s166, %s169
      %p175 = scmp.eq.s32.totalorder %s15, 0
      %p176 = por %p174, %p175
      %p177 = scmp.ne.s32.totalorder %s166, %s169
      %p178 = scmp.eq.s32.totalorder %s20, 1
      %p179 = por %p177, %p178
      %p180 = scmp.ne.s32.totalorder %s169, %s170
      %p181 = scmp.eq.s32.totalorder %s20, 0
      %p182 = por %p180, %p181
      %p183 = scmp.ne.s32.totalorder %s169, %s170
      %p184 = scmp.eq.s32.totalorder %s21, 1
      %p185 = por %p183, %p184
      %p187 = scmp.ne.s32.totalorder %s170, %s186
      %p188 = scmp.eq.s32.totalorder %s21, 0
      %p189 = por %p187, %p188
      %p190 = scmp.le.s32.totalorder 1, %s15
      %p191 = scmp.lt.s32.totalorder %s15, 3
      %p192 = pnand %p190, %p191
      %p193 = pneg %p192
      // Predicated region
      $region9: #{tpu_custom_call.1} parent=5 // pred_check
        _
      $region10: #{tpu_custom_call.1} parent=5 // pred_check_branch
        %195 = sbr.rel (%p192) target = $region12
      $region11: #{tpu_custom_call.1} parent=5 // pred_region
        %s196 = ssub.s32 %s15, 1
        // Predicated region
        $region13: #{tpu_custom_call.1} parent=11 // pred_check
          %p197 = pneg %p114
        $region14: #{tpu_custom_call.1} parent=11 // pred_check_branch
          %199 = sbr.rel (%p197) target = $region16
        $region15: #{tpu_custom_call.1} parent=11 // pred_region
          _
        $region16: #{tpu_custom_call.1} parent=11 // pred_fallthru
          _
        // Predicated region
        $region17: #{tpu_custom_call.1} parent=11 // pred_check
          %p200 = pneg %p135
        $region18: #{tpu_custom_call.1} parent=11 // pred_check_branch
          %202 = sbr.rel (%p200) target = $region20
        $region19: #{tpu_custom_call.1} parent=11 // pred_region
          _
        $region20: #{tpu_custom_call.1} parent=11 // pred_fallthru
          _
        // Predicated region
        $region21: #{tpu_custom_call.1} parent=11 // pred_check
          %p203 = pneg %p156
        $region22: #{tpu_custom_call.1} parent=11 // pred_check_branch
          %205 = sbr.rel (%p203) target = $region24
        $region23: #{tpu_custom_call.1} parent=11 // pred_region
          _
        $region24: #{tpu_custom_call.1} parent=11 // pred_fallthru
          _
      $region12: #{tpu_custom_call.1} parent=5 // pred_fallthru
        _
      %p206 = scmp.lt.s32.totalorder %s15, 2
      // Predicated region
      $region25: #{tpu_custom_call.1} parent=5 // pred_check
        %p207 = pneg %p206
      $region26: #{tpu_custom_call.1} parent=5 // pred_check_branch
        %209 = sbr.rel (%p207) target = $region28
      $region27: #{tpu_custom_call.1} parent=5 // pred_region
        // Predicated region
        $region29: #{tpu_custom_call.1} parent=27 // pred_check
          %p210 = pneg %p35
        $region30: #{tpu_custom_call.1} parent=27 // pred_check_branch
          %212 = sbr.rel (%p210) target = $region32
        $region31: #{tpu_custom_call.1} parent=27 // pred_region
          %s213 = smul.u32 2, %s15
          %p214 = scmp.lt.s32.totalorder %s213, 3
          %s215 = scalar_select %p214, %s213, 3
          %s216 = scalar_lea.vmem %s0, %s215
          %s217 = smul.u32 2, %s15
        $region32: #{tpu_custom_call.1} parent=27 // pred_fallthru
          _
        // Predicated region
        $region33: #{tpu_custom_call.1} parent=27 // pred_check
          %p218 = pneg %p61
        $region34: #{tpu_custom_call.1} parent=27 // pred_check_branch
          %220 = sbr.rel (%p218) target = $region36
        $region35: #{tpu_custom_call.1} parent=27 // pred_region
          %s221 = smul.u32 2, %s15
          %p222 = scmp.lt.s32.totalorder %s221, 3
          %s223 = scalar_select %p222, %s221, 3
          %s224 = scalar_lea.vmem %s1, %s223
          %s225 = smul.u32 2, %s15
        $region36: #{tpu_custom_call.1} parent=27 // pred_fallthru
          _
        // Predicated region
        $region37: #{tpu_custom_call.1} parent=27 // pred_check
          %p226 = pneg %p87
        $region38: #{tpu_custom_call.1} parent=27 // pred_check_branch
          %228 = sbr.rel (%p226) target = $region40
        $region39: #{tpu_custom_call.1} parent=27 // pred_region
          %s229 = smul.u32 2, %s15
          %p230 = scmp.lt.s32.totalorder %s229, 3
          %s231 = scalar_select %p230, %s229, 3
          %s232 = scalar_lea.vmem %s2, %s231
          %s233 = smul.u32 2, %s15
        $region40: #{tpu_custom_call.1} parent=27 // pred_fallthru
          _
      $region28: #{tpu_custom_call.1} parent=5 // pred_fallthru
        _
      %p234 = scmp.le.s32.totalorder 1, %s15
      %p235 = scmp.lt.s32.totalorder %s15, 3
      %p236 = pnand %p234, %p235
      %p237 = pneg %p236
      // Predicated region
      $region41: #{tpu_custom_call.1} parent=5 // pred_check
        _
      $region42: #{tpu_custom_call.1} parent=5 // pred_check_branch
        %239 = sbr.rel (%p236) target = $region44
      $region43: #{tpu_custom_call.1} parent=5 // pred_region
        %s240 = ssub.s32 %s15, 1
        %s241 = smul.u32 2, %s20
        %p242 = scmp.lt.s32.totalorder %s241, 3
        %s243 = scalar_select %p242, %s241, 3
        %s244 = scalar_lea.vmem %s0, %s243
        %p245 = pneg %p41
        %p246 = pneg %p38
        %s247 = smul.u32 2, %s20
        %p248 = scmp.lt.s32.totalorder %s247, 3
        %s249 = scalar_select %p248, %s247, 3
        %s250 = scalar_lea.vmem %s1, %s249
        %p251 = pneg %p67
        %p252 = pneg %p64
        %s253 = smul.u32 2, %s20
        %p254 = scmp.lt.s32.totalorder %s253, 3
        %s255 = scalar_select %p254, %s253, 3
        %s256 = scalar_lea.vmem %s2, %s255
        %p257 = pneg %p93
        %p258 = pneg %p90
        %p259 = pneg %p114
        %p260 = pneg %p111
        %p261 = pneg %p135
        %p262 = pneg %p132
        %p263 = pneg %p156
        %p264 = pneg %p153
        %p265 = pneg %p182
        %p266 = pneg %p179
        %s267 = sand.u32 %s169, 1
        %s268 = scalar_lea.sflag [#allocation4], %s267
        %s269 = sand.u32 %s169, 1
        %s270 = smul.addr %s269, 256
        %s271 = scalar_lea.vmem [#allocation3], %s270
        %s272 = smul.u32 2, %s20
        %p273 = scmp.lt.s32.totalorder %s272, 3
        %s274 = scalar_select %p273, %s272, 3
        %s275 = scalar_lea.vmem %s0, %s274
        %s276 = smul.u32 2, %s20
        %s277 = smul.u32 2, %s20
        %p278 = scmp.lt.s32.totalorder %s277, 3
        %s279 = scalar_select %p278, %s277, 3
        %s280 = scalar_lea.vmem %s1, %s279
        %s281 = smul.u32 2, %s20
        %s282 = smul.u32 2, %s20
        %p283 = scmp.lt.s32.totalorder %s282, 3
        %s284 = scalar_select %p283, %s282, 3
        %s285 = scalar_lea.vmem %s2, %s284
        %s286 = smul.u32 2, %s20
        %s287 = smul.u32 32, %s20
        %v288 = vld [vmem:[%s275] sm:$0x3]
        %v289 = vld [vmem:[%s280] sm:$0x3]
        %v290 = vld [vmem:[%s285] sm:$0x3]
        %v291 = vmul.f32 %v288, 0.2
        %v292 = vrcp.pop %v291
        %v293 = vmul.f32 1.0, %v292
        %v294 = vmul.f32 %v291, %v291
        %v295 = vmul.f32 %v294, %v294
        %v296 = vmul.f32 %v291, %v295
        %v297 = vmul.f32 %v291, -21.0
        %v298 = vadd.f32 %v297, 48.0
        %v299 = vmul.f32 %v291, %v298
        %v300 = vadd.f32 %v299, -28.0
        %v301 = vmul.f32 %v296, %v300
        %vm302 = vcmp.lt.f32.partialorder %v291, 1.0
        %v303 = vadd.f32 %v293, %v301
        %v304 = vsel %vm302, %v303, 0.0
        %v305 = vld [vmem:[%s3] sm:$0xff]
        %v306 = vld [vmem:[%s3 + $0x8] sm:$0xff]
        %v307 = vld [vmem:[%s3 + $0x10] sm:$0xff]
        %v308 = vld [vmem:[%s3 + $0x18] sm:$0xff]
        %310 = vset.pattern.permute.xlu0 0
        %311 = vperm.xlu0 %310, %v305
        %v312 = vpop.permute.xlu0 %311
        %315 = vset.pattern.permute.xlu0 0
        %316 = vperm.xlu0 %315, %v306
        %v317 = vpop.permute.xlu0 %316
        %320 = vset.pattern.permute.xlu0 0
        %321 = vperm.xlu0 %320, %v307
        %v322 = vpop.permute.xlu0 %321
        %325 = vset.pattern.permute.xlu0 0
        %326 = vperm.xlu0 %325, %v308
        %v327 = vpop.permute.xlu0 %326
        %v330 = vlaneseq
        %v331 = vshrl.u32 %v330, 7
        %v332 = vsub.s32 0, %v331
        %v333 = vrot.slane %v291, %v332
        %v334 = vlaneseq
        %v335 = vshrl.u32 %v334, 7
        %v336 = vsub.s32 1, %v335
        %v337 = vrot.slane %v291, %v336
        %v340 = vmul.f32 %v312, %v333
        %v341 = vmul.f32 %v312, %v337
        %v342 = vmul.f32 %v317, %v333
        %v343 = vmul.f32 %v317, %v337
        %v344 = vmul.f32 %v322, %v333
        %v345 = vmul.f32 %v322, %v337
        %v346 = vmul.f32 %v327, %v333
        %v347 = vmul.f32 %v327, %v337
        %v348 = vrcp.pop %v340
        %v349 = vmul.f32 1.0, %v348
        %v350 = vrcp.pop %v341
        %v351 = vmul.f32 1.0, %v350
        %v352 = vrcp.pop %v342
        %v353 = vmul.f32 1.0, %v352
        %v354 = vrcp.pop %v343
        %v355 = vmul.f32 1.0, %v354
        %v356 = vrcp.pop %v344
        %v357 = vmul.f32 1.0, %v356
        %v358 = vrcp.pop %v345
        %v359 = vmul.f32 1.0, %v358
        %v360 = vrcp.pop %v346
        %v361 = vmul.f32 1.0, %v360
        %v362 = vrcp.pop %v347
        %v363 = vmul.f32 1.0, %v362
        %v364 = vand.u32 2147483647, %v340
        %vm365 = vcmp.le.f32.partialorder %v364, 0.7853982
        %vm366 = vcmp.lt.s32.totalorder %v340, 0
        %v367 = vand.u32 %v340, 2139095040
        %v368 = vshrl.u32 %v367, 23
        %v369 = vsub.s32 %v368, 127
        %v370 = vand.u32 2147483647, %v340
        %v371 = vand.u32 %v370, 8388607
        %v372 = vor.u32 %v371, 8388608
        %v373 = vsub.s32 0, %v372
        %v374 = vadd.s32 %v369, 1
        %vm375 = vcmp.gt.s32.totalorder %v374, 0
        %v376 = vsel %vm375, %v374, 0
        %v377 = vshrl.u32 %v376, 5
        %v378 = vand.u32 %v376, 31
        %v379 = vsub.s32 32, %v378
        %v380 = vshrl.u32 683565275, %v379
        %v381 = vshll.u32 683565275, %v378
        %v382 = vshrl.u32 2475754826, %v379
        %v383 = vor.u32 %v381, %v382
        %v384 = vshll.u32 2475754826, %v378
        %v385 = vshrl.u32 2131351028, %v379
        %v386 = vor.u32 %v384, %v385
        %v387 = vshll.u32 2131351028, %v378
        %v388 = vshrl.u32 2102212464, %v379
        %v389 = vor.u32 %v387, %v388
        %v390 = vshll.u32 2102212464, %v378
        %v391 = vshrl.u32 920167782, %v379
        %v392 = vor.u32 %v390, %v391
        %v393 = vshll.u32 920167782, %v378
        %v394 = vshrl.u32 1326507024, %v379
        %v395 = vor.u32 %v393, %v394
        %vm396 = vcmp.lt.s32.totalorder %v377, 1
        %vm397 = vcmp.lt.s32.totalorder %v377, 2
        %vm398 = vcmp.lt.s32.totalorder %v377, 3
        %vm399 = vcmp.lt.s32.totalorder %v377, 4
        %v400 = vsel %vm396, %v380, %v383
        %v401 = vsel %vm399, %v389, 2102212464
        %v402 = vsel %vm398, %v386, %v401
        %v403 = vsel %vm397, %v400, %v402
        %v404 = vsel %vm396, %v383, %v386
        %v405 = vsel %vm399, %v392, 920167782
        %v406 = vsel %vm398, %v389, %v405
        %v407 = vsel %vm397, %v404, %v406
        %v408 = vsel %vm396, %v386, %v389
        %v409 = vsel %vm399, %v395, 1326507024
        %v410 = vsel %vm398, %v392, %v409
        %v411 = vsel %vm397, %v408, %v410
        %v412 = vshll.u32 %v372, 8
        %v413 = vmul.u32.u64.compose %v412, %v411
        %v414 = vextract.low.u32 %v413
        %v415 = vextract.high.u32 %v413
        %v416 = vmul.u32.u64.compose %v412, %v407
        %v417 = vextract.low.u32 %v416
        %v418 = vextract.high.u32 %v416
        %v419 = vmul.u32 %v412, %v403
        %v420 = vadd.s32 %v415, %v417
        %vm421 = vc.u32 %v415, %v417
        %v422 = vadd.s32 %v418, 1
        %v423 = vsel %vm421, %v422, %v418
        %v424 = vadd.s32 %v419, %v423
        %v425 = vadd.s32 %v424, 536870912
        %v426 = vshrl.u32 %v425, 30
        %v427 = vshll.u32 %v426, 30
        %v428 = vsub.s32 %v424, %v427
        %vm429 = vcmp.lt.s32.totalorder %v428, 0
        %v430 = vsub.s32 0, %v428
        %v431 = vsel %vm429, %v430, %v428
        %v432 = vclz %v431
        %v433 = vsub.s32 %v432, 2
        %vm434 = vcmp.gt.s32.totalorder 0, %v433
        %v435 = vsel %vm434, 0, %v433
        %v436 = vsub.s32 32, %v435
        %v437 = vshll.u32 %v428, %v435
        %v438 = vshrl.u32 %v420, %v436
        %v439 = vor.u32 %v437, %v438
        %v440 = vsub.s32 4294967266, %v435
        %v441 = vadd.s32 %v440, 127
        %v442 = vshll.u32 %v441, 23
        %v443 = vor.u32 4788187, %v442
        %v444 = vand.u32 2147483647, %v443
        %v446 = vcvt.s32.f32 %v439
        %v447 = vmul.f32 %v446, %v444
        %v448 = vxor.u32 %v447, 2147483648
        %v449 = vsel %vm366, %v448, %v447
        %v450 = vsub.s32 4, %v426
        %v451 = vsel %vm366, %v450, %v426
        %v452 = vsel %vm365, %v340, %v449
        %v453 = vsel %vm365, 0, %v451
        %v454 = vcosq.f32.pop %v452
        %v455 = vsinq.f32.pop %v452
        %vm456 = vweird.f32 %v340
        %v457 = vadd.s32 %v453, 3
        %v458 = vand.u32 %v457, 3
        %vm459 = vcmp.lt.s32.totalorder %v458, 2
        %vm460 = vcmp.eq.s32.totalorder %v458, 0
        %v461 = vxor.u32 %v455, 2147483648
        %v462 = vsel %vm460, %v454, %v461
        %vm463 = vcmp.eq.s32.totalorder %v458, 2
        %v464 = vxor.u32 %v454, 2147483648
        %v465 = vsel %vm463, %v464, %v455
        %v466 = vsel %vm459, %v462, %v465
        %v467 = vsel %vm456, nan, %v466
        %v468 = vand.u32 2147483647, %v341
        %vm469 = vcmp.le.f32.partialorder %v468, 0.7853982
        %vm470 = vcmp.lt.s32.totalorder %v341, 0
        %v471 = vand.u32 %v341, 2139095040
        %v472 = vshrl.u32 %v471, 23
        %v473 = vsub.s32 %v472, 127
        %v474 = vand.u32 2147483647, %v341
        %v475 = vand.u32 %v474, 8388607
        %v476 = vor.u32 %v475, 8388608
        %v477 = vsub.s32 0, %v476
        %v478 = vadd.s32 %v473, 1
        %vm479 = vcmp.gt.s32.totalorder %v478, 0
        %v480 = vsel %vm479, %v478, 0
        %v481 = vshrl.u32 %v480, 5
        %v482 = vand.u32 %v480, 31
        %v483 = vsub.s32 32, %v482
        %v484 = vshrl.u32 683565275, %v483
        %v485 = vshll.u32 683565275, %v482
        %v486 = vshrl.u32 2475754826, %v483
        %v487 = vor.u32 %v485, %v486
        %v488 = vshll.u32 2475754826, %v482
        %v489 = vshrl.u32 2131351028, %v483
        %v490 = vor.u32 %v488, %v489
        %v491 = vshll.u32 2131351028, %v482
        %v492 = vshrl.u32 2102212464, %v483
        %v493 = vor.u32 %v491, %v492
        %v494 = vshll.u32 2102212464, %v482
        %v495 = vshrl.u32 920167782, %v483
        %v496 = vor.u32 %v494, %v495
        %v497 = vshll.u32 920167782, %v482
        %v498 = vshrl.u32 1326507024, %v483
        %v499 = vor.u32 %v497, %v498
        %vm500 = vcmp.lt.s32.totalorder %v481, 1
        %vm501 = vcmp.lt.s32.totalorder %v481, 2
        %vm502 = vcmp.lt.s32.totalorder %v481, 3
        %vm503 = vcmp.lt.s32.totalorder %v481, 4
        %v504 = vsel %vm500, %v484, %v487
        %v505 = vsel %vm503, %v493, 2102212464
        %v506 = vsel %vm502, %v490, %v505
        %v507 = vsel %vm501, %v504, %v506
        %v508 = vsel %vm500, %v487, %v490
        %v509 = vsel %vm503, %v496, 920167782
        %v510 = vsel %vm502, %v493, %v509
        %v511 = vsel %vm501, %v508, %v510
        %v512 = vsel %vm500, %v490, %v493
        %v513 = vsel %vm503, %v499, 1326507024
        %v514 = vsel %vm502, %v496, %v513
        %v515 = vsel %vm501, %v512, %v514
        %v516 = vshll.u32 %v476, 8
        %v517 = vmul.u32.u64.compose %v516, %v515
        %v518 = vextract.low.u32 %v517
        %v519 = vextract.high.u32 %v517
        %v520 = vmul.u32.u64.compose %v516, %v511
        %v521 = vextract.low.u32 %v520
        %v522 = vextract.high.u32 %v520
        %v523 = vmul.u32 %v516, %v507
        %v524 = vadd.s32 %v519, %v521
        %vm525 = vc.u32 %v519, %v521
        %v526 = vadd.s32 %v522, 1
        %v527 = vsel %vm525, %v526, %v522
        %v528 = vadd.s32 %v523, %v527
        %v529 = vadd.s32 %v528, 536870912
        %v530 = vshrl.u32 %v529, 30
        %v531 = vshll.u32 %v530, 30
        %v532 = vsub.s32 %v528, %v531
        %vm533 = vcmp.lt.s32.totalorder %v532, 0
        %v534 = vsub.s32 0, %v532
        %v535 = vsel %vm533, %v534, %v532
        %v536 = vclz %v535
        %v537 = vsub.s32 %v536, 2
        %vm538 = vcmp.gt.s32.totalorder 0, %v537
        %v539 = vsel %vm538, 0, %v537
        %v540 = vsub.s32 32, %v539
        %v541 = vshll.u32 %v532, %v539
        %v542 = vshrl.u32 %v524, %v540
        %v543 = vor.u32 %v541, %v542
        %v544 = vsub.s32 4294967266, %v539
        %v545 = vadd.s32 %v544, 127
        %v546 = vshll.u32 %v545, 23
        %v547 = vor.u32 4788187, %v546
        %v548 = vand.u32 2147483647, %v547
        %v550 = vcvt.s32.f32 %v543
        %v551 = vmul.f32 %v550, %v548
        %v552 = vxor.u32 %v551, 2147483648
        %v553 = vsel %vm470, %v552, %v551
        %v554 = vsub.s32 4, %v530
        %v555 = vsel %vm470, %v554, %v530
        %v556 = vsel %vm469, %v341, %v553
        %v557 = vsel %vm469, 0, %v555
        %v558 = vcosq.f32.pop %v556
        %v559 = vsinq.f32.pop %v556
        %vm560 = vweird.f32 %v341
        %v561 = vadd.s32 %v557, 3
        %v562 = vand.u32 %v561, 3
        %vm563 = vcmp.lt.s32.totalorder %v562, 2
        %vm564 = vcmp.eq.s32.totalorder %v562, 0
        %v565 = vxor.u32 %v559, 2147483648
        %v566 = vsel %vm564, %v558, %v565
        %vm567 = vcmp.eq.s32.totalorder %v562, 2
        %v568 = vxor.u32 %v558, 2147483648
        %v569 = vsel %vm567, %v568, %v559
        %v570 = vsel %vm563, %v566, %v569
        %v571 = vsel %vm560, nan, %v570
        %v572 = vand.u32 2147483647, %v342
        %vm573 = vcmp.le.f32.partialorder %v572, 0.7853982
        %vm574 = vcmp.lt.s32.totalorder %v342, 0
        %v575 = vand.u32 %v342, 2139095040
        %v576 = vshrl.u32 %v575, 23
        %v577 = vsub.s32 %v576, 127
        %v578 = vand.u32 2147483647, %v342
        %v579 = vand.u32 %v578, 8388607
        %v580 = vor.u32 %v579, 8388608
        %v581 = vsub.s32 0, %v580
        %v582 = vadd.s32 %v577, 1
        %vm583 = vcmp.gt.s32.totalorder %v582, 0
        %v584 = vsel %vm583, %v582, 0
        %v585 = vshrl.u32 %v584, 5
        %v586 = vand.u32 %v584, 31
        %v587 = vsub.s32 32, %v586
        %v588 = vshrl.u32 683565275, %v587
        %v589 = vshll.u32 683565275, %v586
        %v590 = vshrl.u32 2475754826, %v587
        %v591 = vor.u32 %v589, %v590
        %v592 = vshll.u32 2475754826, %v586
        %v593 = vshrl.u32 2131351028, %v587
        %v594 = vor.u32 %v592, %v593
        %v595 = vshll.u32 2131351028, %v586
        %v596 = vshrl.u32 2102212464, %v587
        %v597 = vor.u32 %v595, %v596
        %v598 = vshll.u32 2102212464, %v586
        %v599 = vshrl.u32 920167782, %v587
        %v600 = vor.u32 %v598, %v599
        %v601 = vshll.u32 920167782, %v586
        %v602 = vshrl.u32 1326507024, %v587
        %v603 = vor.u32 %v601, %v602
        %vm604 = vcmp.lt.s32.totalorder %v585, 1
        %vm605 = vcmp.lt.s32.totalorder %v585, 2
        %vm606 = vcmp.lt.s32.totalorder %v585, 3
        %vm607 = vcmp.lt.s32.totalorder %v585, 4
        %v608 = vsel %vm604, %v588, %v591
        %v609 = vsel %vm607, %v597, 2102212464
        %v610 = vsel %vm606, %v594, %v609
        %v611 = vsel %vm605, %v608, %v610
        %v612 = vsel %vm604, %v591, %v594
        %v613 = vsel %vm607, %v600, 920167782
        %v614 = vsel %vm606, %v597, %v613
        %v615 = vsel %vm605, %v612, %v614
        %v616 = vsel %vm604, %v594, %v597
        %v617 = vsel %vm607, %v603, 1326507024
        %v618 = vsel %vm606, %v600, %v617
        %v619 = vsel %vm605, %v616, %v618
        %v620 = vshll.u32 %v580, 8
        %v621 = vmul.u32.u64.compose %v620, %v619
        %v622 = vextract.low.u32 %v621
        %v623 = vextract.high.u32 %v621
        %v624 = vmul.u32.u64.compose %v620, %v615
        %v625 = vextract.low.u32 %v624
        %v626 = vextract.high.u32 %v624
        %v627 = vmul.u32 %v620, %v611
        %v628 = vadd.s32 %v623, %v625
        %vm629 = vc.u32 %v623, %v625
        %v630 = vadd.s32 %v626, 1
        %v631 = vsel %vm629, %v630, %v626
        %v632 = vadd.s32 %v627, %v631
        %v633 = vadd.s32 %v632, 536870912
        %v634 = vshrl.u32 %v633, 30
        %v635 = vshll.u32 %v634, 30
        %v636 = vsub.s32 %v632, %v635
        %vm637 = vcmp.lt.s32.totalorder %v636, 0
        %v638 = vsub.s32 0, %v636
        %v639 = vsel %vm637, %v638, %v636
        %v640 = vclz %v639
        %v641 = vsub.s32 %v640, 2
        %vm642 = vcmp.gt.s32.totalorder 0, %v641
        %v643 = vsel %vm642, 0, %v641
        %v644 = vsub.s32 32, %v643
        %v645 = vshll.u32 %v636, %v643
        %v646 = vshrl.u32 %v628, %v644
        %v647 = vor.u32 %v645, %v646
        %v648 = vsub.s32 4294967266, %v643
        %v649 = vadd.s32 %v648, 127
        %v650 = vshll.u32 %v649, 23
        %v651 = vor.u32 4788187, %v650
        %v652 = vand.u32 2147483647, %v651
        %v654 = vcvt.s32.f32 %v647
        %v655 = vmul.f32 %v654, %v652
        %v656 = vxor.u32 %v655, 2147483648
        %v657 = vsel %vm574, %v656, %v655
        %v658 = vsub.s32 4, %v634
        %v659 = vsel %vm574, %v658, %v634
        %v660 = vsel %vm573, %v342, %v657
        %v661 = vsel %vm573, 0, %v659
        %v662 = vcosq.f32.pop %v660
        %v663 = vsinq.f32.pop %v660
        %vm664 = vweird.f32 %v342
        %v665 = vadd.s32 %v661, 3
        %v666 = vand.u32 %v665, 3
        %vm667 = vcmp.lt.s32.totalorder %v666, 2
        %vm668 = vcmp.eq.s32.totalorder %v666, 0
        %v669 = vxor.u32 %v663, 2147483648
        %v670 = vsel %vm668, %v662, %v669
        %vm671 = vcmp.eq.s32.totalorder %v666, 2
        %v672 = vxor.u32 %v662, 2147483648
        %v673 = vsel %vm671, %v672, %v663
        %v674 = vsel %vm667, %v670, %v673
        %v675 = vsel %vm664, nan, %v674
        %v676 = vand.u32 2147483647, %v343
        %vm677 = vcmp.le.f32.partialorder %v676, 0.7853982
        %vm678 = vcmp.lt.s32.totalorder %v343, 0
        %v679 = vand.u32 %v343, 2139095040
        %v680 = vshrl.u32 %v679, 23
        %v681 = vsub.s32 %v680, 127
        %v682 = vand.u32 2147483647, %v343
        %v683 = vand.u32 %v682, 8388607
        %v684 = vor.u32 %v683, 8388608
        %v685 = vsub.s32 0, %v684
        %v686 = vadd.s32 %v681, 1
        %vm687 = vcmp.gt.s32.totalorder %v686, 0
        %v688 = vsel %vm687, %v686, 0
        %v689 = vshrl.u32 %v688, 5
        %v690 = vand.u32 %v688, 31
        %v691 = vsub.s32 32, %v690
        %v692 = vshrl.u32 683565275, %v691
        %v693 = vshll.u32 683565275, %v690
        %v694 = vshrl.u32 2475754826, %v691
        %v695 = vor.u32 %v693, %v694
        %v696 = vshll.u32 2475754826, %v690
        %v697 = vshrl.u32 2131351028, %v691
        %v698 = vor.u32 %v696, %v697
        %v699 = vshll.u32 2131351028, %v690
        %v700 = vshrl.u32 2102212464, %v691
        %v701 = vor.u32 %v699, %v700
        %v702 = vshll.u32 2102212464, %v690
        %v703 = vshrl.u32 920167782, %v691
        %v704 = vor.u32 %v702, %v703
        %v705 = vshll.u32 920167782, %v690
        %v706 = vshrl.u32 1326507024, %v691
        %v707 = vor.u32 %v705, %v706
        %vm708 = vcmp.lt.s32.totalorder %v689, 1
        %vm709 = vcmp.lt.s32.totalorder %v689, 2
        %vm710 = vcmp.lt.s32.totalorder %v689, 3
        %vm711 = vcmp.lt.s32.totalorder %v689, 4
        %v712 = vsel %vm708, %v692, %v695
        %v713 = vsel %vm711, %v701, 2102212464
        %v714 = vsel %vm710, %v698, %v713
        %v715 = vsel %vm709, %v712, %v714
        %v716 = vsel %vm708, %v695, %v698
        %v717 = vsel %vm711, %v704, 920167782
        %v718 = vsel %vm710, %v701, %v717
        %v719 = vsel %vm709, %v716, %v718
        %v720 = vsel %vm708, %v698, %v701
        %v721 = vsel %vm711, %v707, 1326507024
        %v722 = vsel %vm710, %v704, %v721
        %v723 = vsel %vm709, %v720, %v722
        %v724 = vshll.u32 %v684, 8
        %v725 = vmul.u32.u64.compose %v724, %v723
        %v726 = vextract.low.u32 %v725
        %v727 = vextract.high.u32 %v725
        %v728 = vmul.u32.u64.compose %v724, %v719
        %v729 = vextract.low.u32 %v728
        %v730 = vextract.high.u32 %v728
        %v731 = vmul.u32 %v724, %v715
        %v732 = vadd.s32 %v727, %v729
        %vm733 = vc.u32 %v727, %v729
        %v734 = vadd.s32 %v730, 1
        %v735 = vsel %vm733, %v734, %v730
        %v736 = vadd.s32 %v731, %v735
        %v737 = vadd.s32 %v736, 536870912
        %v738 = vshrl.u32 %v737, 30
        %v739 = vshll.u32 %v738, 30
        %v740 = vsub.s32 %v736, %v739
        %vm741 = vcmp.lt.s32.totalorder %v740, 0
        %v742 = vsub.s32 0, %v740
        %v743 = vsel %vm741, %v742, %v740
        %v744 = vclz %v743
        %v745 = vsub.s32 %v744, 2
        %vm746 = vcmp.gt.s32.totalorder 0, %v745
        %v747 = vsel %vm746, 0, %v745
        %v748 = vsub.s32 32, %v747
        %v749 = vshll.u32 %v740, %v747
        %v750 = vshrl.u32 %v732, %v748
        %v751 = vor.u32 %v749, %v750
        %v752 = vsub.s32 4294967266, %v747
        %v753 = vadd.s32 %v752, 127
        %v754 = vshll.u32 %v753, 23
        %v755 = vor.u32 4788187, %v754
        %v756 = vand.u32 2147483647, %v755
        %v758 = vcvt.s32.f32 %v751
        %v759 = vmul.f32 %v758, %v756
        %v760 = vxor.u32 %v759, 2147483648
        %v761 = vsel %vm678, %v760, %v759
        %v762 = vsub.s32 4, %v738
        %v763 = vsel %vm678, %v762, %v738
        %v764 = vsel %vm677, %v343, %v761
        %v765 = vsel %vm677, 0, %v763
        %v766 = vcosq.f32.pop %v764
        %v767 = vsinq.f32.pop %v764
        %vm768 = vweird.f32 %v343
        %v769 = vadd.s32 %v765, 3
        %v770 = vand.u32 %v769, 3
        %vm771 = vcmp.lt.s32.totalorder %v770, 2
        %vm772 = vcmp.eq.s32.totalorder %v770, 0
        %v773 = vxor.u32 %v767, 2147483648
        %v774 = vsel %vm772, %v766, %v773
        %vm775 = vcmp.eq.s32.totalorder %v770, 2
        %v776 = vxor.u32 %v766, 2147483648
        %v777 = vsel %vm775, %v776, %v767
        %v778 = vsel %vm771, %v774, %v777
        %v779 = vsel %vm768, nan, %v778
        %v780 = vand.u32 2147483647, %v344
        %vm781 = vcmp.le.f32.partialorder %v780, 0.7853982
        %vm782 = vcmp.lt.s32.totalorder %v344, 0
        %v783 = vand.u32 %v344, 2139095040
        %v784 = vshrl.u32 %v783, 23
        %v785 = vsub.s32 %v784, 127
        %v786 = vand.u32 2147483647, %v344
        %v787 = vand.u32 %v786, 8388607
        %v788 = vor.u32 %v787, 8388608
        %v789 = vsub.s32 0, %v788
        %v790 = vadd.s32 %v785, 1
        %vm791 = vcmp.gt.s32.totalorder %v790, 0
        %v792 = vsel %vm791, %v790, 0
        %v793 = vshrl.u32 %v792, 5
        %v794 = vand.u32 %v792, 31
        %v795 = vsub.s32 32, %v794
        %v796 = vshrl.u32 683565275, %v795
        %v797 = vshll.u32 683565275, %v794
        %v798 = vshrl.u32 2475754826, %v795
        %v799 = vor.u32 %v797, %v798
        %v800 = vshll.u32 2475754826, %v794
        %v801 = vshrl.u32 2131351028, %v795
        %v802 = vor.u32 %v800, %v801
        %v803 = vshll.u32 2131351028, %v794
        %v804 = vshrl.u32 2102212464, %v795
        %v805 = vor.u32 %v803, %v804
        %v806 = vshll.u32 2102212464, %v794
        %v807 = vshrl.u32 920167782, %v795
        %v808 = vor.u32 %v806, %v807
        %v809 = vshll.u32 920167782, %v794
        %v810 = vshrl.u32 1326507024, %v795
        %v811 = vor.u32 %v809, %v810
        %vm812 = vcmp.lt.s32.totalorder %v793, 1
        %vm813 = vcmp.lt.s32.totalorder %v793, 2
        %vm814 = vcmp.lt.s32.totalorder %v793, 3
        %vm815 = vcmp.lt.s32.totalorder %v793, 4
        %v816 = vsel %vm812, %v796, %v799
        %v817 = vsel %vm815, %v805, 2102212464
        %v818 = vsel %vm814, %v802, %v817
        %v819 = vsel %vm813, %v816, %v818
        %v820 = vsel %vm812, %v799, %v802
        %v821 = vsel %vm815, %v808, 920167782
        %v822 = vsel %vm814, %v805, %v821
        %v823 = vsel %vm813, %v820, %v822
        %v824 = vsel %vm812, %v802, %v805
        %v825 = vsel %vm815, %v811, 1326507024
        %v826 = vsel %vm814, %v808, %v825
        %v827 = vsel %vm813, %v824, %v826
        %v828 = vshll.u32 %v788, 8
        %v829 = vmul.u32.u64.compose %v828, %v827
        %v830 = vextract.low.u32 %v829
        %v831 = vextract.high.u32 %v829
        %v832 = vmul.u32.u64.compose %v828, %v823
        %v833 = vextract.low.u32 %v832
        %v834 = vextract.high.u32 %v832
        %v835 = vmul.u32 %v828, %v819
        %v836 = vadd.s32 %v831, %v833
        %vm837 = vc.u32 %v831, %v833
        %v838 = vadd.s32 %v834, 1
        %v839 = vsel %vm837, %v838, %v834
        %v840 = vadd.s32 %v835, %v839
        %v841 = vadd.s32 %v840, 536870912
        %v842 = vshrl.u32 %v841, 30
        %v843 = vshll.u32 %v842, 30
        %v844 = vsub.s32 %v840, %v843
        %vm845 = vcmp.lt.s32.totalorder %v844, 0
        %v846 = vsub.s32 0, %v844
        %v847 = vsel %vm845, %v846, %v844
        %v848 = vclz %v847
        %v849 = vsub.s32 %v848, 2
        %vm850 = vcmp.gt.s32.totalorder 0, %v849
        %v851 = vsel %vm850, 0, %v849
        %v852 = vsub.s32 32, %v851
        %v853 = vshll.u32 %v844, %v851
        %v854 = vshrl.u32 %v836, %v852
        %v855 = vor.u32 %v853, %v854
        %v856 = vsub.s32 4294967266, %v851
        %v857 = vadd.s32 %v856, 127
        %v858 = vshll.u32 %v857, 23
        %v859 = vor.u32 4788187, %v858
        %v860 = vand.u32 2147483647, %v859
        %v862 = vcvt.s32.f32 %v855
        %v863 = vmul.f32 %v862, %v860
        %v864 = vxor.u32 %v863, 2147483648
        %v865 = vsel %vm782, %v864, %v863
        %v866 = vsub.s32 4, %v842
        %v867 = vsel %vm782, %v866, %v842
        %v868 = vsel %vm781, %v344, %v865
        %v869 = vsel %vm781, 0, %v867
        %v870 = vcosq.f32.pop %v868
        %v871 = vsinq.f32.pop %v868
        %vm872 = vweird.f32 %v344
        %v873 = vadd.s32 %v869, 3
        %v874 = vand.u32 %v873, 3
        %vm875 = vcmp.lt.s32.totalorder %v874, 2
        %vm876 = vcmp.eq.s32.totalorder %v874, 0
        %v877 = vxor.u32 %v871, 2147483648
        %v878 = vsel %vm876, %v870, %v877
        %vm879 = vcmp.eq.s32.totalorder %v874, 2
        %v880 = vxor.u32 %v870, 2147483648
        %v881 = vsel %vm879, %v880, %v871
        %v882 = vsel %vm875, %v878, %v881
        %v883 = vsel %vm872, nan, %v882
        %v884 = vand.u32 2147483647, %v345
        %vm885 = vcmp.le.f32.partialorder %v884, 0.7853982
        %vm886 = vcmp.lt.s32.totalorder %v345, 0
        %v887 = vand.u32 %v345, 2139095040
        %v888 = vshrl.u32 %v887, 23
        %v889 = vsub.s32 %v888, 127
        %v890 = vand.u32 2147483647, %v345
        %v891 = vand.u32 %v890, 8388607
        %v892 = vor.u32 %v891, 8388608
        %v893 = vsub.s32 0, %v892
        %v894 = vadd.s32 %v889, 1
        %vm895 = vcmp.gt.s32.totalorder %v894, 0
        %v896 = vsel %vm895, %v894, 0
        %v897 = vshrl.u32 %v896, 5
        %v898 = vand.u32 %v896, 31
        %v899 = vsub.s32 32, %v898
        %v900 = vshrl.u32 683565275, %v899
        %v901 = vshll.u32 683565275, %v898
        %v902 = vshrl.u32 2475754826, %v899
        %v903 = vor.u32 %v901, %v902
        %v904 = vshll.u32 2475754826, %v898
        %v905 = vshrl.u32 2131351028, %v899
        %v906 = vor.u32 %v904, %v905
        %v907 = vshll.u32 2131351028, %v898
        %v908 = vshrl.u32 2102212464, %v899
        %v909 = vor.u32 %v907, %v908
        %v910 = vshll.u32 2102212464, %v898
        %v911 = vshrl.u32 920167782, %v899
        %v912 = vor.u32 %v910, %v911
        %v913 = vshll.u32 920167782, %v898
        %v914 = vshrl.u32 1326507024, %v899
        %v915 = vor.u32 %v913, %v914
        %vm916 = vcmp.lt.s32.totalorder %v897, 1
        %vm917 = vcmp.lt.s32.totalorder %v897, 2
        %vm918 = vcmp.lt.s32.totalorder %v897, 3
        %vm919 = vcmp.lt.s32.totalorder %v897, 4
        %v920 = vsel %vm916, %v900, %v903
        %v921 = vsel %vm919, %v909, 2102212464
        %v922 = vsel %vm918, %v906, %v921
        %v923 = vsel %vm917, %v920, %v922
        %v924 = vsel %vm916, %v903, %v906
        %v925 = vsel %vm919, %v912, 920167782
        %v926 = vsel %vm918, %v909, %v925
        %v927 = vsel %vm917, %v924, %v926
        %v928 = vsel %vm916, %v906, %v909
        %v929 = vsel %vm919, %v915, 1326507024
        %v930 = vsel %vm918, %v912, %v929
        %v931 = vsel %vm917, %v928, %v930
        %v932 = vshll.u32 %v892, 8
        %v933 = vmul.u32.u64.compose %v932, %v931
        %v934 = vextract.low.u32 %v933
        %v935 = vextract.high.u32 %v933
        %v936 = vmul.u32.u64.compose %v932, %v927
        %v937 = vextract.low.u32 %v936
        %v938 = vextract.high.u32 %v936
        %v939 = vmul.u32 %v932, %v923
        %v940 = vadd.s32 %v935, %v937
        %vm941 = vc.u32 %v935, %v937
        %v942 = vadd.s32 %v938, 1
        %v943 = vsel %vm941, %v942, %v938
        %v944 = vadd.s32 %v939, %v943
        %v945 = vadd.s32 %v944, 536870912
        %v946 = vshrl.u32 %v945, 30
        %v947 = vshll.u32 %v946, 30
        %v948 = vsub.s32 %v944, %v947
        %vm949 = vcmp.lt.s32.totalorder %v948, 0
        %v950 = vsub.s32 0, %v948
        %v951 = vsel %vm949, %v950, %v948
        %v952 = vclz %v951
        %v953 = vsub.s32 %v952, 2
        %vm954 = vcmp.gt.s32.totalorder 0, %v953
        %v955 = vsel %vm954, 0, %v953
        %v956 = vsub.s32 32, %v955
        %v957 = vshll.u32 %v948, %v955
        %v958 = vshrl.u32 %v940, %v956
        %v959 = vor.u32 %v957, %v958
        %v960 = vsub.s32 4294967266, %v955
        %v961 = vadd.s32 %v960, 127
        %v962 = vshll.u32 %v961, 23
        %v963 = vor.u32 4788187, %v962
        %v964 = vand.u32 2147483647, %v963
        %v966 = vcvt.s32.f32 %v959
        %v967 = vmul.f32 %v966, %v964
        %v968 = vxor.u32 %v967, 2147483648
        %v969 = vsel %vm886, %v968, %v967
        %v970 = vsub.s32 4, %v946
        %v971 = vsel %vm886, %v970, %v946
        %v972 = vsel %vm885, %v345, %v969
        %v973 = vsel %vm885, 0, %v971
        %v974 = vcosq.f32.pop %v972
        %v975 = vsinq.f32.pop %v972
        %vm976 = vweird.f32 %v345
        %v977 = vadd.s32 %v973, 3
        %v978 = vand.u32 %v977, 3
        %vm979 = vcmp.lt.s32.totalorder %v978, 2
        %vm980 = vcmp.eq.s32.totalorder %v978, 0
        %v981 = vxor.u32 %v975, 2147483648
        %v982 = vsel %vm980, %v974, %v981
        %vm983 = vcmp.eq.s32.totalorder %v978, 2
        %v984 = vxor.u32 %v974, 2147483648
        %v985 = vsel %vm983, %v984, %v975
        %v986 = vsel %vm979, %v982, %v985
        %v987 = vsel %vm976, nan, %v986
        %v988 = vand.u32 2147483647, %v346
        %vm989 = vcmp.le.f32.partialorder %v988, 0.7853982
        %vm990 = vcmp.lt.s32.totalorder %v346, 0
        %v991 = vand.u32 %v346, 2139095040
        %v992 = vshrl.u32 %v991, 23
        %v993 = vsub.s32 %v992, 127
        %v994 = vand.u32 2147483647, %v346
        %v995 = vand.u32 %v994, 8388607
        %v996 = vor.u32 %v995, 8388608
        %v997 = vsub.s32 0, %v996
        %v998 = vadd.s32 %v993, 1
        %vm999 = vcmp.gt.s32.totalorder %v998, 0
        %v1000 = vsel %vm999, %v998, 0
        %v1001 = vshrl.u32 %v1000, 5
        %v1002 = vand.u32 %v1000, 31
        %v1003 = vsub.s32 32, %v1002
        %v1004 = vshrl.u32 683565275, %v1003
        %v1005 = vshll.u32 683565275, %v1002
        %v1006 = vshrl.u32 2475754826, %v1003
        %v1007 = vor.u32 %v1005, %v1006
        %v1008 = vshll.u32 2475754826, %v1002
        %v1009 = vshrl.u32 2131351028, %v1003
        %v1010 = vor.u32 %v1008, %v1009
        %v1011 = vshll.u32 2131351028, %v1002
        %v1012 = vshrl.u32 2102212464, %v1003
        %v1013 = vor.u32 %v1011, %v1012
        %v1014 = vshll.u32 2102212464, %v1002
        %v1015 = vshrl.u32 920167782, %v1003
        %v1016 = vor.u32 %v1014, %v1015
        %v1017 = vshll.u32 920167782, %v1002
        %v1018 = vshrl.u32 1326507024, %v1003
        %v1019 = vor.u32 %v1017, %v1018
        %vm1020 = vcmp.lt.s32.totalorder %v1001, 1
        %vm1021 = vcmp.lt.s32.totalorder %v1001, 2
        %vm1022 = vcmp.lt.s32.totalorder %v1001, 3
        %vm1023 = vcmp.lt.s32.totalorder %v1001, 4
        %v1024 = vsel %vm1020, %v1004, %v1007
        %v1025 = vsel %vm1023, %v1013, 2102212464
        %v1026 = vsel %vm1022, %v1010, %v1025
        %v1027 = vsel %vm1021, %v1024, %v1026
        %v1028 = vsel %vm1020, %v1007, %v1010
        %v1029 = vsel %vm1023, %v1016, 920167782
        %v1030 = vsel %vm1022, %v1013, %v1029
        %v1031 = vsel %vm1021, %v1028, %v1030
        %v1032 = vsel %vm1020, %v1010, %v1013
        %v1033 = vsel %vm1023, %v1019, 1326507024
        %v1034 = vsel %vm1022, %v1016, %v1033
        %v1035 = vsel %vm1021, %v1032, %v1034
        %v1036 = vshll.u32 %v996, 8
        %v1037 = vmul.u32.u64.compose %v1036, %v1035
        %v1038 = vextract.low.u32 %v1037
        %v1039 = vextract.high.u32 %v1037
        %v1040 = vmul.u32.u64.compose %v1036, %v1031
        %v1041 = vextract.low.u32 %v1040
        %v1042 = vextract.high.u32 %v1040
        %v1043 = vmul.u32 %v1036, %v1027
        %v1044 = vadd.s32 %v1039, %v1041
        %vm1045 = vc.u32 %v1039, %v1041
        %v1046 = vadd.s32 %v1042, 1
        %v1047 = vsel %vm1045, %v1046, %v1042
        %v1048 = vadd.s32 %v1043, %v1047
        %v1049 = vadd.s32 %v1048, 536870912
        %v1050 = vshrl.u32 %v1049, 30
        %v1051 = vshll.u32 %v1050, 30
        %v1052 = vsub.s32 %v1048, %v1051
        %vm1053 = vcmp.lt.s32.totalorder %v1052, 0
        %v1054 = vsub.s32 0, %v1052
        %v1055 = vsel %vm1053, %v1054, %v1052
        %v1056 = vclz %v1055
        %v1057 = vsub.s32 %v1056, 2
        %vm1058 = vcmp.gt.s32.totalorder 0, %v1057
        %v1059 = vsel %vm1058, 0, %v1057
        %v1060 = vsub.s32 32, %v1059
        %v1061 = vshll.u32 %v1052, %v1059
        %v1062 = vshrl.u32 %v1044, %v1060
        %v1063 = vor.u32 %v1061, %v1062
        %v1064 = vsub.s32 4294967266, %v1059
        %v1065 = vadd.s32 %v1064, 127
        %v1066 = vshll.u32 %v1065, 23
        %v1067 = vor.u32 4788187, %v1066
        %v1068 = vand.u32 2147483647, %v1067
        %v1070 = vcvt.s32.f32 %v1063
        %v1071 = vmul.f32 %v1070, %v1068
        %v1072 = vxor.u32 %v1071, 2147483648
        %v1073 = vsel %vm990, %v1072, %v1071
        %v1074 = vsub.s32 4, %v1050
        %v1075 = vsel %vm990, %v1074, %v1050
        %v1076 = vsel %vm989, %v346, %v1073
        %v1077 = vsel %vm989, 0, %v1075
        %v1078 = vcosq.f32.pop %v1076
        %v1079 = vsinq.f32.pop %v1076
        %vm1080 = vweird.f32 %v346
        %v1081 = vadd.s32 %v1077, 3
        %v1082 = vand.u32 %v1081, 3
        %vm1083 = vcmp.lt.s32.totalorder %v1082, 2
        %vm1084 = vcmp.eq.s32.totalorder %v1082, 0
        %v1085 = vxor.u32 %v1079, 2147483648
        %v1086 = vsel %vm1084, %v1078, %v1085
        %vm1087 = vcmp.eq.s32.totalorder %v1082, 2
        %v1088 = vxor.u32 %v1078, 2147483648
        %v1089 = vsel %vm1087, %v1088, %v1079
        %v1090 = vsel %vm1083, %v1086, %v1089
        %v1091 = vsel %vm1080, nan, %v1090
        %v1092 = vand.u32 2147483647, %v347
        %vm1093 = vcmp.le.f32.partialorder %v1092, 0.7853982
        %vm1094 = vcmp.lt.s32.totalorder %v347, 0
        %v1095 = vand.u32 %v347, 2139095040
        %v1096 = vshrl.u32 %v1095, 23
        %v1097 = vsub.s32 %v1096, 127
        %v1098 = vand.u32 2147483647, %v347
        %v1099 = vand.u32 %v1098, 8388607
        %v1100 = vor.u32 %v1099, 8388608
        %v1101 = vsub.s32 0, %v1100
        %v1102 = vadd.s32 %v1097, 1
        %vm1103 = vcmp.gt.s32.totalorder %v1102, 0
        %v1104 = vsel %vm1103, %v1102, 0
        %v1105 = vshrl.u32 %v1104, 5
        %v1106 = vand.u32 %v1104, 31
        %v1107 = vsub.s32 32, %v1106
        %v1108 = vshrl.u32 683565275, %v1107
        %v1109 = vshll.u32 683565275, %v1106
        %v1110 = vshrl.u32 2475754826, %v1107
        %v1111 = vor.u32 %v1109, %v1110
        %v1112 = vshll.u32 2475754826, %v1106
        %v1113 = vshrl.u32 2131351028, %v1107
        %v1114 = vor.u32 %v1112, %v1113
        %v1115 = vshll.u32 2131351028, %v1106
        %v1116 = vshrl.u32 2102212464, %v1107
        %v1117 = vor.u32 %v1115, %v1116
        %v1118 = vshll.u32 2102212464, %v1106
        %v1119 = vshrl.u32 920167782, %v1107
        %v1120 = vor.u32 %v1118, %v1119
        %v1121 = vshll.u32 920167782, %v1106
        %v1122 = vshrl.u32 1326507024, %v1107
        %v1123 = vor.u32 %v1121, %v1122
        %vm1124 = vcmp.lt.s32.totalorder %v1105, 1
        %vm1125 = vcmp.lt.s32.totalorder %v1105, 2
        %vm1126 = vcmp.lt.s32.totalorder %v1105, 3
        %vm1127 = vcmp.lt.s32.totalorder %v1105, 4
        %v1128 = vsel %vm1124, %v1108, %v1111
        %v1129 = vsel %vm1127, %v1117, 2102212464
        %v1130 = vsel %vm1126, %v1114, %v1129
        %v1131 = vsel %vm1125, %v1128, %v1130
        %v1132 = vsel %vm1124, %v1111, %v1114
        %v1133 = vsel %vm1127, %v1120, 920167782
        %v1134 = vsel %vm1126, %v1117, %v1133
        %v1135 = vsel %vm1125, %v1132, %v1134
        %v1136 = vsel %vm1124, %v1114, %v1117
        %v1137 = vsel %vm1127, %v1123, 1326507024
        %v1138 = vsel %vm1126, %v1120, %v1137
        %v1139 = vsel %vm1125, %v1136, %v1138
        %v1140 = vshll.u32 %v1100, 8
        %v1141 = vmul.u32.u64.compose %v1140, %v1139
        %v1142 = vextract.low.u32 %v1141
        %v1143 = vextract.high.u32 %v1141
        %v1144 = vmul.u32.u64.compose %v1140, %v1135
        %v1145 = vextract.low.u32 %v1144
        %v1146 = vextract.high.u32 %v1144
        %v1147 = vmul.u32 %v1140, %v1131
        %v1148 = vadd.s32 %v1143, %v1145
        %vm1149 = vc.u32 %v1143, %v1145
        %v1150 = vadd.s32 %v1146, 1
        %v1151 = vsel %vm1149, %v1150, %v1146
        %v1152 = vadd.s32 %v1147, %v1151
        %v1153 = vadd.s32 %v1152, 536870912
        %v1154 = vshrl.u32 %v1153, 30
        %v1155 = vshll.u32 %v1154, 30
        %v1156 = vsub.s32 %v1152, %v1155
        %vm1157 = vcmp.lt.s32.totalorder %v1156, 0
        %v1158 = vsub.s32 0, %v1156
        %v1159 = vsel %vm1157, %v1158, %v1156
        %v1160 = vclz %v1159
        %v1161 = vsub.s32 %v1160, 2
        %vm1162 = vcmp.gt.s32.totalorder 0, %v1161
        %v1163 = vsel %vm1162, 0, %v1161
        %v1164 = vsub.s32 32, %v1163
        %v1165 = vshll.u32 %v1156, %v1163
        %v1166 = vshrl.u32 %v1148, %v1164
        %v1167 = vor.u32 %v1165, %v1166
        %v1168 = vsub.s32 4294967266, %v1163
        %v1169 = vadd.s32 %v1168, 127
        %v1170 = vshll.u32 %v1169, 23
        %v1171 = vor.u32 4788187, %v1170
        %v1172 = vand.u32 2147483647, %v1171
        %v1174 = vcvt.s32.f32 %v1167
        %v1175 = vmul.f32 %v1174, %v1172
        %v1176 = vxor.u32 %v1175, 2147483648
        %v1177 = vsel %vm1094, %v1176, %v1175
        %v1178 = vsub.s32 4, %v1154
        %v1179 = vsel %vm1094, %v1178, %v1154
        %v1180 = vsel %vm1093, %v347, %v1177
        %v1181 = vsel %vm1093, 0, %v1179
        %v1182 = vcosq.f32.pop %v1180
        %v1183 = vsinq.f32.pop %v1180
        %vm1184 = vweird.f32 %v347
        %v1185 = vadd.s32 %v1181, 3
        %v1186 = vand.u32 %v1185, 3
        %vm1187 = vcmp.lt.s32.totalorder %v1186, 2
        %vm1188 = vcmp.eq.s32.totalorder %v1186, 0
        %v1189 = vxor.u32 %v1183, 2147483648
        %v1190 = vsel %vm1188, %v1182, %v1189
        %vm1191 = vcmp.eq.s32.totalorder %v1186, 2
        %v1192 = vxor.u32 %v1182, 2147483648
        %v1193 = vsel %vm1191, %v1192, %v1183
        %v1194 = vsel %vm1187, %v1190, %v1193
        %v1195 = vsel %vm1184, nan, %v1194
        %v1196 = vand.u32 2147483647, %v340
        %vm1197 = vcmp.le.f32.partialorder %v1196, 0.7853982
        %vm1198 = vcmp.lt.s32.totalorder %v340, 0
        %v1199 = vand.u32 %v340, 2139095040
        %v1200 = vshrl.u32 %v1199, 23
        %v1201 = vsub.s32 %v1200, 127
        %v1202 = vand.u32 2147483647, %v340
        %v1203 = vand.u32 %v1202, 8388607
        %v1204 = vor.u32 %v1203, 8388608
        %v1205 = vsub.s32 0, %v1204
        %v1206 = vadd.s32 %v1201, 1
        %vm1207 = vcmp.gt.s32.totalorder %v1206, 0
        %v1208 = vsel %vm1207, %v1206, 0
        %v1209 = vshrl.u32 %v1208, 5
        %v1210 = vand.u32 %v1208, 31
        %v1211 = vsub.s32 32, %v1210
        %v1212 = vshrl.u32 683565275, %v1211
        %v1213 = vshll.u32 683565275, %v1210
        %v1214 = vshrl.u32 2475754826, %v1211
        %v1215 = vor.u32 %v1213, %v1214
        %v1216 = vshll.u32 2475754826, %v1210
        %v1217 = vshrl.u32 2131351028, %v1211
        %v1218 = vor.u32 %v1216, %v1217
        %v1219 = vshll.u32 2131351028, %v1210
        %v1220 = vshrl.u32 2102212464, %v1211
        %v1221 = vor.u32 %v1219, %v1220
        %v1222 = vshll.u32 2102212464, %v1210
        %v1223 = vshrl.u32 920167782, %v1211
        %v1224 = vor.u32 %v1222, %v1223
        %v1225 = vshll.u32 920167782, %v1210
        %v1226 = vshrl.u32 1326507024, %v1211
        %v1227 = vor.u32 %v1225, %v1226
        %vm1228 = vcmp.lt.s32.totalorder %v1209, 1
        %vm1229 = vcmp.lt.s32.totalorder %v1209, 2
        %vm1230 = vcmp.lt.s32.totalorder %v1209, 3
        %vm1231 = vcmp.lt.s32.totalorder %v1209, 4
        %v1232 = vsel %vm1228, %v1212, %v1215
        %v1233 = vsel %vm1231, %v1221, 2102212464
        %v1234 = vsel %vm1230, %v1218, %v1233
        %v1235 = vsel %vm1229, %v1232, %v1234
        %v1236 = vsel %vm1228, %v1215, %v1218
        %v1237 = vsel %vm1231, %v1224, 920167782
        %v1238 = vsel %vm1230, %v1221, %v1237
        %v1239 = vsel %vm1229, %v1236, %v1238
        %v1240 = vsel %vm1228, %v1218, %v1221
        %v1241 = vsel %vm1231, %v1227, 1326507024
        %v1242 = vsel %vm1230, %v1224, %v1241
        %v1243 = vsel %vm1229, %v1240, %v1242
        %v1244 = vshll.u32 %v1204, 8
        %v1245 = vmul.u32.u64.compose %v1244, %v1243
        %v1246 = vextract.low.u32 %v1245
        %v1247 = vextract.high.u32 %v1245
        %v1248 = vmul.u32.u64.compose %v1244, %v1239
        %v1249 = vextract.low.u32 %v1248
        %v1250 = vextract.high.u32 %v1248
        %v1251 = vmul.u32 %v1244, %v1235
        %v1252 = vadd.s32 %v1247, %v1249
        %vm1253 = vc.u32 %v1247, %v1249
        %v1254 = vadd.s32 %v1250, 1
        %v1255 = vsel %vm1253, %v1254, %v1250
        %v1256 = vadd.s32 %v1251, %v1255
        %v1257 = vadd.s32 %v1256, 536870912
        %v1258 = vshrl.u32 %v1257, 30
        %v1259 = vshll.u32 %v1258, 30
        %v1260 = vsub.s32 %v1256, %v1259
        %vm1261 = vcmp.lt.s32.totalorder %v1260, 0
        %v1262 = vsub.s32 0, %v1260
        %v1263 = vsel %vm1261, %v1262, %v1260
        %v1264 = vclz %v1263
        %v1265 = vsub.s32 %v1264, 2
        %vm1266 = vcmp.gt.s32.totalorder 0, %v1265
        %v1267 = vsel %vm1266, 0, %v1265
        %v1268 = vsub.s32 32, %v1267
        %v1269 = vshll.u32 %v1260, %v1267
        %v1270 = vshrl.u32 %v1252, %v1268
        %v1271 = vor.u32 %v1269, %v1270
        %v1272 = vsub.s32 4294967266, %v1267
        %v1273 = vadd.s32 %v1272, 127
        %v1274 = vshll.u32 %v1273, 23
        %v1275 = vor.u32 4788187, %v1274
        %v1276 = vand.u32 2147483647, %v1275
        %v1278 = vcvt.s32.f32 %v1271
        %v1279 = vmul.f32 %v1278, %v1276
        %v1280 = vxor.u32 %v1279, 2147483648
        %v1281 = vsel %vm1198, %v1280, %v1279
        %v1282 = vsub.s32 4, %v1258
        %v1283 = vsel %vm1198, %v1282, %v1258
        %v1284 = vsel %vm1197, %v340, %v1281
        %v1285 = vsel %vm1197, 0, %v1283
        %v1286 = vcosq.f32.pop %v1284
        %v1287 = vsinq.f32.pop %v1284
        %vm1288 = vweird.f32 %v340
        %v1289 = vand.u32 %v1285, 3
        %vm1290 = vcmp.lt.s32.totalorder %v1289, 2
        %vm1291 = vcmp.eq.s32.totalorder %v1289, 0
        %v1292 = vxor.u32 %v1287, 2147483648
        %v1293 = vsel %vm1291, %v1286, %v1292
        %vm1294 = vcmp.eq.s32.totalorder %v1289, 2
        %v1295 = vxor.u32 %v1286, 2147483648
        %v1296 = vsel %vm1294, %v1295, %v1287
        %v1297 = vsel %vm1290, %v1293, %v1296
        %v1298 = vsel %vm1288, nan, %v1297
        %v1299 = vand.u32 2147483647, %v341
        %vm1300 = vcmp.le.f32.partialorder %v1299, 0.7853982
        %vm1301 = vcmp.lt.s32.totalorder %v341, 0
        %v1302 = vand.u32 %v341, 2139095040
        %v1303 = vshrl.u32 %v1302, 23
        %v1304 = vsub.s32 %v1303, 127
        %v1305 = vand.u32 2147483647, %v341
        %v1306 = vand.u32 %v1305, 8388607
        %v1307 = vor.u32 %v1306, 8388608
        %v1308 = vsub.s32 0, %v1307
        %v1309 = vadd.s32 %v1304, 1
        %vm1310 = vcmp.gt.s32.totalorder %v1309, 0
        %v1311 = vsel %vm1310, %v1309, 0
        %v1312 = vshrl.u32 %v1311, 5
        %v1313 = vand.u32 %v1311, 31
        %v1314 = vsub.s32 32, %v1313
        %v1315 = vshrl.u32 683565275, %v1314
        %v1316 = vshll.u32 683565275, %v1313
        %v1317 = vshrl.u32 2475754826, %v1314
        %v1318 = vor.u32 %v1316, %v1317
        %v1319 = vshll.u32 2475754826, %v1313
        %v1320 = vshrl.u32 2131351028, %v1314
        %v1321 = vor.u32 %v1319, %v1320
        %v1322 = vshll.u32 2131351028, %v1313
        %v1323 = vshrl.u32 2102212464, %v1314
        %v1324 = vor.u32 %v1322, %v1323
        %v1325 = vshll.u32 2102212464, %v1313
        %v1326 = vshrl.u32 920167782, %v1314
        %v1327 = vor.u32 %v1325, %v1326
        %v1328 = vshll.u32 920167782, %v1313
        %v1329 = vshrl.u32 1326507024, %v1314
        %v1330 = vor.u32 %v1328, %v1329
        %vm1331 = vcmp.lt.s32.totalorder %v1312, 1
        %vm1332 = vcmp.lt.s32.totalorder %v1312, 2
        %vm1333 = vcmp.lt.s32.totalorder %v1312, 3
        %vm1334 = vcmp.lt.s32.totalorder %v1312, 4
        %v1335 = vsel %vm1331, %v1315, %v1318
        %v1336 = vsel %vm1334, %v1324, 2102212464
        %v1337 = vsel %vm1333, %v1321, %v1336
        %v1338 = vsel %vm1332, %v1335, %v1337
        %v1339 = vsel %vm1331, %v1318, %v1321
        %v1340 = vsel %vm1334, %v1327, 920167782
        %v1341 = vsel %vm1333, %v1324, %v1340
        %v1342 = vsel %vm1332, %v1339, %v1341
        %v1343 = vsel %vm1331, %v1321, %v1324
        %v1344 = vsel %vm1334, %v1330, 1326507024
        %v1345 = vsel %vm1333, %v1327, %v1344
        %v1346 = vsel %vm1332, %v1343, %v1345
        %v1347 = vshll.u32 %v1307, 8
        %v1348 = vmul.u32.u64.compose %v1347, %v1346
        %v1349 = vextract.low.u32 %v1348
        %v1350 = vextract.high.u32 %v1348
        %v1351 = vmul.u32.u64.compose %v1347, %v1342
        %v1352 = vextract.low.u32 %v1351
        %v1353 = vextract.high.u32 %v1351
        %v1354 = vmul.u32 %v1347, %v1338
        %v1355 = vadd.s32 %v1350, %v1352
        %vm1356 = vc.u32 %v1350, %v1352
        %v1357 = vadd.s32 %v1353, 1
        %v1358 = vsel %vm1356, %v1357, %v1353
        %v1359 = vadd.s32 %v1354, %v1358
        %v1360 = vadd.s32 %v1359, 536870912
        %v1361 = vshrl.u32 %v1360, 30
        %v1362 = vshll.u32 %v1361, 30
        %v1363 = vsub.s32 %v1359, %v1362
        %vm1364 = vcmp.lt.s32.totalorder %v1363, 0
        %v1365 = vsub.s32 0, %v1363
        %v1366 = vsel %vm1364, %v1365, %v1363
        %v1367 = vclz %v1366
        %v1368 = vsub.s32 %v1367, 2
        %vm1369 = vcmp.gt.s32.totalorder 0, %v1368
        %v1370 = vsel %vm1369, 0, %v1368
        %v1371 = vsub.s32 32, %v1370
        %v1372 = vshll.u32 %v1363, %v1370
        %v1373 = vshrl.u32 %v1355, %v1371
        %v1374 = vor.u32 %v1372, %v1373
        %v1375 = vsub.s32 4294967266, %v1370
        %v1376 = vadd.s32 %v1375, 127
        %v1377 = vshll.u32 %v1376, 23
        %v1378 = vor.u32 4788187, %v1377
        %v1379 = vand.u32 2147483647, %v1378
        %v1381 = vcvt.s32.f32 %v1374
        %v1382 = vmul.f32 %v1381, %v1379
        %v1383 = vxor.u32 %v1382, 2147483648
        %v1384 = vsel %vm1301, %v1383, %v1382
        %v1385 = vsub.s32 4, %v1361
        %v1386 = vsel %vm1301, %v1385, %v1361
        %v1387 = vsel %vm1300, %v341, %v1384
        %v1388 = vsel %vm1300, 0, %v1386
        %v1389 = vcosq.f32.pop %v1387
        %v1390 = vsinq.f32.pop %v1387
        %vm1391 = vweird.f32 %v341
        %v1392 = vand.u32 %v1388, 3
        %vm1393 = vcmp.lt.s32.totalorder %v1392, 2
        %vm1394 = vcmp.eq.s32.totalorder %v1392, 0
        %v1395 = vxor.u32 %v1390, 2147483648
        %v1396 = vsel %vm1394, %v1389, %v1395
        %vm1397 = vcmp.eq.s32.totalorder %v1392, 2
        %v1398 = vxor.u32 %v1389, 2147483648
        %v1399 = vsel %vm1397, %v1398, %v1390
        %v1400 = vsel %vm1393, %v1396, %v1399
        %v1401 = vsel %vm1391, nan, %v1400
        %v1402 = vand.u32 2147483647, %v342
        %vm1403 = vcmp.le.f32.partialorder %v1402, 0.7853982
        %vm1404 = vcmp.lt.s32.totalorder %v342, 0
        %v1405 = vand.u32 %v342, 2139095040
        %v1406 = vshrl.u32 %v1405, 23
        %v1407 = vsub.s32 %v1406, 127
        %v1408 = vand.u32 2147483647, %v342
        %v1409 = vand.u32 %v1408, 8388607
        %v1410 = vor.u32 %v1409, 8388608
        %v1411 = vsub.s32 0, %v1410
        %v1412 = vadd.s32 %v1407, 1
        %vm1413 = vcmp.gt.s32.totalorder %v1412, 0
        %v1414 = vsel %vm1413, %v1412, 0
        %v1415 = vshrl.u32 %v1414, 5
        %v1416 = vand.u32 %v1414, 31
        %v1417 = vsub.s32 32, %v1416
        %v1418 = vshrl.u32 683565275, %v1417
        %v1419 = vshll.u32 683565275, %v1416
        %v1420 = vshrl.u32 2475754826, %v1417
        %v1421 = vor.u32 %v1419, %v1420
        %v1422 = vshll.u32 2475754826, %v1416
        %v1423 = vshrl.u32 2131351028, %v1417
        %v1424 = vor.u32 %v1422, %v1423
        %v1425 = vshll.u32 2131351028, %v1416
        %v1426 = vshrl.u32 2102212464, %v1417
        %v1427 = vor.u32 %v1425, %v1426
        %v1428 = vshll.u32 2102212464, %v1416
        %v1429 = vshrl.u32 920167782, %v1417
        %v1430 = vor.u32 %v1428, %v1429
        %v1431 = vshll.u32 920167782, %v1416
        %v1432 = vshrl.u32 1326507024, %v1417
        %v1433 = vor.u32 %v1431, %v1432
        %vm1434 = vcmp.lt.s32.totalorder %v1415, 1
        %vm1435 = vcmp.lt.s32.totalorder %v1415, 2
        %vm1436 = vcmp.lt.s32.totalorder %v1415, 3
        %vm1437 = vcmp.lt.s32.totalorder %v1415, 4
        %v1438 = vsel %vm1434, %v1418, %v1421
        %v1439 = vsel %vm1437, %v1427, 2102212464
        %v1440 = vsel %vm1436, %v1424, %v1439
        %v1441 = vsel %vm1435, %v1438, %v1440
        %v1442 = vsel %vm1434, %v1421, %v1424
        %v1443 = vsel %vm1437, %v1430, 920167782
        %v1444 = vsel %vm1436, %v1427, %v1443
        %v1445 = vsel %vm1435, %v1442, %v1444
        %v1446 = vsel %vm1434, %v1424, %v1427
        %v1447 = vsel %vm1437, %v1433, 1326507024
        %v1448 = vsel %vm1436, %v1430, %v1447
        %v1449 = vsel %vm1435, %v1446, %v1448
        %v1450 = vshll.u32 %v1410, 8
        %v1451 = vmul.u32.u64.compose %v1450, %v1449
        %v1452 = vextract.low.u32 %v1451
        %v1453 = vextract.high.u32 %v1451
        %v1454 = vmul.u32.u64.compose %v1450, %v1445
        %v1455 = vextract.low.u32 %v1454
        %v1456 = vextract.high.u32 %v1454
        %v1457 = vmul.u32 %v1450, %v1441
        %v1458 = vadd.s32 %v1453, %v1455
        %vm1459 = vc.u32 %v1453, %v1455
        %v1460 = vadd.s32 %v1456, 1
        %v1461 = vsel %vm1459, %v1460, %v1456
        %v1462 = vadd.s32 %v1457, %v1461
        %v1463 = vadd.s32 %v1462, 536870912
        %v1464 = vshrl.u32 %v1463, 30
        %v1465 = vshll.u32 %v1464, 30
        %v1466 = vsub.s32 %v1462, %v1465
        %vm1467 = vcmp.lt.s32.totalorder %v1466, 0
        %v1468 = vsub.s32 0, %v1466
        %v1469 = vsel %vm1467, %v1468, %v1466
        %v1470 = vclz %v1469
        %v1471 = vsub.s32 %v1470, 2
        %vm1472 = vcmp.gt.s32.totalorder 0, %v1471
        %v1473 = vsel %vm1472, 0, %v1471
        %v1474 = vsub.s32 32, %v1473
        %v1475 = vshll.u32 %v1466, %v1473
        %v1476 = vshrl.u32 %v1458, %v1474
        %v1477 = vor.u32 %v1475, %v1476
        %v1478 = vsub.s32 4294967266, %v1473
        %v1479 = vadd.s32 %v1478, 127
        %v1480 = vshll.u32 %v1479, 23
        %v1481 = vor.u32 4788187, %v1480
        %v1482 = vand.u32 2147483647, %v1481
        %v1484 = vcvt.s32.f32 %v1477
        %v1485 = vmul.f32 %v1484, %v1482
        %v1486 = vxor.u32 %v1485, 2147483648
        %v1487 = vsel %vm1404, %v1486, %v1485
        %v1488 = vsub.s32 4, %v1464
        %v1489 = vsel %vm1404, %v1488, %v1464
        %v1490 = vsel %vm1403, %v342, %v1487
        %v1491 = vsel %vm1403, 0, %v1489
        %v1492 = vcosq.f32.pop %v1490
        %v1493 = vsinq.f32.pop %v1490
        %vm1494 = vweird.f32 %v342
        %v1495 = vand.u32 %v1491, 3
        %vm1496 = vcmp.lt.s32.totalorder %v1495, 2
        %vm1497 = vcmp.eq.s32.totalorder %v1495, 0
        %v1498 = vxor.u32 %v1493, 2147483648
        %v1499 = vsel %vm1497, %v1492, %v1498
        %vm1500 = vcmp.eq.s32.totalorder %v1495, 2
        %v1501 = vxor.u32 %v1492, 2147483648
        %v1502 = vsel %vm1500, %v1501, %v1493
        %v1503 = vsel %vm1496, %v1499, %v1502
        %v1504 = vsel %vm1494, nan, %v1503
        %v1505 = vand.u32 2147483647, %v343
        %vm1506 = vcmp.le.f32.partialorder %v1505, 0.7853982
        %vm1507 = vcmp.lt.s32.totalorder %v343, 0
        %v1508 = vand.u32 %v343, 2139095040
        %v1509 = vshrl.u32 %v1508, 23
        %v1510 = vsub.s32 %v1509, 127
        %v1511 = vand.u32 2147483647, %v343
        %v1512 = vand.u32 %v1511, 8388607
        %v1513 = vor.u32 %v1512, 8388608
        %v1514 = vsub.s32 0, %v1513
        %v1515 = vadd.s32 %v1510, 1
        %vm1516 = vcmp.gt.s32.totalorder %v1515, 0
        %v1517 = vsel %vm1516, %v1515, 0
        %v1518 = vshrl.u32 %v1517, 5
        %v1519 = vand.u32 %v1517, 31
        %v1520 = vsub.s32 32, %v1519
        %v1521 = vshrl.u32 683565275, %v1520
        %v1522 = vshll.u32 683565275, %v1519
        %v1523 = vshrl.u32 2475754826, %v1520
        %v1524 = vor.u32 %v1522, %v1523
        %v1525 = vshll.u32 2475754826, %v1519
        %v1526 = vshrl.u32 2131351028, %v1520
        %v1527 = vor.u32 %v1525, %v1526
        %v1528 = vshll.u32 2131351028, %v1519
        %v1529 = vshrl.u32 2102212464, %v1520
        %v1530 = vor.u32 %v1528, %v1529
        %v1531 = vshll.u32 2102212464, %v1519
        %v1532 = vshrl.u32 920167782, %v1520
        %v1533 = vor.u32 %v1531, %v1532
        %v1534 = vshll.u32 920167782, %v1519
        %v1535 = vshrl.u32 1326507024, %v1520
        %v1536 = vor.u32 %v1534, %v1535
        %vm1537 = vcmp.lt.s32.totalorder %v1518, 1
        %vm1538 = vcmp.lt.s32.totalorder %v1518, 2
        %vm1539 = vcmp.lt.s32.totalorder %v1518, 3
        %vm1540 = vcmp.lt.s32.totalorder %v1518, 4
        %v1541 = vsel %vm1537, %v1521, %v1524
        %v1542 = vsel %vm1540, %v1530, 2102212464
        %v1543 = vsel %vm1539, %v1527, %v1542
        %v1544 = vsel %vm1538, %v1541, %v1543
        %v1545 = vsel %vm1537, %v1524, %v1527
        %v1546 = vsel %vm1540, %v1533, 920167782
        %v1547 = vsel %vm1539, %v1530, %v1546
        %v1548 = vsel %vm1538, %v1545, %v1547
        %v1549 = vsel %vm1537, %v1527, %v1530
        %v1550 = vsel %vm1540, %v1536, 1326507024
        %v1551 = vsel %vm1539, %v1533, %v1550
        %v1552 = vsel %vm1538, %v1549, %v1551
        %v1553 = vshll.u32 %v1513, 8
        %v1554 = vmul.u32.u64.compose %v1553, %v1552
        %v1555 = vextract.low.u32 %v1554
        %v1556 = vextract.high.u32 %v1554
        %v1557 = vmul.u32.u64.compose %v1553, %v1548
        %v1558 = vextract.low.u32 %v1557
        %v1559 = vextract.high.u32 %v1557
        %v1560 = vmul.u32 %v1553, %v1544
        %v1561 = vadd.s32 %v1556, %v1558
        %vm1562 = vc.u32 %v1556, %v1558
        %v1563 = vadd.s32 %v1559, 1
        %v1564 = vsel %vm1562, %v1563, %v1559
        %v1565 = vadd.s32 %v1560, %v1564
        %v1566 = vadd.s32 %v1565, 536870912
        %v1567 = vshrl.u32 %v1566, 30
        %v1568 = vshll.u32 %v1567, 30
        %v1569 = vsub.s32 %v1565, %v1568
        %vm1570 = vcmp.lt.s32.totalorder %v1569, 0
        %v1571 = vsub.s32 0, %v1569
        %v1572 = vsel %vm1570, %v1571, %v1569
        %v1573 = vclz %v1572
        %v1574 = vsub.s32 %v1573, 2
        %vm1575 = vcmp.gt.s32.totalorder 0, %v1574
        %v1576 = vsel %vm1575, 0, %v1574
        %v1577 = vsub.s32 32, %v1576
        %v1578 = vshll.u32 %v1569, %v1576
        %v1579 = vshrl.u32 %v1561, %v1577
        %v1580 = vor.u32 %v1578, %v1579
        %v1581 = vsub.s32 4294967266, %v1576
        %v1582 = vadd.s32 %v1581, 127
        %v1583 = vshll.u32 %v1582, 23
        %v1584 = vor.u32 4788187, %v1583
        %v1585 = vand.u32 2147483647, %v1584
        %v1587 = vcvt.s32.f32 %v1580
        %v1588 = vmul.f32 %v1587, %v1585
        %v1589 = vxor.u32 %v1588, 2147483648
        %v1590 = vsel %vm1507, %v1589, %v1588
        %v1591 = vsub.s32 4, %v1567
        %v1592 = vsel %vm1507, %v1591, %v1567
        %v1593 = vsel %vm1506, %v343, %v1590
        %v1594 = vsel %vm1506, 0, %v1592
        %v1595 = vcosq.f32.pop %v1593
        %v1596 = vsinq.f32.pop %v1593
        %vm1597 = vweird.f32 %v343
        %v1598 = vand.u32 %v1594, 3
        %vm1599 = vcmp.lt.s32.totalorder %v1598, 2
        %vm1600 = vcmp.eq.s32.totalorder %v1598, 0
        %v1601 = vxor.u32 %v1596, 2147483648
        %v1602 = vsel %vm1600, %v1595, %v1601
        %vm1603 = vcmp.eq.s32.totalorder %v1598, 2
        %v1604 = vxor.u32 %v1595, 2147483648
        %v1605 = vsel %vm1603, %v1604, %v1596
        %v1606 = vsel %vm1599, %v1602, %v1605
        %v1607 = vsel %vm1597, nan, %v1606
        %v1608 = vand.u32 2147483647, %v344
        %vm1609 = vcmp.le.f32.partialorder %v1608, 0.7853982
        %vm1610 = vcmp.lt.s32.totalorder %v344, 0
        %v1611 = vand.u32 %v344, 2139095040
        %v1612 = vshrl.u32 %v1611, 23
        %v1613 = vsub.s32 %v1612, 127
        %v1614 = vand.u32 2147483647, %v344
        %v1615 = vand.u32 %v1614, 8388607
        %v1616 = vor.u32 %v1615, 8388608
        %v1617 = vsub.s32 0, %v1616
        %v1618 = vadd.s32 %v1613, 1
        %vm1619 = vcmp.gt.s32.totalorder %v1618, 0
        %v1620 = vsel %vm1619, %v1618, 0
        %v1621 = vshrl.u32 %v1620, 5
        %v1622 = vand.u32 %v1620, 31
        %v1623 = vsub.s32 32, %v1622
        %v1624 = vshrl.u32 683565275, %v1623
        %v1625 = vshll.u32 683565275, %v1622
        %v1626 = vshrl.u32 2475754826, %v1623
        %v1627 = vor.u32 %v1625, %v1626
        %v1628 = vshll.u32 2475754826, %v1622
        %v1629 = vshrl.u32 2131351028, %v1623
        %v1630 = vor.u32 %v1628, %v1629
        %v1631 = vshll.u32 2131351028, %v1622
        %v1632 = vshrl.u32 2102212464, %v1623
        %v1633 = vor.u32 %v1631, %v1632
        %v1634 = vshll.u32 2102212464, %v1622
        %v1635 = vshrl.u32 920167782, %v1623
        %v1636 = vor.u32 %v1634, %v1635
        %v1637 = vshll.u32 920167782, %v1622
        %v1638 = vshrl.u32 1326507024, %v1623
        %v1639 = vor.u32 %v1637, %v1638
        %vm1640 = vcmp.lt.s32.totalorder %v1621, 1
        %vm1641 = vcmp.lt.s32.totalorder %v1621, 2
        %vm1642 = vcmp.lt.s32.totalorder %v1621, 3
        %vm1643 = vcmp.lt.s32.totalorder %v1621, 4
        %v1644 = vsel %vm1640, %v1624, %v1627
        %v1645 = vsel %vm1643, %v1633, 2102212464
        %v1646 = vsel %vm1642, %v1630, %v1645
        %v1647 = vsel %vm1641, %v1644, %v1646
        %v1648 = vsel %vm1640, %v1627, %v1630
        %v1649 = vsel %vm1643, %v1636, 920167782
        %v1650 = vsel %vm1642, %v1633, %v1649
        %v1651 = vsel %vm1641, %v1648, %v1650
        %v1652 = vsel %vm1640, %v1630, %v1633
        %v1653 = vsel %vm1643, %v1639, 1326507024
        %v1654 = vsel %vm1642, %v1636, %v1653
        %v1655 = vsel %vm1641, %v1652, %v1654
        %v1656 = vshll.u32 %v1616, 8
        %v1657 = vmul.u32.u64.compose %v1656, %v1655
        %v1658 = vextract.low.u32 %v1657
        %v1659 = vextract.high.u32 %v1657
        %v1660 = vmul.u32.u64.compose %v1656, %v1651
        %v1661 = vextract.low.u32 %v1660
        %v1662 = vextract.high.u32 %v1660
        %v1663 = vmul.u32 %v1656, %v1647
        %v1664 = vadd.s32 %v1659, %v1661
        %vm1665 = vc.u32 %v1659, %v1661
        %v1666 = vadd.s32 %v1662, 1
        %v1667 = vsel %vm1665, %v1666, %v1662
        %v1668 = vadd.s32 %v1663, %v1667
        %v1669 = vadd.s32 %v1668, 536870912
        %v1670 = vshrl.u32 %v1669, 30
        %v1671 = vshll.u32 %v1670, 30
        %v1672 = vsub.s32 %v1668, %v1671
        %vm1673 = vcmp.lt.s32.totalorder %v1672, 0
        %v1674 = vsub.s32 0, %v1672
        %v1675 = vsel %vm1673, %v1674, %v1672
        %v1676 = vclz %v1675
        %v1677 = vsub.s32 %v1676, 2
        %vm1678 = vcmp.gt.s32.totalorder 0, %v1677
        %v1679 = vsel %vm1678, 0, %v1677
        %v1680 = vsub.s32 32, %v1679
        %v1681 = vshll.u32 %v1672, %v1679
        %v1682 = vshrl.u32 %v1664, %v1680
        %v1683 = vor.u32 %v1681, %v1682
        %v1684 = vsub.s32 4294967266, %v1679
        %v1685 = vadd.s32 %v1684, 127
        %v1686 = vshll.u32 %v1685, 23
        %v1687 = vor.u32 4788187, %v1686
        %v1688 = vand.u32 2147483647, %v1687
        %v1690 = vcvt.s32.f32 %v1683
        %v1691 = vmul.f32 %v1690, %v1688
        %v1692 = vxor.u32 %v1691, 2147483648
        %v1693 = vsel %vm1610, %v1692, %v1691
        %v1694 = vsub.s32 4, %v1670
        %v1695 = vsel %vm1610, %v1694, %v1670
        %v1696 = vsel %vm1609, %v344, %v1693
        %v1697 = vsel %vm1609, 0, %v1695
        %v1698 = vcosq.f32.pop %v1696
        %v1699 = vsinq.f32.pop %v1696
        %vm1700 = vweird.f32 %v344
        %v1701 = vand.u32 %v1697, 3
        %vm1702 = vcmp.lt.s32.totalorder %v1701, 2
        %vm1703 = vcmp.eq.s32.totalorder %v1701, 0
        %v1704 = vxor.u32 %v1699, 2147483648
        %v1705 = vsel %vm1703, %v1698, %v1704
        %vm1706 = vcmp.eq.s32.totalorder %v1701, 2
        %v1707 = vxor.u32 %v1698, 2147483648
        %v1708 = vsel %vm1706, %v1707, %v1699
        %v1709 = vsel %vm1702, %v1705, %v1708
        %v1710 = vsel %vm1700, nan, %v1709
        %v1711 = vand.u32 2147483647, %v345
        %vm1712 = vcmp.le.f32.partialorder %v1711, 0.7853982
        %vm1713 = vcmp.lt.s32.totalorder %v345, 0
        %v1714 = vand.u32 %v345, 2139095040
        %v1715 = vshrl.u32 %v1714, 23
        %v1716 = vsub.s32 %v1715, 127
        %v1717 = vand.u32 2147483647, %v345
        %v1718 = vand.u32 %v1717, 8388607
        %v1719 = vor.u32 %v1718, 8388608
        %v1720 = vsub.s32 0, %v1719
        %v1721 = vadd.s32 %v1716, 1
        %vm1722 = vcmp.gt.s32.totalorder %v1721, 0
        %v1723 = vsel %vm1722, %v1721, 0
        %v1724 = vshrl.u32 %v1723, 5
        %v1725 = vand.u32 %v1723, 31
        %v1726 = vsub.s32 32, %v1725
        %v1727 = vshrl.u32 683565275, %v1726
        %v1728 = vshll.u32 683565275, %v1725
        %v1729 = vshrl.u32 2475754826, %v1726
        %v1730 = vor.u32 %v1728, %v1729
        %v1731 = vshll.u32 2475754826, %v1725
        %v1732 = vshrl.u32 2131351028, %v1726
        %v1733 = vor.u32 %v1731, %v1732
        %v1734 = vshll.u32 2131351028, %v1725
        %v1735 = vshrl.u32 2102212464, %v1726
        %v1736 = vor.u32 %v1734, %v1735
        %v1737 = vshll.u32 2102212464, %v1725
        %v1738 = vshrl.u32 920167782, %v1726
        %v1739 = vor.u32 %v1737, %v1738
        %v1740 = vshll.u32 920167782, %v1725
        %v1741 = vshrl.u32 1326507024, %v1726
        %v1742 = vor.u32 %v1740, %v1741
        %vm1743 = vcmp.lt.s32.totalorder %v1724, 1
        %vm1744 = vcmp.lt.s32.totalorder %v1724, 2
        %vm1745 = vcmp.lt.s32.totalorder %v1724, 3
        %vm1746 = vcmp.lt.s32.totalorder %v1724, 4
        %v1747 = vsel %vm1743, %v1727, %v1730
        %v1748 = vsel %vm1746, %v1736, 2102212464
        %v1749 = vsel %vm1745, %v1733, %v1748
        %v1750 = vsel %vm1744, %v1747, %v1749
        %v1751 = vsel %vm1743, %v1730, %v1733
        %v1752 = vsel %vm1746, %v1739, 920167782
        %v1753 = vsel %vm1745, %v1736, %v1752
        %v1754 = vsel %vm1744, %v1751, %v1753
        %v1755 = vsel %vm1743, %v1733, %v1736
        %v1756 = vsel %vm1746, %v1742, 1326507024
        %v1757 = vsel %vm1745, %v1739, %v1756
        %v1758 = vsel %vm1744, %v1755, %v1757
        %v1759 = vshll.u32 %v1719, 8
        %v1760 = vmul.u32.u64.compose %v1759, %v1758
        %v1761 = vextract.low.u32 %v1760
        %v1762 = vextract.high.u32 %v1760
        %v1763 = vmul.u32.u64.compose %v1759, %v1754
        %v1764 = vextract.low.u32 %v1763
        %v1765 = vextract.high.u32 %v1763
        %v1766 = vmul.u32 %v1759, %v1750
        %v1767 = vadd.s32 %v1762, %v1764
        %vm1768 = vc.u32 %v1762, %v1764
        %v1769 = vadd.s32 %v1765, 1
        %v1770 = vsel %vm1768, %v1769, %v1765
        %v1771 = vadd.s32 %v1766, %v1770
        %v1772 = vadd.s32 %v1771, 536870912
        %v1773 = vshrl.u32 %v1772, 30
        %v1774 = vshll.u32 %v1773, 30
        %v1775 = vsub.s32 %v1771, %v1774
        %vm1776 = vcmp.lt.s32.totalorder %v1775, 0
        %v1777 = vsub.s32 0, %v1775
        %v1778 = vsel %vm1776, %v1777, %v1775
        %v1779 = vclz %v1778
        %v1780 = vsub.s32 %v1779, 2
        %vm1781 = vcmp.gt.s32.totalorder 0, %v1780
        %v1782 = vsel %vm1781, 0, %v1780
        %v1783 = vsub.s32 32, %v1782
        %v1784 = vshll.u32 %v1775, %v1782
        %v1785 = vshrl.u32 %v1767, %v1783
        %v1786 = vor.u32 %v1784, %v1785
        %v1787 = vsub.s32 4294967266, %v1782
        %v1788 = vadd.s32 %v1787, 127
        %v1789 = vshll.u32 %v1788, 23
        %v1790 = vor.u32 4788187, %v1789
        %v1791 = vand.u32 2147483647, %v1790
        %v1793 = vcvt.s32.f32 %v1786
        %v1794 = vmul.f32 %v1793, %v1791
        %v1795 = vxor.u32 %v1794, 2147483648
        %v1796 = vsel %vm1713, %v1795, %v1794
        %v1797 = vsub.s32 4, %v1773
        %v1798 = vsel %vm1713, %v1797, %v1773
        %v1799 = vsel %vm1712, %v345, %v1796
        %v1800 = vsel %vm1712, 0, %v1798
        %v1801 = vcosq.f32.pop %v1799
        %v1802 = vsinq.f32.pop %v1799
        %vm1803 = vweird.f32 %v345
        %v1804 = vand.u32 %v1800, 3
        %vm1805 = vcmp.lt.s32.totalorder %v1804, 2
        %vm1806 = vcmp.eq.s32.totalorder %v1804, 0
        %v1807 = vxor.u32 %v1802, 2147483648
        %v1808 = vsel %vm1806, %v1801, %v1807
        %vm1809 = vcmp.eq.s32.totalorder %v1804, 2
        %v1810 = vxor.u32 %v1801, 2147483648
        %v1811 = vsel %vm1809, %v1810, %v1802
        %v1812 = vsel %vm1805, %v1808, %v1811
        %v1813 = vsel %vm1803, nan, %v1812
        %v1814 = vand.u32 2147483647, %v346
        %vm1815 = vcmp.le.f32.partialorder %v1814, 0.7853982
        %vm1816 = vcmp.lt.s32.totalorder %v346, 0
        %v1817 = vand.u32 %v346, 2139095040
        %v1818 = vshrl.u32 %v1817, 23
        %v1819 = vsub.s32 %v1818, 127
        %v1820 = vand.u32 2147483647, %v346
        %v1821 = vand.u32 %v1820, 8388607
        %v1822 = vor.u32 %v1821, 8388608
        %v1823 = vsub.s32 0, %v1822
        %v1824 = vadd.s32 %v1819, 1
        %vm1825 = vcmp.gt.s32.totalorder %v1824, 0
        %v1826 = vsel %vm1825, %v1824, 0
        %v1827 = vshrl.u32 %v1826, 5
        %v1828 = vand.u32 %v1826, 31
        %v1829 = vsub.s32 32, %v1828
        %v1830 = vshrl.u32 683565275, %v1829
        %v1831 = vshll.u32 683565275, %v1828
        %v1832 = vshrl.u32 2475754826, %v1829
        %v1833 = vor.u32 %v1831, %v1832
        %v1834 = vshll.u32 2475754826, %v1828
        %v1835 = vshrl.u32 2131351028, %v1829
        %v1836 = vor.u32 %v1834, %v1835
        %v1837 = vshll.u32 2131351028, %v1828
        %v1838 = vshrl.u32 2102212464, %v1829
        %v1839 = vor.u32 %v1837, %v1838
        %v1840 = vshll.u32 2102212464, %v1828
        %v1841 = vshrl.u32 920167782, %v1829
        %v1842 = vor.u32 %v1840, %v1841
        %v1843 = vshll.u32 920167782, %v1828
        %v1844 = vshrl.u32 1326507024, %v1829
        %v1845 = vor.u32 %v1843, %v1844
        %vm1846 = vcmp.lt.s32.totalorder %v1827, 1
        %vm1847 = vcmp.lt.s32.totalorder %v1827, 2
        %vm1848 = vcmp.lt.s32.totalorder %v1827, 3
        %vm1849 = vcmp.lt.s32.totalorder %v1827, 4
        %v1850 = vsel %vm1846, %v1830, %v1833
        %v1851 = vsel %vm1849, %v1839, 2102212464
        %v1852 = vsel %vm1848, %v1836, %v1851
        %v1853 = vsel %vm1847, %v1850, %v1852
        %v1854 = vsel %vm1846, %v1833, %v1836
        %v1855 = vsel %vm1849, %v1842, 920167782
        %v1856 = vsel %vm1848, %v1839, %v1855
        %v1857 = vsel %vm1847, %v1854, %v1856
        %v1858 = vsel %vm1846, %v1836, %v1839
        %v1859 = vsel %vm1849, %v1845, 1326507024
        %v1860 = vsel %vm1848, %v1842, %v1859
        %v1861 = vsel %vm1847, %v1858, %v1860
        %v1862 = vshll.u32 %v1822, 8
        %v1863 = vmul.u32.u64.compose %v1862, %v1861
        %v1864 = vextract.low.u32 %v1863
        %v1865 = vextract.high.u32 %v1863
        %v1866 = vmul.u32.u64.compose %v1862, %v1857
        %v1867 = vextract.low.u32 %v1866
        %v1868 = vextract.high.u32 %v1866
        %v1869 = vmul.u32 %v1862, %v1853
        %v1870 = vadd.s32 %v1865, %v1867
        %vm1871 = vc.u32 %v1865, %v1867
        %v1872 = vadd.s32 %v1868, 1
        %v1873 = vsel %vm1871, %v1872, %v1868
        %v1874 = vadd.s32 %v1869, %v1873
        %v1875 = vadd.s32 %v1874, 536870912
        %v1876 = vshrl.u32 %v1875, 30
        %v1877 = vshll.u32 %v1876, 30
        %v1878 = vsub.s32 %v1874, %v1877
        %vm1879 = vcmp.lt.s32.totalorder %v1878, 0
        %v1880 = vsub.s32 0, %v1878
        %v1881 = vsel %vm1879, %v1880, %v1878
        %v1882 = vclz %v1881
        %v1883 = vsub.s32 %v1882, 2
        %vm1884 = vcmp.gt.s32.totalorder 0, %v1883
        %v1885 = vsel %vm1884, 0, %v1883
        %v1886 = vsub.s32 32, %v1885
        %v1887 = vshll.u32 %v1878, %v1885
        %v1888 = vshrl.u32 %v1870, %v1886
        %v1889 = vor.u32 %v1887, %v1888
        %v1890 = vsub.s32 4294967266, %v1885
        %v1891 = vadd.s32 %v1890, 127
        %v1892 = vshll.u32 %v1891, 23
        %v1893 = vor.u32 4788187, %v1892
        %v1894 = vand.u32 2147483647, %v1893
        %v1896 = vcvt.s32.f32 %v1889
        %v1897 = vmul.f32 %v1896, %v1894
        %v1898 = vxor.u32 %v1897, 2147483648
        %v1899 = vsel %vm1816, %v1898, %v1897
        %v1900 = vsub.s32 4, %v1876
        %v1901 = vsel %vm1816, %v1900, %v1876
        %v1902 = vsel %vm1815, %v346, %v1899
        %v1903 = vsel %vm1815, 0, %v1901
        %v1904 = vcosq.f32.pop %v1902
        %v1905 = vsinq.f32.pop %v1902
        %vm1906 = vweird.f32 %v346
        %v1907 = vand.u32 %v1903, 3
        %vm1908 = vcmp.lt.s32.totalorder %v1907, 2
        %vm1909 = vcmp.eq.s32.totalorder %v1907, 0
        %v1910 = vxor.u32 %v1905, 2147483648
        %v1911 = vsel %vm1909, %v1904, %v1910
        %vm1912 = vcmp.eq.s32.totalorder %v1907, 2
        %v1913 = vxor.u32 %v1904, 2147483648
        %v1914 = vsel %vm1912, %v1913, %v1905
        %v1915 = vsel %vm1908, %v1911, %v1914
        %v1916 = vsel %vm1906, nan, %v1915
        %v1917 = vand.u32 2147483647, %v347
        %vm1918 = vcmp.le.f32.partialorder %v1917, 0.7853982
        %vm1919 = vcmp.lt.s32.totalorder %v347, 0
        %v1920 = vand.u32 %v347, 2139095040
        %v1921 = vshrl.u32 %v1920, 23
        %v1922 = vsub.s32 %v1921, 127
        %v1923 = vand.u32 2147483647, %v347
        %v1924 = vand.u32 %v1923, 8388607
        %v1925 = vor.u32 %v1924, 8388608
        %v1926 = vsub.s32 0, %v1925
        %v1927 = vadd.s32 %v1922, 1
        %vm1928 = vcmp.gt.s32.totalorder %v1927, 0
        %v1929 = vsel %vm1928, %v1927, 0
        %v1930 = vshrl.u32 %v1929, 5
        %v1931 = vand.u32 %v1929, 31
        %v1932 = vsub.s32 32, %v1931
        %v1933 = vshrl.u32 683565275, %v1932
        %v1934 = vshll.u32 683565275, %v1931
        %v1935 = vshrl.u32 2475754826, %v1932
        %v1936 = vor.u32 %v1934, %v1935
        %v1937 = vshll.u32 2475754826, %v1931
        %v1938 = vshrl.u32 2131351028, %v1932
        %v1939 = vor.u32 %v1937, %v1938
        %v1940 = vshll.u32 2131351028, %v1931
        %v1941 = vshrl.u32 2102212464, %v1932
        %v1942 = vor.u32 %v1940, %v1941
        %v1943 = vshll.u32 2102212464, %v1931
        %v1944 = vshrl.u32 920167782, %v1932
        %v1945 = vor.u32 %v1943, %v1944
        %v1946 = vshll.u32 920167782, %v1931
        %v1947 = vshrl.u32 1326507024, %v1932
        %v1948 = vor.u32 %v1946, %v1947
        %vm1949 = vcmp.lt.s32.totalorder %v1930, 1
        %vm1950 = vcmp.lt.s32.totalorder %v1930, 2
        %vm1951 = vcmp.lt.s32.totalorder %v1930, 3
        %vm1952 = vcmp.lt.s32.totalorder %v1930, 4
        %v1953 = vsel %vm1949, %v1933, %v1936
        %v1954 = vsel %vm1952, %v1942, 2102212464
        %v1955 = vsel %vm1951, %v1939, %v1954
        %v1956 = vsel %vm1950, %v1953, %v1955
        %v1957 = vsel %vm1949, %v1936, %v1939
        %v1958 = vsel %vm1952, %v1945, 920167782
        %v1959 = vsel %vm1951, %v1942, %v1958
        %v1960 = vsel %vm1950, %v1957, %v1959
        %v1961 = vsel %vm1949, %v1939, %v1942
        %v1962 = vsel %vm1952, %v1948, 1326507024
        %v1963 = vsel %vm1951, %v1945, %v1962
        %v1964 = vsel %vm1950, %v1961, %v1963
        %v1965 = vshll.u32 %v1925, 8
        %v1966 = vmul.u32.u64.compose %v1965, %v1964
        %v1967 = vextract.low.u32 %v1966
        %v1968 = vextract.high.u32 %v1966
        %v1969 = vmul.u32.u64.compose %v1965, %v1960
        %v1970 = vextract.low.u32 %v1969
        %v1971 = vextract.high.u32 %v1969
        %v1972 = vmul.u32 %v1965, %v1956
        %v1973 = vadd.s32 %v1968, %v1970
        %vm1974 = vc.u32 %v1968, %v1970
        %v1975 = vadd.s32 %v1971, 1
        %v1976 = vsel %vm1974, %v1975, %v1971
        %v1977 = vadd.s32 %v1972, %v1976
        %v1978 = vadd.s32 %v1977, 536870912
        %v1979 = vshrl.u32 %v1978, 30
        %v1980 = vshll.u32 %v1979, 30
        %v1981 = vsub.s32 %v1977, %v1980
        %vm1982 = vcmp.lt.s32.totalorder %v1981, 0
        %v1983 = vsub.s32 0, %v1981
        %v1984 = vsel %vm1982, %v1983, %v1981
        %v1985 = vclz %v1984
        %v1986 = vsub.s32 %v1985, 2
        %vm1987 = vcmp.gt.s32.totalorder 0, %v1986
        %v1988 = vsel %vm1987, 0, %v1986
        %v1989 = vsub.s32 32, %v1988
        %v1990 = vshll.u32 %v1981, %v1988
        %v1991 = vshrl.u32 %v1973, %v1989
        %v1992 = vor.u32 %v1990, %v1991
        %v1993 = vsub.s32 4294967266, %v1988
        %v1994 = vadd.s32 %v1993, 127
        %v1995 = vshll.u32 %v1994, 23
        %v1996 = vor.u32 4788187, %v1995
        %v1997 = vand.u32 2147483647, %v1996
        %v1999 = vcvt.s32.f32 %v1992
        %v2000 = vmul.f32 %v1999, %v1997
        %v2001 = vxor.u32 %v2000, 2147483648
        %v2002 = vsel %vm1919, %v2001, %v2000
        %v2003 = vsub.s32 4, %v1979
        %v2004 = vsel %vm1919, %v2003, %v1979
        %v2005 = vsel %vm1918, %v347, %v2002
        %v2006 = vsel %vm1918, 0, %v2004
        %v2007 = vcosq.f32.pop %v2005
        %v2008 = vsinq.f32.pop %v2005
        %vm2009 = vweird.f32 %v347
        %v2010 = vand.u32 %v2006, 3
        %vm2011 = vcmp.lt.s32.totalorder %v2010, 2
        %vm2012 = vcmp.eq.s32.totalorder %v2010, 0
        %v2013 = vxor.u32 %v2008, 2147483648
        %v2014 = vsel %vm2012, %v2007, %v2013
        %vm2015 = vcmp.eq.s32.totalorder %v2010, 2
        %v2016 = vxor.u32 %v2007, 2147483648
        %v2017 = vsel %vm2015, %v2016, %v2008
        %v2018 = vsel %vm2011, %v2014, %v2017
        %v2019 = vsel %vm2009, nan, %v2018
        %v2020 = vmul.f32 %v467, %v349
        %v2021 = vmul.f32 %v571, %v351
        %v2022 = vmul.f32 %v675, %v353
        %v2023 = vmul.f32 %v779, %v355
        %v2024 = vmul.f32 %v883, %v357
        %v2025 = vmul.f32 %v987, %v359
        %v2026 = vmul.f32 %v1091, %v361
        %v2027 = vmul.f32 %v1195, %v363
        %v2028 = vsub.f32 %v2020, %v1298
        %v2029 = vsub.f32 %v2021, %v1401
        %v2030 = vsub.f32 %v2022, %v1504
        %v2031 = vsub.f32 %v2023, %v1607
        %v2032 = vsub.f32 %v2024, %v1710
        %v2033 = vsub.f32 %v2025, %v1813
        %v2034 = vsub.f32 %v2026, %v1916
        %v2035 = vsub.f32 %v2027, %v2019
        %v2036 = vmul.f32 %v2028, %v349
        %v2037 = vmul.f32 %v2029, %v351
        %v2038 = vmul.f32 %v2030, %v353
        %v2039 = vmul.f32 %v2031, %v355
        %v2040 = vmul.f32 %v2032, %v357
        %v2041 = vmul.f32 %v2033, %v359
        %v2042 = vmul.f32 %v2034, %v361
        %v2043 = vmul.f32 %v2035, %v363
        %v2044 = vlaneseq
        %v2045 = vshrl.u32 %v2044, 7
        %v2046 = vadd.s32 %v2045, 8
        %v2047 = vadd.s32 %v2045, 16
        %v2048 = vadd.s32 %v2045, 24
        %vm2049 = vcmp.lt.s32.totalorder %v2045, 8
        %vm2050 = vcmp.lt.s32.totalorder %v2046, 8
        %vm2051 = vcmp.lt.s32.totalorder %v2047, 8
        %vm2052 = vcmp.lt.s32.totalorder %v2048, 8
        %v2053 = vsel %vm2049, 1, 0
        %v2054 = vsel %vm2050, 1, 0
        %v2055 = vsel %vm2051, 1, 0
        %v2056 = vsel %vm2052, 1, 0
        %vm2057 = vcmp.eq.s32.totalorder %v2053, 1
        %vm2058 = vcmp.eq.s32.totalorder %v2054, 1
        %vm2059 = vcmp.eq.s32.totalorder %v2055, 1
        %vm2060 = vcmp.eq.s32.totalorder %v2056, 1
        %v2061 = vsel %vm2057, %v2020, 0.0
        %v2062 = vsel %vm2057, %v2021, 0.0
        %v2063 = vsel %vm2058, %v2022, 0.0
        %v2064 = vsel %vm2058, %v2023, 0.0
        %v2065 = vsel %vm2059, %v2024, 0.0
        %v2066 = vsel %vm2059, %v2025, 0.0
        %v2067 = vsel %vm2060, %v2026, 0.0
        %v2068 = vsel %vm2060, %v2027, 0.0
        %vm2069 = vcmp.ge.s32.totalorder %v2045, 8
        %vm2070 = vcmp.ge.s32.totalorder %v2046, 8
        %vm2071 = vcmp.ge.s32.totalorder %v2047, 8
        %vm2072 = vcmp.ge.s32.totalorder %v2048, 8
        %vm2073 = vcmp.lt.s32.totalorder %v2045, 16
        %vm2074 = vcmp.lt.s32.totalorder %v2046, 16
        %vm2075 = vcmp.lt.s32.totalorder %v2047, 16
        %vm2076 = vcmp.lt.s32.totalorder %v2048, 16
        %vm2077 = vmand %vm2069, %vm2073
        %vm2078 = vmand %vm2070, %vm2074
        %vm2079 = vmand %vm2071, %vm2075
        %vm2080 = vmand %vm2072, %vm2076
        %v2081 = vsel %vm2077, 1, 0
        %v2082 = vsel %vm2078, 1, 0
        %v2083 = vsel %vm2079, 1, 0
        %v2084 = vsel %vm2080, 1, 0
        %vm2085 = vcmp.eq.s32.totalorder %v2081, 1
        %vm2086 = vcmp.eq.s32.totalorder %v2082, 1
        %vm2087 = vcmp.eq.s32.totalorder %v2083, 1
        %vm2088 = vcmp.eq.s32.totalorder %v2084, 1
        %v2089 = vsel %vm2085, %v2036, %v2061
        %v2090 = vsel %vm2085, %v2037, %v2062
        %v2091 = vsel %vm2086, %v2038, %v2063
        %v2092 = vsel %vm2086, %v2039, %v2064
        %v2093 = vsel %vm2087, %v2040, %v2065
        %v2094 = vsel %vm2087, %v2041, %v2066
        %v2095 = vsel %vm2088, %v2042, %v2067
        %v2096 = vsel %vm2088, %v2043, %v2068
        %v2097 = vmul.f32 %v349, 3.0
        %v2098 = vmul.f32 %v351, 3.0
        %v2099 = vmul.f32 %v353, 3.0
        %v2100 = vmul.f32 %v355, 3.0
        %v2101 = vmul.f32 %v357, 3.0
        %v2102 = vmul.f32 %v359, 3.0
        %v2103 = vmul.f32 %v361, 3.0
        %v2104 = vmul.f32 %v363, 3.0
        %v2105 = vmul.f32 %v2097, %v2036
        %v2106 = vmul.f32 %v2098, %v2037
        %v2107 = vmul.f32 %v2099, %v2038
        %v2108 = vmul.f32 %v2100, %v2039
        %v2109 = vmul.f32 %v2101, %v2040
        %v2110 = vmul.f32 %v2102, %v2041
        %v2111 = vmul.f32 %v2103, %v2042
        %v2112 = vmul.f32 %v2104, %v2043
        %v2113 = vsub.f32 %v2105, %v2020
        %v2114 = vsub.f32 %v2106, %v2021
        %v2115 = vsub.f32 %v2107, %v2022
        %v2116 = vsub.f32 %v2108, %v2023
        %v2117 = vsub.f32 %v2109, %v2024
        %v2118 = vsub.f32 %v2110, %v2025
        %v2119 = vsub.f32 %v2111, %v2026
        %v2120 = vsub.f32 %v2112, %v2027
        %vm2121 = vcmp.ge.s32.totalorder %v2045, 16
        %vm2122 = vcmp.ge.s32.totalorder %v2046, 16
        %vm2123 = vcmp.ge.s32.totalorder %v2047, 16
        %vm2124 = vcmp.ge.s32.totalorder %v2048, 16
        %vm2125 = vcmp.lt.s32.totalorder %v2045, 24
        %vm2126 = vcmp.lt.s32.totalorder %v2046, 24
        %vm2127 = vcmp.lt.s32.totalorder %v2047, 24
        %vm2128 = vcmp.lt.s32.totalorder %v2048, 24
        %vm2129 = vmand %vm2121, %vm2125
        %vm2130 = vmand %vm2122, %vm2126
        %vm2131 = vmand %vm2123, %vm2127
        %vm2132 = vmand %vm2124, %vm2128
        %v2133 = vsel %vm2129, 1, 0
        %v2134 = vsel %vm2130, 1, 0
        %v2135 = vsel %vm2131, 1, 0
        %v2136 = vsel %vm2132, 1, 0
        %vm2137 = vcmp.eq.s32.totalorder %v2133, 1
        %vm2138 = vcmp.eq.s32.totalorder %v2134, 1
        %vm2139 = vcmp.eq.s32.totalorder %v2135, 1
        %vm2140 = vcmp.eq.s32.totalorder %v2136, 1
        %v2141 = vsel %vm2137, %v2113, %v2089
        %v2142 = vsel %vm2137, %v2114, %v2090
        %v2143 = vsel %vm2138, %v2115, %v2091
        %v2144 = vsel %vm2138, %v2116, %v2092
        %v2145 = vsel %vm2139, %v2117, %v2093
        %v2146 = vsel %vm2139, %v2118, %v2094
        %v2147 = vsel %vm2140, %v2119, %v2095
        %v2148 = vsel %vm2140, %v2120, %v2096
        %v2149 = vmul.f32 %v349, 5.0
        %v2150 = vmul.f32 %v351, 5.0
        %v2151 = vmul.f32 %v353, 5.0
        %v2152 = vmul.f32 %v355, 5.0
        %v2153 = vmul.f32 %v357, 5.0
        %v2154 = vmul.f32 %v359, 5.0
        %v2155 = vmul.f32 %v361, 5.0
        %v2156 = vmul.f32 %v363, 5.0
        %v2157 = vmul.f32 %v2149, %v2113
        %v2158 = vmul.f32 %v2150, %v2114
        %v2159 = vmul.f32 %v2151, %v2115
        %v2160 = vmul.f32 %v2152, %v2116
        %v2161 = vmul.f32 %v2153, %v2117
        %v2162 = vmul.f32 %v2154, %v2118
        %v2163 = vmul.f32 %v2155, %v2119
        %v2164 = vmul.f32 %v2156, %v2120
        %v2165 = vsub.f32 %v2157, %v2036
        %v2166 = vsub.f32 %v2158, %v2037
        %v2167 = vsub.f32 %v2159, %v2038
        %v2168 = vsub.f32 %v2160, %v2039
        %v2169 = vsub.f32 %v2161, %v2040
        %v2170 = vsub.f32 %v2162, %v2041
        %v2171 = vsub.f32 %v2163, %v2042
        %v2172 = vsub.f32 %v2164, %v2043
        %vm2173 = vcmp.ge.s32.totalorder %v2045, 24
        %vm2174 = vcmp.ge.s32.totalorder %v2046, 24
        %vm2175 = vcmp.ge.s32.totalorder %v2047, 24
        %vm2176 = vcmp.ge.s32.totalorder %v2048, 24
        %vm2177 = vcmp.lt.s32.totalorder %v2045, 32
        %vm2178 = vcmp.lt.s32.totalorder %v2046, 32
        %vm2179 = vcmp.lt.s32.totalorder %v2047, 32
        %vm2180 = vcmp.lt.s32.totalorder %v2048, 32
        %vm2181 = vmand %vm2173, %vm2177
        %vm2182 = vmand %vm2174, %vm2178
        %vm2183 = vmand %vm2175, %vm2179
        %vm2184 = vmand %vm2176, %vm2180
        %v2185 = vsel %vm2181, 1, 0
        %v2186 = vsel %vm2182, 1, 0
        %v2187 = vsel %vm2183, 1, 0
        %v2188 = vsel %vm2184, 1, 0
        %vm2189 = vcmp.eq.s32.totalorder %v2185, 1
        %vm2190 = vcmp.eq.s32.totalorder %v2186, 1
        %vm2191 = vcmp.eq.s32.totalorder %v2187, 1
        %vm2192 = vcmp.eq.s32.totalorder %v2188, 1
        %v2193 = vsel %vm2189, %v2165, %v2141
        %v2194 = vsel %vm2189, %v2166, %v2142
        %v2195 = vsel %vm2190, %v2167, %v2143
        %v2196 = vsel %vm2190, %v2168, %v2144
        %v2197 = vsel %vm2191, %v2169, %v2145
        %v2198 = vsel %vm2191, %v2170, %v2146
        %v2199 = vsel %vm2192, %v2171, %v2147
        %v2200 = vsel %vm2192, %v2172, %v2148
        %v2202 = vlaneseq
        %v2203 = vshrl.u32 %v2202, 7
        %v2204 = vsub.s32 0, %v2203
        %v2205 = vrot.slane %v304, %v2204
        %v2206 = vlaneseq
        %v2207 = vshrl.u32 %v2206, 7
        %v2208 = vsub.s32 1, %v2207
        %v2209 = vrot.slane %v304, %v2208
        %v2212 = vmul.f32 %v2193, %v2205
        %v2213 = vmul.f32 %v2194, %v2209
        %v2214 = vmul.f32 %v2195, %v2205
        %v2215 = vmul.f32 %v2196, %v2209
        %v2216 = vmul.f32 %v2197, %v2205
        %v2217 = vmul.f32 %v2198, %v2209
        %v2218 = vmul.f32 %v2199, %v2205
        %v2219 = vmul.f32 %v2200, %v2209
        %v2220 = vand.u32 2147483647, %v289
        %vm2221 = vcmp.le.f32.partialorder %v2220, 0.7853982
        %vm2222 = vcmp.lt.s32.totalorder %v289, 0
        %v2223 = vand.u32 %v289, 2139095040
        %v2224 = vshrl.u32 %v2223, 23
        %v2225 = vsub.s32 %v2224, 127
        %v2226 = vand.u32 2147483647, %v289
        %v2227 = vand.u32 %v2226, 8388607
        %v2228 = vor.u32 %v2227, 8388608
        %v2229 = vsub.s32 0, %v2228
        %v2230 = vadd.s32 %v2225, 1
        %vm2231 = vcmp.gt.s32.totalorder %v2230, 0
        %v2232 = vsel %vm2231, %v2230, 0
        %v2233 = vshrl.u32 %v2232, 5
        %v2234 = vand.u32 %v2232, 31
        %v2235 = vsub.s32 32, %v2234
        %v2236 = vshrl.u32 683565275, %v2235
        %v2237 = vshll.u32 683565275, %v2234
        %v2238 = vshrl.u32 2475754826, %v2235
        %v2239 = vor.u32 %v2237, %v2238
        %v2240 = vshll.u32 2475754826, %v2234
        %v2241 = vshrl.u32 2131351028, %v2235
        %v2242 = vor.u32 %v2240, %v2241
        %v2243 = vshll.u32 2131351028, %v2234
        %v2244 = vshrl.u32 2102212464, %v2235
        %v2245 = vor.u32 %v2243, %v2244
        %v2246 = vshll.u32 2102212464, %v2234
        %v2247 = vshrl.u32 920167782, %v2235
        %v2248 = vor.u32 %v2246, %v2247
        %v2249 = vshll.u32 920167782, %v2234
        %v2250 = vshrl.u32 1326507024, %v2235
        %v2251 = vor.u32 %v2249, %v2250
        %vm2252 = vcmp.lt.s32.totalorder %v2233, 1
        %vm2253 = vcmp.lt.s32.totalorder %v2233, 2
        %vm2254 = vcmp.lt.s32.totalorder %v2233, 3
        %vm2255 = vcmp.lt.s32.totalorder %v2233, 4
        %v2256 = vsel %vm2252, %v2236, %v2239
        %v2257 = vsel %vm2255, %v2245, 2102212464
        %v2258 = vsel %vm2254, %v2242, %v2257
        %v2259 = vsel %vm2253, %v2256, %v2258
        %v2260 = vsel %vm2252, %v2239, %v2242
        %v2261 = vsel %vm2255, %v2248, 920167782
        %v2262 = vsel %vm2254, %v2245, %v2261
        %v2263 = vsel %vm2253, %v2260, %v2262
        %v2264 = vsel %vm2252, %v2242, %v2245
        %v2265 = vsel %vm2255, %v2251, 1326507024
        %v2266 = vsel %vm2254, %v2248, %v2265
        %v2267 = vsel %vm2253, %v2264, %v2266
        %v2268 = vshll.u32 %v2228, 8
        %v2269 = vmul.u32.u64.compose %v2268, %v2267
        %v2270 = vextract.low.u32 %v2269
        %v2271 = vextract.high.u32 %v2269
        %v2272 = vmul.u32.u64.compose %v2268, %v2263
        %v2273 = vextract.low.u32 %v2272
        %v2274 = vextract.high.u32 %v2272
        %v2275 = vmul.u32 %v2268, %v2259
        %v2276 = vadd.s32 %v2271, %v2273
        %vm2277 = vc.u32 %v2271, %v2273
        %v2278 = vadd.s32 %v2274, 1
        %v2279 = vsel %vm2277, %v2278, %v2274
        %v2280 = vadd.s32 %v2275, %v2279
        %v2281 = vadd.s32 %v2280, 536870912
        %v2282 = vshrl.u32 %v2281, 30
        %v2283 = vshll.u32 %v2282, 30
        %v2284 = vsub.s32 %v2280, %v2283
        %vm2285 = vcmp.lt.s32.totalorder %v2284, 0
        %v2286 = vsub.s32 0, %v2284
        %v2287 = vsel %vm2285, %v2286, %v2284
        %v2288 = vclz %v2287
        %v2289 = vsub.s32 %v2288, 2
        %vm2290 = vcmp.gt.s32.totalorder 0, %v2289
        %v2291 = vsel %vm2290, 0, %v2289
        %v2292 = vsub.s32 32, %v2291
        %v2293 = vshll.u32 %v2284, %v2291
        %v2294 = vshrl.u32 %v2276, %v2292
        %v2295 = vor.u32 %v2293, %v2294
        %v2296 = vsub.s32 4294967266, %v2291
        %v2297 = vadd.s32 %v2296, 127
        %v2298 = vshll.u32 %v2297, 23
        %v2299 = vor.u32 4788187, %v2298
        %v2300 = vand.u32 2147483647, %v2299
        %v2302 = vcvt.s32.f32 %v2295
        %v2303 = vmul.f32 %v2302, %v2300
        %v2304 = vxor.u32 %v2303, 2147483648
        %v2305 = vsel %vm2222, %v2304, %v2303
        %v2306 = vsub.s32 4, %v2282
        %v2307 = vsel %vm2222, %v2306, %v2282
        %v2308 = vsel %vm2221, %v289, %v2305
        %v2309 = vsel %vm2221, 0, %v2307
        %v2310 = vcosq.f32.pop %v2308
        %v2311 = vsinq.f32.pop %v2308
        %vm2312 = vweird.f32 %v289
        %v2313 = vand.u32 %v2309, 3
        %vm2314 = vcmp.lt.s32.totalorder %v2313, 2
        %vm2315 = vcmp.eq.s32.totalorder %v2313, 0
        %v2316 = vxor.u32 %v2311, 2147483648
        %v2317 = vsel %vm2315, %v2310, %v2316
        %vm2318 = vcmp.eq.s32.totalorder %v2313, 2
        %v2319 = vxor.u32 %v2310, 2147483648
        %v2320 = vsel %vm2318, %v2319, %v2311
        %v2321 = vsel %vm2314, %v2317, %v2320
        %v2322 = vsel %vm2312, nan, %v2321
        %v2323 = vand.u32 2147483647, %v289
        %vm2324 = vcmp.le.f32.partialorder %v2323, 0.7853982
        %vm2325 = vcmp.lt.s32.totalorder %v289, 0
        %v2326 = vand.u32 %v289, 2139095040
        %v2327 = vshrl.u32 %v2326, 23
        %v2328 = vsub.s32 %v2327, 127
        %v2329 = vand.u32 2147483647, %v289
        %v2330 = vand.u32 %v2329, 8388607
        %v2331 = vor.u32 %v2330, 8388608
        %v2332 = vsub.s32 0, %v2331
        %v2333 = vadd.s32 %v2328, 1
        %vm2334 = vcmp.gt.s32.totalorder %v2333, 0
        %v2335 = vsel %vm2334, %v2333, 0
        %v2336 = vshrl.u32 %v2335, 5
        %v2337 = vand.u32 %v2335, 31
        %v2338 = vsub.s32 32, %v2337
        %v2339 = vshrl.u32 683565275, %v2338
        %v2340 = vshll.u32 683565275, %v2337
        %v2341 = vshrl.u32 2475754826, %v2338
        %v2342 = vor.u32 %v2340, %v2341
        %v2343 = vshll.u32 2475754826, %v2337
        %v2344 = vshrl.u32 2131351028, %v2338
        %v2345 = vor.u32 %v2343, %v2344
        %v2346 = vshll.u32 2131351028, %v2337
        %v2347 = vshrl.u32 2102212464, %v2338
        %v2348 = vor.u32 %v2346, %v2347
        %v2349 = vshll.u32 2102212464, %v2337
        %v2350 = vshrl.u32 920167782, %v2338
        %v2351 = vor.u32 %v2349, %v2350
        %v2352 = vshll.u32 920167782, %v2337
        %v2353 = vshrl.u32 1326507024, %v2338
        %v2354 = vor.u32 %v2352, %v2353
        %vm2355 = vcmp.lt.s32.totalorder %v2336, 1
        %vm2356 = vcmp.lt.s32.totalorder %v2336, 2
        %vm2357 = vcmp.lt.s32.totalorder %v2336, 3
        %vm2358 = vcmp.lt.s32.totalorder %v2336, 4
        %v2359 = vsel %vm2355, %v2339, %v2342
        %v2360 = vsel %vm2358, %v2348, 2102212464
        %v2361 = vsel %vm2357, %v2345, %v2360
        %v2362 = vsel %vm2356, %v2359, %v2361
        %v2363 = vsel %vm2355, %v2342, %v2345
        %v2364 = vsel %vm2358, %v2351, 920167782
        %v2365 = vsel %vm2357, %v2348, %v2364
        %v2366 = vsel %vm2356, %v2363, %v2365
        %v2367 = vsel %vm2355, %v2345, %v2348
        %v2368 = vsel %vm2358, %v2354, 1326507024
        %v2369 = vsel %vm2357, %v2351, %v2368
        %v2370 = vsel %vm2356, %v2367, %v2369
        %v2371 = vshll.u32 %v2331, 8
        %v2372 = vmul.u32.u64.compose %v2371, %v2370
        %v2373 = vextract.low.u32 %v2372
        %v2374 = vextract.high.u32 %v2372
        %v2375 = vmul.u32.u64.compose %v2371, %v2366
        %v2376 = vextract.low.u32 %v2375
        %v2377 = vextract.high.u32 %v2375
        %v2378 = vmul.u32 %v2371, %v2362
        %v2379 = vadd.s32 %v2374, %v2376
        %vm2380 = vc.u32 %v2374, %v2376
        %v2381 = vadd.s32 %v2377, 1
        %v2382 = vsel %vm2380, %v2381, %v2377
        %v2383 = vadd.s32 %v2378, %v2382
        %v2384 = vadd.s32 %v2383, 536870912
        %v2385 = vshrl.u32 %v2384, 30
        %v2386 = vshll.u32 %v2385, 30
        %v2387 = vsub.s32 %v2383, %v2386
        %vm2388 = vcmp.lt.s32.totalorder %v2387, 0
        %v2389 = vsub.s32 0, %v2387
        %v2390 = vsel %vm2388, %v2389, %v2387
        %v2391 = vclz %v2390
        %v2392 = vsub.s32 %v2391, 2
        %vm2393 = vcmp.gt.s32.totalorder 0, %v2392
        %v2394 = vsel %vm2393, 0, %v2392
        %v2395 = vsub.s32 32, %v2394
        %v2396 = vshll.u32 %v2387, %v2394
        %v2397 = vshrl.u32 %v2379, %v2395
        %v2398 = vor.u32 %v2396, %v2397
        %v2399 = vsub.s32 4294967266, %v2394
        %v2400 = vadd.s32 %v2399, 127
        %v2401 = vshll.u32 %v2400, 23
        %v2402 = vor.u32 4788187, %v2401
        %v2403 = vand.u32 2147483647, %v2402
        %v2405 = vcvt.s32.f32 %v2398
        %v2406 = vmul.f32 %v2405, %v2403
        %v2407 = vxor.u32 %v2406, 2147483648
        %v2408 = vsel %vm2325, %v2407, %v2406
        %v2409 = vsub.s32 4, %v2385
        %v2410 = vsel %vm2325, %v2409, %v2385
        %v2411 = vsel %vm2324, %v289, %v2408
        %v2412 = vsel %vm2324, 0, %v2410
        %v2413 = vcosq.f32.pop %v2411
        %v2414 = vsinq.f32.pop %v2411
        %vm2415 = vweird.f32 %v289
        %v2416 = vadd.s32 %v2412, 3
        %v2417 = vand.u32 %v2416, 3
        %vm2418 = vcmp.lt.s32.totalorder %v2417, 2
        %vm2419 = vcmp.eq.s32.totalorder %v2417, 0
        %v2420 = vxor.u32 %v2414, 2147483648
        %v2421 = vsel %vm2419, %v2413, %v2420
        %vm2422 = vcmp.eq.s32.totalorder %v2417, 2
        %v2423 = vxor.u32 %v2413, 2147483648
        %v2424 = vsel %vm2422, %v2423, %v2414
        %v2425 = vsel %vm2418, %v2421, %v2424
        %v2426 = vsel %vm2415, nan, %v2425
        %v2427 = vand.u32 2147483647, %v290
        %vm2428 = vcmp.le.f32.partialorder %v2427, 0.7853982
        %vm2429 = vcmp.lt.s32.totalorder %v290, 0
        %v2430 = vand.u32 %v290, 2139095040
        %v2431 = vshrl.u32 %v2430, 23
        %v2432 = vsub.s32 %v2431, 127
        %v2433 = vand.u32 2147483647, %v290
        %v2434 = vand.u32 %v2433, 8388607
        %v2435 = vor.u32 %v2434, 8388608
        %v2436 = vsub.s32 0, %v2435
        %v2437 = vadd.s32 %v2432, 1
        %vm2438 = vcmp.gt.s32.totalorder %v2437, 0
        %v2439 = vsel %vm2438, %v2437, 0
        %v2440 = vshrl.u32 %v2439, 5
        %v2441 = vand.u32 %v2439, 31
        %v2442 = vsub.s32 32, %v2441
        %v2443 = vshrl.u32 683565275, %v2442
        %v2444 = vshll.u32 683565275, %v2441
        %v2445 = vshrl.u32 2475754826, %v2442
        %v2446 = vor.u32 %v2444, %v2445
        %v2447 = vshll.u32 2475754826, %v2441
        %v2448 = vshrl.u32 2131351028, %v2442
        %v2449 = vor.u32 %v2447, %v2448
        %v2450 = vshll.u32 2131351028, %v2441
        %v2451 = vshrl.u32 2102212464, %v2442
        %v2452 = vor.u32 %v2450, %v2451
        %v2453 = vshll.u32 2102212464, %v2441
        %v2454 = vshrl.u32 920167782, %v2442
        %v2455 = vor.u32 %v2453, %v2454
        %v2456 = vshll.u32 920167782, %v2441
        %v2457 = vshrl.u32 1326507024, %v2442
        %v2458 = vor.u32 %v2456, %v2457
        %vm2459 = vcmp.lt.s32.totalorder %v2440, 1
        %vm2460 = vcmp.lt.s32.totalorder %v2440, 2
        %vm2461 = vcmp.lt.s32.totalorder %v2440, 3
        %vm2462 = vcmp.lt.s32.totalorder %v2440, 4
        %v2463 = vsel %vm2459, %v2443, %v2446
        %v2464 = vsel %vm2462, %v2452, 2102212464
        %v2465 = vsel %vm2461, %v2449, %v2464
        %v2466 = vsel %vm2460, %v2463, %v2465
        %v2467 = vsel %vm2459, %v2446, %v2449
        %v2468 = vsel %vm2462, %v2455, 920167782
        %v2469 = vsel %vm2461, %v2452, %v2468
        %v2470 = vsel %vm2460, %v2467, %v2469
        %v2471 = vsel %vm2459, %v2449, %v2452
        %v2472 = vsel %vm2462, %v2458, 1326507024
        %v2473 = vsel %vm2461, %v2455, %v2472
        %v2474 = vsel %vm2460, %v2471, %v2473
        %v2475 = vshll.u32 %v2435, 8
        %v2476 = vmul.u32.u64.compose %v2475, %v2474
        %v2477 = vextract.low.u32 %v2476
        %v2478 = vextract.high.u32 %v2476
        %v2479 = vmul.u32.u64.compose %v2475, %v2470
        %v2480 = vextract.low.u32 %v2479
        %v2481 = vextract.high.u32 %v2479
        %v2482 = vmul.u32 %v2475, %v2466
        %v2483 = vadd.s32 %v2478, %v2480
        %vm2484 = vc.u32 %v2478, %v2480
        %v2485 = vadd.s32 %v2481, 1
        %v2486 = vsel %vm2484, %v2485, %v2481
        %v2487 = vadd.s32 %v2482, %v2486
        %v2488 = vadd.s32 %v2487, 536870912
        %v2489 = vshrl.u32 %v2488, 30
        %v2490 = vshll.u32 %v2489, 30
        %v2491 = vsub.s32 %v2487, %v2490
        %vm2492 = vcmp.lt.s32.totalorder %v2491, 0
        %v2493 = vsub.s32 0, %v2491
        %v2494 = vsel %vm2492, %v2493, %v2491
        %v2495 = vclz %v2494
        %v2496 = vsub.s32 %v2495, 2
        %vm2497 = vcmp.gt.s32.totalorder 0, %v2496
        %v2498 = vsel %vm2497, 0, %v2496
        %v2499 = vsub.s32 32, %v2498
        %v2500 = vshll.u32 %v2491, %v2498
        %v2501 = vshrl.u32 %v2483, %v2499
        %v2502 = vor.u32 %v2500, %v2501
        %v2503 = vsub.s32 4294967266, %v2498
        %v2504 = vadd.s32 %v2503, 127
        %v2505 = vshll.u32 %v2504, 23
        %v2506 = vor.u32 4788187, %v2505
        %v2507 = vand.u32 2147483647, %v2506
        %v2509 = vcvt.s32.f32 %v2502
        %v2510 = vmul.f32 %v2509, %v2507
        %v2511 = vxor.u32 %v2510, 2147483648
        %v2512 = vsel %vm2429, %v2511, %v2510
        %v2513 = vsub.s32 4, %v2489
        %v2514 = vsel %vm2429, %v2513, %v2489
        %v2515 = vsel %vm2428, %v290, %v2512
        %v2516 = vsel %vm2428, 0, %v2514
        %v2517 = vcosq.f32.pop %v2515
        %v2518 = vsinq.f32.pop %v2515
        %vm2519 = vweird.f32 %v290
        %v2520 = vand.u32 %v2516, 3
        %vm2521 = vcmp.lt.s32.totalorder %v2520, 2
        %vm2522 = vcmp.eq.s32.totalorder %v2520, 0
        %v2523 = vxor.u32 %v2518, 2147483648
        %v2524 = vsel %vm2522, %v2517, %v2523
        %vm2525 = vcmp.eq.s32.totalorder %v2520, 2
        %v2526 = vxor.u32 %v2517, 2147483648
        %v2527 = vsel %vm2525, %v2526, %v2518
        %v2528 = vsel %vm2521, %v2524, %v2527
        %v2529 = vsel %vm2519, nan, %v2528
        %v2530 = vmul.f32 %v2426, %v2529
        %v2531 = vand.u32 2147483647, %v290
        %vm2532 = vcmp.le.f32.partialorder %v2531, 0.7853982
        %vm2533 = vcmp.lt.s32.totalorder %v290, 0
        %v2534 = vand.u32 %v290, 2139095040
        %v2535 = vshrl.u32 %v2534, 23
        %v2536 = vsub.s32 %v2535, 127
        %v2537 = vand.u32 2147483647, %v290
        %v2538 = vand.u32 %v2537, 8388607
        %v2539 = vor.u32 %v2538, 8388608
        %v2540 = vsub.s32 0, %v2539
        %v2541 = vadd.s32 %v2536, 1
        %vm2542 = vcmp.gt.s32.totalorder %v2541, 0
        %v2543 = vsel %vm2542, %v2541, 0
        %v2544 = vshrl.u32 %v2543, 5
        %v2545 = vand.u32 %v2543, 31
        %v2546 = vsub.s32 32, %v2545
        %v2547 = vshrl.u32 683565275, %v2546
        %v2548 = vshll.u32 683565275, %v2545
        %v2549 = vshrl.u32 2475754826, %v2546
        %v2550 = vor.u32 %v2548, %v2549
        %v2551 = vshll.u32 2475754826, %v2545
        %v2552 = vshrl.u32 2131351028, %v2546
        %v2553 = vor.u32 %v2551, %v2552
        %v2554 = vshll.u32 2131351028, %v2545
        %v2555 = vshrl.u32 2102212464, %v2546
        %v2556 = vor.u32 %v2554, %v2555
        %v2557 = vshll.u32 2102212464, %v2545
        %v2558 = vshrl.u32 920167782, %v2546
        %v2559 = vor.u32 %v2557, %v2558
        %v2560 = vshll.u32 920167782, %v2545
        %v2561 = vshrl.u32 1326507024, %v2546
        %v2562 = vor.u32 %v2560, %v2561
        %vm2563 = vcmp.lt.s32.totalorder %v2544, 1
        %vm2564 = vcmp.lt.s32.totalorder %v2544, 2
        %vm2565 = vcmp.lt.s32.totalorder %v2544, 3
        %vm2566 = vcmp.lt.s32.totalorder %v2544, 4
        %v2567 = vsel %vm2563, %v2547, %v2550
        %v2568 = vsel %vm2566, %v2556, 2102212464
        %v2569 = vsel %vm2565, %v2553, %v2568
        %v2570 = vsel %vm2564, %v2567, %v2569
        %v2571 = vsel %vm2563, %v2550, %v2553
        %v2572 = vsel %vm2566, %v2559, 920167782
        %v2573 = vsel %vm2565, %v2556, %v2572
        %v2574 = vsel %vm2564, %v2571, %v2573
        %v2575 = vsel %vm2563, %v2553, %v2556
        %v2576 = vsel %vm2566, %v2562, 1326507024
        %v2577 = vsel %vm2565, %v2559, %v2576
        %v2578 = vsel %vm2564, %v2575, %v2577
        %v2579 = vshll.u32 %v2539, 8
        %v2580 = vmul.u32.u64.compose %v2579, %v2578
        %v2581 = vextract.low.u32 %v2580
        %v2582 = vextract.high.u32 %v2580
        %v2583 = vmul.u32.u64.compose %v2579, %v2574
        %v2584 = vextract.low.u32 %v2583
        %v2585 = vextract.high.u32 %v2583
        %v2586 = vmul.u32 %v2579, %v2570
        %v2587 = vadd.s32 %v2582, %v2584
        %vm2588 = vc.u32 %v2582, %v2584
        %v2589 = vadd.s32 %v2585, 1
        %v2590 = vsel %vm2588, %v2589, %v2585
        %v2591 = vadd.s32 %v2586, %v2590
        %v2592 = vadd.s32 %v2591, 536870912
        %v2593 = vshrl.u32 %v2592, 30
        %v2594 = vshll.u32 %v2593, 30
        %v2595 = vsub.s32 %v2591, %v2594
        %vm2596 = vcmp.lt.s32.totalorder %v2595, 0
        %v2597 = vsub.s32 0, %v2595
        %v2598 = vsel %vm2596, %v2597, %v2595
        %v2599 = vclz %v2598
        %v2600 = vsub.s32 %v2599, 2
        %vm2601 = vcmp.gt.s32.totalorder 0, %v2600
        %v2602 = vsel %vm2601, 0, %v2600
        %v2603 = vsub.s32 32, %v2602
        %v2604 = vshll.u32 %v2595, %v2602
        %v2605 = vshrl.u32 %v2587, %v2603
        %v2606 = vor.u32 %v2604, %v2605
        %v2607 = vsub.s32 4294967266, %v2602
        %v2608 = vadd.s32 %v2607, 127
        %v2609 = vshll.u32 %v2608, 23
        %v2610 = vor.u32 4788187, %v2609
        %v2611 = vand.u32 2147483647, %v2610
        %v2613 = vcvt.s32.f32 %v2606
        %v2614 = vmul.f32 %v2613, %v2611
        %v2615 = vxor.u32 %v2614, 2147483648
        %v2616 = vsel %vm2533, %v2615, %v2614
        %v2617 = vsub.s32 4, %v2593
        %v2618 = vsel %vm2533, %v2617, %v2593
        %v2619 = vsel %vm2532, %v290, %v2616
        %v2620 = vsel %vm2532, 0, %v2618
        %v2621 = vcosq.f32.pop %v2619
        %v2622 = vsinq.f32.pop %v2619
        %vm2623 = vweird.f32 %v290
        %v2624 = vadd.s32 %v2620, 3
        %v2625 = vand.u32 %v2624, 3
        %vm2626 = vcmp.lt.s32.totalorder %v2625, 2
        %vm2627 = vcmp.eq.s32.totalorder %v2625, 0
        %v2628 = vxor.u32 %v2622, 2147483648
        %v2629 = vsel %vm2627, %v2621, %v2628
        %vm2630 = vcmp.eq.s32.totalorder %v2625, 2
        %v2631 = vxor.u32 %v2621, 2147483648
        %v2632 = vsel %vm2630, %v2631, %v2622
        %v2633 = vsel %vm2626, %v2629, %v2632
        %v2634 = vsel %vm2623, nan, %v2633
        %v2635 = vmul.f32 %v2426, %v2634
        %v2636 = vmul.f32 %v2635, 0.0
        %v2637 = vsub.f32 %v2530, %v2636
        %v2638 = vmul.f32 %v2530, 0.0
        %v2639 = vadd.f32 %v2638, %v2635
        %v2640 = vmul.f32 %v2530, %v2637
        %v2641 = vmul.f32 %v2635, %v2639
        %v2642 = vsub.f32 %v2640, %v2641
        %v2643 = vmul.f32 %v2530, %v2639
        %v2644 = vmul.f32 %v2635, %v2637
        %v2645 = vadd.f32 %v2643, %v2644
        %v2646 = vmul.f32 %v2530, %v2642
        %v2647 = vmul.f32 %v2635, %v2645
        %v2648 = vsub.f32 %v2646, %v2647
        %v2649 = vmul.f32 %v2530, %v2645
        %v2650 = vmul.f32 %v2635, %v2642
        %v2651 = vadd.f32 %v2649, %v2650
        %v2652 = vmul.f32 %v2322, 3.0
        %v2653 = vmul.f32 %v2652, %v2322
        %v2654 = vsub.f32 %v2653, 1.0
        %v2655 = vmul.f32 %v2654, 0.5
        %v2656 = vmul.f32 %v2322, 5.0
        %v2657 = vmul.f32 %v2656, %v2655
        %v2658 = vmul.f32 %v2322, 2.0
        %v2659 = vsub.f32 %v2657, %v2658
        %v2660 = vmul.f32 %v2659, 0.33333334
        %v2661 = vmul.f32 %v2652, -1.0
        %v2662 = vmul.f32 %v2656, %v2661
        %v2663 = vsub.f32 %v2662, -3.0
        %v2664 = vmul.f32 %v2663, 0.5
        %v2665 = vmul.f32 %v2656, 3.0
        %v2666 = vlaneseq
        %vm2667 = vcmp.ge.s32.totalorder %v2666, 0
        %vm2668 = vcmp.lt.s32.totalorder %v2666, 256
        %vm2669 = vmand %vm2667, %vm2668
        %2670 = vst.msk [vmem:[#allocation2] ss:$8 sm:$0x3] %vm2669, 1.0
        %2671 = vst.msk [vmem:[#allocation2] ss:$8 sm:$0x0] %vm2669, 1.0
        %s2672 = scalar_lea.vmem [#allocation2], 1
        %2673 = vst.msk [vmem:[%s2672] ss:$8 sm:$0x3] %vm2669, %v2322
        %2674 = vst.msk [vmem:[%s2672] ss:$8 sm:$0x0] %vm2669, %v2322
        %v2675 = vmul.f32 %v2637, -1.0
        %s2676 = scalar_lea.vmem [#allocation2], 2
        %2677 = vst.msk [vmem:[%s2676] ss:$8 sm:$0x3] %vm2669, %v2675
        %2678 = vst.msk [vmem:[%s2676] ss:$8 sm:$0x0] %vm2669, %v2675
        %v2679 = vmul.f32 %v2639, -1.0
        %s2680 = scalar_lea.vmem [#allocation2], 3
        %2681 = vst.msk [vmem:[%s2680] ss:$8 sm:$0x3] %vm2669, %v2679
        %2682 = vst.msk [vmem:[%s2680] ss:$8 sm:$0x0] %vm2669, %v2679
        %s2683 = scalar_lea.vmem [#allocation2], 4
        %2684 = vst.msk [vmem:[%s2683] ss:$8 sm:$0x3] %vm2669, %v2655
        %2685 = vst.msk [vmem:[%s2683] ss:$8 sm:$0x0] %vm2669, %v2655
        %v2686 = vmul.f32 %v2637, %v2661
        %s2687 = scalar_lea.vmem [#allocation2], 5
        %2688 = vst.msk [vmem:[%s2687] ss:$8 sm:$0x3] %vm2669, %v2686
        %2689 = vst.msk [vmem:[%s2687] ss:$8 sm:$0x0] %vm2669, %v2686
        %v2690 = vmul.f32 %v2639, %v2661
        %s2691 = scalar_lea.vmem [#allocation2], 16
        %2692 = vst.msk [vmem:[%s2691] ss:$8 sm:$0x3] %vm2669, %v2690
        %2693 = vst.msk [vmem:[%s2691] ss:$8 sm:$0x0] %vm2669, %v2690
        %v2694 = vmul.f32 %v2642, 3.0
        %s2695 = scalar_lea.vmem [#allocation2], 6
        %2696 = vst.msk [vmem:[%s2695] ss:$8 sm:$0x3] %vm2669, %v2694
        %2697 = vst.msk [vmem:[%s2695] ss:$8 sm:$0x0] %vm2669, %v2694
        %v2698 = vmul.f32 %v2645, 3.0
        %s2699 = scalar_lea.vmem [#allocation2], 7
        %2700 = vst.msk [vmem:[%s2699] ss:$8 sm:$0x3] %vm2669, %v2698
        %2701 = vst.msk [vmem:[%s2699] ss:$8 sm:$0x0] %vm2669, %v2698
        %s2702 = scalar_lea.vmem [#allocation2], 17
        %2703 = vst.msk [vmem:[%s2702] ss:$8 sm:$0x3] %vm2669, %v2660
        %2704 = vst.msk [vmem:[%s2702] ss:$8 sm:$0x0] %vm2669, %v2660
        %v2705 = vmul.f32 %v2637, %v2664
        %s2706 = scalar_lea.vmem [#allocation2], 18
        %2707 = vst.msk [vmem:[%s2706] ss:$8 sm:$0x3] %vm2669, %v2705
        %2708 = vst.msk [vmem:[%s2706] ss:$8 sm:$0x0] %vm2669, %v2705
        %v2709 = vmul.f32 %v2639, %v2664
        %s2710 = scalar_lea.vmem [#allocation2], 23
        %2711 = vst.msk [vmem:[%s2710] ss:$8 sm:$0x3] %vm2669, %v2709
        %2712 = vst.msk [vmem:[%s2710] ss:$8 sm:$0x0] %vm2669, %v2709
        %v2713 = vmul.f32 %v2642, %v2665
        %s2714 = scalar_lea.vmem [#allocation2], 19
        %2715 = vst.msk [vmem:[%s2714] ss:$8 sm:$0x3] %vm2669, %v2713
        %2716 = vst.msk [vmem:[%s2714] ss:$8 sm:$0x0] %vm2669, %v2713
        %v2717 = vmul.f32 %v2645, %v2665
        %s2718 = scalar_lea.vmem [#allocation2], 22
        %2719 = vst.msk [vmem:[%s2718] ss:$8 sm:$0x3] %vm2669, %v2717
        %2720 = vst.msk [vmem:[%s2718] ss:$8 sm:$0x0] %vm2669, %v2717
        %v2721 = vmul.f32 %v2648, -15.0
        %s2722 = scalar_lea.vmem [#allocation2], 20
        %2723 = vst.msk [vmem:[%s2722] ss:$8 sm:$0x3] %vm2669, %v2721
        %2724 = vst.msk [vmem:[%s2722] ss:$8 sm:$0x0] %vm2669, %v2721
        %v2725 = vmul.f32 %v2651, -15.0
        %s2726 = scalar_lea.vmem [#allocation2], 21
        %2727 = vst.msk [vmem:[%s2726] ss:$8 sm:$0x3] %vm2669, %v2725
        %2728 = vst.msk [vmem:[%s2726] ss:$8 sm:$0x0] %vm2669, %v2725
        %v2729 = vld [vmem:[#allocation2] sm:$0xff]
        %v2730 = vld [vmem:[#allocation2 + $0x8] sm:$0xff]
        %v2731 = vld [vmem:[#allocation2 + $0x10] sm:$0xff]
        %v2732 = vld [vmem:[#allocation2 + $0x18] sm:$0xff]
        %v2733 = vld [vmem:[%s4] sm:$0xff]
        %v2734 = vld [vmem:[%s4 + $0x8] sm:$0xff]
        %v2735 = vld [vmem:[%s4 + $0x10] sm:$0xff]
        %v2736 = vld [vmem:[%s4 + $0x18] sm:$0xff]
        %v2737 = vld [vmem:[%s4 + $0x20] sm:$0xff]
        %v2738 = vld [vmem:[%s4 + $0x28] sm:$0xff]
        %v2739 = vld [vmem:[%s4 + $0x30] sm:$0xff]
        %v2740 = vld [vmem:[%s4 + $0x38] sm:$0xff]
        %v2741 = vld [vmem:[%s4 + $0x40] sm:$0xff]
        %v2742 = vld [vmem:[%s4 + $0x48] sm:$0xff]
        %v2743 = vld [vmem:[%s4 + $0x50] sm:$0xff]
        %v2744 = vld [vmem:[%s4 + $0x58] sm:$0xff]
        %v2745 = vld [vmem:[%s4 + $0x60] sm:$0xff]
        %v2746 = vld [vmem:[%s4 + $0x68] sm:$0xff]
        %v2747 = vld [vmem:[%s4 + $0x70] sm:$0xff]
        %v2748 = vld [vmem:[%s4 + $0x78] sm:$0xff]
        %vm2749 = vcmask 261120
        %v2751 = vsel %vm2749, %v2733, 0
        %v2754 = vsel %vm2749, %v2734, 0
        %v2757 = vsel %vm2749, %v2735, 0
        %v2760 = vsel %vm2749, %v2736, 0
        %v2763 = vsel %vm2749, %v2737, 0
        %v2766 = vsel %vm2749, %v2738, 0
        %v2769 = vsel %vm2749, %v2739, 0
        %v2772 = vsel %vm2749, %v2740, 0
        %v2775 = vsel %vm2749, %v2741, 0
        %v2778 = vsel %vm2749, %v2742, 0
        %v2781 = vsel %vm2749, %v2743, 0
        %v2784 = vsel %vm2749, %v2744, 0
        %v2787 = vsel %vm2749, %v2745, 0
        %v2790 = vsel %vm2749, %v2746, 0
        %v2793 = vsel %vm2749, %v2747, 0
        %v2796 = vsel %vm2749, %v2748, 0
        %2798 = vmatprep.subr.mxu0 %v2213
        %2799 = vmatpush1.msra.mxu0 %v2212
        %2800 = vmatprep.subr.mxu0 %v2215
        %2801 = vmatpush1.msra.mxu0 %v2214
        %2802 = vmatprep.subr.mxu0 %v2217
        %2803 = vmatpush1.msra.mxu0 %v2216
        %2804 = vmatprep.subr.mxu0 %v2219
        %2805 = vmatpush1.msra.mxu0 %v2218
        %2806 = vmatprep.subr.mxu0 0.0
        %2807 = vmatpush1.msra.mxu0 0.0
        %2808 = vmatprep.subr.mxu0 0.0
        %2809 = vmatpush1.msra.mxu0 0.0
        %2810 = vmatprep.subr.mxu0 0.0
        %2811 = vmatpush1.msra.mxu0 0.0
        %2812 = vmatprep.subr.mxu0 0.0
        %2813 = vmatpush1.msra.mxu0 0.0
        %2814 = vmatprep.subr.mxu0 0.0
        %2815 = vmatpush1.msra.mxu0 0.0
        %2816 = vmatprep.subr.mxu0 0.0
        %2817 = vmatpush1.msra.mxu0 0.0
        %2818 = vmatprep.subr.mxu0 0.0
        %2819 = vmatpush1.msra.mxu0 0.0
        %2820 = vmatprep.subr.mxu0 0.0
        %2821 = vmatpush1.msra.mxu0 0.0
        %2822 = vmatprep.subr.mxu0 0.0
        %2823 = vmatpush1.msra.mxu0 0.0
        %2824 = vmatprep.subr.mxu0 0.0
        %2825 = vmatpush1.msra.mxu0 0.0
        %2826 = vmatprep.subr.mxu0 0.0
        %2827 = vmatpush1.msra.mxu0 0.0
        %2828 = vmatprep.subr.mxu0 0.0
        %2829 = vmatpush1.msra.mxu0 0.0
        %2830 = vmatprep.subr.mxu0 0.0
        %2831 = vmatpush1.msra.mxu0 0.0
        %2832 = vmatprep.subr.mxu0 0.0
        %2833 = vmatpush1.msra.mxu0 0.0
        %2834 = vmatprep.subr.mxu0 0.0
        %2835 = vmatpush1.msra.mxu0 0.0
        %2836 = vmatprep.subr.mxu0 0.0
        %2837 = vmatpush1.msra.mxu0 0.0
        %2838 = vmatprep.subr.mxu0 0.0
        %2839 = vmatpush1.msra.mxu0 0.0
        %2840 = vmatprep.subr.mxu0 0.0
        %2841 = vmatpush1.msra.mxu0 0.0
        %2842 = vmatprep.subr.mxu0 0.0
        %2843 = vmatpush1.msra.mxu0 0.0
        %2844 = vmatprep.subr.mxu0 0.0
        %2845 = vmatpush1.msra.mxu0 0.0
        %2846 = vmatprep.subr.mxu0 0.0
        %2847 = vmatpush1.msra.mxu0 0.0
        %2848 = vmatprep.subr.mxu0 0.0
        %2849 = vmatpush1.msra.mxu0 0.0
        %2850 = vmatprep.subr.mxu0 0.0
        %2851 = vmatpush1.msra.mxu0 0.0
        %2852 = vmatprep.subr.mxu0 0.0
        %2853 = vmatpush1.msra.mxu0 0.0
        %2854 = vmatprep.subr.mxu0 0.0
        %2855 = vmatpush1.msra.mxu0 0.0
        %2856 = vmatprep.subr.mxu0 0.0
        %2857 = vmatpush1.msra.mxu0 0.0
        %2858 = vmatprep.subr.mxu0 0.0
        %2859 = vmatpush1.msra.mxu0 0.0
        %2860 = vmatprep.subr.mxu0 0.0
        %2861 = vmatpush1.msra.mxu0 0.0
        %2862 = vmatprep.mubr.f32.mxu0 0.0
        %2863 = vmatmul.mubr.f32.gmra.mrb[0].mxu0 %v2751
        %v2864 = vpop.f32.mrb[0].mxu0
        %v2865 = vadd.f32 0.0, %v2864
        %v2866 = vpop.f32.mrb[0].mxu0
        %v2867 = vadd.f32 0.0, %v2866
        %2868 = vmatprep.mubr.f32.mxu0 0.0
        %2869 = vmatmul.mubr.f32.gmra.mrb[0].mxu0 %v2754
        %v2870 = vpop.f32.mrb[0].mxu0
        %v2871 = vadd.f32 0.0, %v2870
        %v2872 = vpop.f32.mrb[0].mxu0
        %v2873 = vadd.f32 0.0, %v2872
        %2874 = vmatprep.mubr.f32.mxu0 0.0
        %2875 = vmatmul.mubr.f32.gmra.mrb[0].mxu0 %v2757
        %v2876 = vpop.f32.mrb[0].mxu0
        %v2877 = vadd.f32 0.0, %v2876
        %v2878 = vpop.f32.mrb[0].mxu0
        %v2879 = vadd.f32 0.0, %v2878
        %2880 = vmatprep.mubr.f32.mxu0 0.0
        %2881 = vmatmul.mubr.f32.gmra.mrb[0].mxu0 %v2760
        %v2882 = vpop.f32.mrb[0].mxu0
        %v2883 = vadd.f32 0.0, %v2882
        %v2884 = vpop.f32.mrb[0].mxu0
        %v2885 = vadd.f32 0.0, %v2884
        %2886 = vmatprep.mubr.f32.mxu0 0.0
        %2887 = vmatmul.mubr.f32.gmra.mrb[0].mxu0 %v2763
        %v2888 = vpop.f32.mrb[0].mxu0
        %v2889 = vadd.f32 0.0, %v2888
        %v2890 = vpop.f32.mrb[0].mxu0
        %v2891 = vadd.f32 0.0, %v2890
        %2892 = vmatprep.mubr.f32.mxu0 0.0
        %2893 = vmatmul.mubr.f32.gmra.mrb[0].mxu0 %v2766
        %v2894 = vpop.f32.mrb[0].mxu0
        %v2895 = vadd.f32 0.0, %v2894
        %v2896 = vpop.f32.mrb[0].mxu0
        %v2897 = vadd.f32 0.0, %v2896
        %2898 = vmatprep.mubr.f32.mxu0 0.0
        %2899 = vmatmul.mubr.f32.gmra.mrb[0].mxu0 %v2769
        %v2900 = vpop.f32.mrb[0].mxu0
        %v2901 = vadd.f32 0.0, %v2900
        %v2902 = vpop.f32.mrb[0].mxu0
        %v2903 = vadd.f32 0.0, %v2902
        %2904 = vmatprep.mubr.f32.mxu0 0.0
        %2905 = vmatmul.mubr.f32.gmra.mrb[0].mxu0 %v2772
        %v2906 = vpop.f32.mrb[0].mxu0
        %v2907 = vadd.f32 0.0, %v2906
        %v2908 = vpop.f32.mrb[0].mxu0
        %v2909 = vadd.f32 0.0, %v2908
        %2910 = vmatprep.mubr.f32.mxu0 0.0
        %2911 = vmatmul.mubr.f32.gmra.mrb[0].mxu0 %v2775
        %v2912 = vpop.f32.mrb[0].mxu0
        %v2913 = vadd.f32 0.0, %v2912
        %v2914 = vpop.f32.mrb[0].mxu0
        %v2915 = vadd.f32 0.0, %v2914
        %2916 = vmatprep.mubr.f32.mxu0 0.0
        %2917 = vmatmul.mubr.f32.gmra.mrb[0].mxu0 %v2778
        %v2918 = vpop.f32.mrb[0].mxu0
        %v2919 = vadd.f32 0.0, %v2918
        %v2920 = vpop.f32.mrb[0].mxu0
        %v2921 = vadd.f32 0.0, %v2920
        %2922 = vmatprep.mubr.f32.mxu0 0.0
        %2923 = vmatmul.mubr.f32.gmra.mrb[0].mxu0 %v2781
        %v2924 = vpop.f32.mrb[0].mxu0
        %v2925 = vadd.f32 0.0, %v2924
        %v2926 = vpop.f32.mrb[0].mxu0
        %v2927 = vadd.f32 0.0, %v2926
        %2928 = vmatprep.mubr.f32.mxu0 0.0
        %2929 = vmatmul.mubr.f32.gmra.mrb[0].mxu0 %v2784
        %v2930 = vpop.f32.mrb[0].mxu0
        %v2931 = vadd.f32 0.0, %v2930
        %v2932 = vpop.f32.mrb[0].mxu0
        %v2933 = vadd.f32 0.0, %v2932
        %2934 = vmatprep.mubr.f32.mxu0 0.0
        %2935 = vmatmul.mubr.f32.gmra.mrb[0].mxu0 %v2787
        %v2936 = vpop.f32.mrb[0].mxu0
        %v2937 = vadd.f32 0.0, %v2936
        %v2938 = vpop.f32.mrb[0].mxu0
        %v2939 = vadd.f32 0.0, %v2938
        %2940 = vmatprep.mubr.f32.mxu0 0.0
        %2941 = vmatmul.mubr.f32.gmra.mrb[0].mxu0 %v2790
        %v2942 = vpop.f32.mrb[0].mxu0
        %v2943 = vadd.f32 0.0, %v2942
        %v2944 = vpop.f32.mrb[0].mxu0
        %v2945 = vadd.f32 0.0, %v2944
        %2946 = vmatprep.mubr.f32.mxu0 0.0
        %2947 = vmatmul.mubr.f32.gmra.mrb[0].mxu0 %v2793
        %v2948 = vpop.f32.mrb[0].mxu0
        %v2949 = vadd.f32 0.0, %v2948
        %v2950 = vpop.f32.mrb[0].mxu0
        %v2951 = vadd.f32 0.0, %v2950
        %2952 = vmatprep.mubr.f32.mxu0 0.0
        %2953 = vmatmul.mubr.f32.gmra.mrb[0].mxu0 %v2796
        %v2954 = vpop.f32.mrb[0].mxu0
        %v2955 = vadd.f32 0.0, %v2954
        %v2956 = vpop.f32.mrb[0].mxu0
        %v2957 = vadd.f32 0.0, %v2956
        %2958 = vdwg.mxu0
        %v2959 = vld [vmem:[%s5] sm:$0xff]
        %v2960 = vld [vmem:[%s5 + $0x8] sm:$0xff]
        %v2961 = vld [vmem:[%s5 + $0x10] sm:$0xff]
        %v2962 = vld [vmem:[%s5 + $0x18] sm:$0xff]
        %v2963 = vld [vmem:[%s5 + $0x20] sm:$0xff]
        %v2964 = vld [vmem:[%s5 + $0x28] sm:$0xff]
        %v2965 = vld [vmem:[%s5 + $0x30] sm:$0xff]
        %v2966 = vld [vmem:[%s5 + $0x38] sm:$0xff]
        %v2967 = vld [vmem:[%s5 + $0x40] sm:$0xff]
        %v2968 = vld [vmem:[%s5 + $0x48] sm:$0xff]
        %v2969 = vld [vmem:[%s5 + $0x50] sm:$0xff]
        %v2970 = vld [vmem:[%s5 + $0x58] sm:$0xff]
        %v2971 = vld [vmem:[%s5 + $0x60] sm:$0xff]
        %v2972 = vld [vmem:[%s5 + $0x68] sm:$0xff]
        %v2973 = vld [vmem:[%s5 + $0x70] sm:$0xff]
        %v2974 = vld [vmem:[%s5 + $0x78] sm:$0xff]
        %vm2975 = vcmask 130048
        %v2977 = vsel %vm2975, %v2959, 0
        %v2980 = vsel %vm2975, %v2960, 0
        %v2983 = vsel %vm2975, %v2961, 0
        %v2986 = vsel %vm2975, %v2962, 0
        %v2989 = vsel %vm2975, %v2963, 0
        %v2992 = vsel %vm2975, %v2964, 0
        %v2995 = vsel %vm2975, %v2965, 0
        %v2998 = vsel %vm2975, %v2966, 0
        %v3001 = vsel %vm2975, %v2967, 0
        %v3004 = vsel %vm2975, %v2968, 0
        %v3007 = vsel %vm2975, %v2969, 0
        %v3010 = vsel %vm2975, %v2970, 0
        %v3013 = vsel %vm2975, %v2971, 0
        %v3016 = vsel %vm2975, %v2972, 0
        %v3019 = vsel %vm2975, %v2973, 0
        %v3022 = vsel %vm2975, %v2974, 0
        %3024 = vmatprep.subr.mxu0 %v2730
        %3025 = vmatpush1.msra.mxu0 %v2729
        %3026 = vmatprep.subr.mxu0 %v2732
        %3027 = vmatpush1.msra.mxu0 %v2731
        %3028 = vmatprep.subr.mxu0 0.0
        %3029 = vmatpush1.msra.mxu0 0.0
        %3030 = vmatprep.subr.mxu0 0.0
        %3031 = vmatpush1.msra.mxu0 0.0
        %3032 = vmatprep.subr.mxu0 0.0
        %3033 = vmatpush1.msra.mxu0 0.0
        %3034 = vmatprep.subr.mxu0 0.0
        %3035 = vmatpush1.msra.mxu0 0.0
        %3036 = vmatprep.subr.mxu0 0.0
        %3037 = vmatpush1.msra.mxu0 0.0
        %3038 = vmatprep.subr.mxu0 0.0
        %3039 = vmatpush1.msra.mxu0 0.0
        %3040 = vmatprep.subr.mxu0 0.0
        %3041 = vmatpush1.msra.mxu0 0.0
        %3042 = vmatprep.subr.mxu0 0.0
        %3043 = vmatpush1.msra.mxu0 0.0
        %3044 = vmatprep.subr.mxu0 0.0
        %3045 = vmatpush1.msra.mxu0 0.0
        %3046 = vmatprep.subr.mxu0 0.0
        %3047 = vmatpush1.msra.mxu0 0.0
        %3048 = vmatprep.subr.mxu0 0.0
        %3049 = vmatpush1.msra.mxu0 0.0
        %3050 = vmatprep.subr.mxu0 0.0
        %3051 = vmatpush1.msra.mxu0 0.0
        %3052 = vmatprep.subr.mxu0 0.0
        %3053 = vmatpush1.msra.mxu0 0.0
        %3054 = vmatprep.subr.mxu0 0.0
        %3055 = vmatpush1.msra.mxu0 0.0
        %3056 = vmatprep.subr.mxu0 0.0
        %3057 = vmatpush1.msra.mxu0 0.0
        %3058 = vmatprep.subr.mxu0 0.0
        %3059 = vmatpush1.msra.mxu0 0.0
        %3060 = vmatprep.subr.mxu0 0.0
        %3061 = vmatpush1.msra.mxu0 0.0
        %3062 = vmatprep.subr.mxu0 0.0
        %3063 = vmatpush1.msra.mxu0 0.0
        %3064 = vmatprep.subr.mxu0 0.0
        %3065 = vmatpush1.msra.mxu0 0.0
        %3066 = vmatprep.subr.mxu0 0.0
        %3067 = vmatpush1.msra.mxu0 0.0
        %3068 = vmatprep.subr.mxu0 0.0
        %3069 = vmatpush1.msra.mxu0 0.0
        %3070 = vmatprep.subr.mxu0 0.0
        %3071 = vmatpush1.msra.mxu0 0.0
        %3072 = vmatprep.subr.mxu0 0.0
        %3073 = vmatpush1.msra.mxu0 0.0
        %3074 = vmatprep.subr.mxu0 0.0
        %3075 = vmatpush1.msra.mxu0 0.0
        %3076 = vmatprep.subr.mxu0 0.0
        %3077 = vmatpush1.msra.mxu0 0.0
        %3078 = vmatprep.subr.mxu0 0.0
        %3079 = vmatpush1.msra.mxu0 0.0
        %3080 = vmatprep.subr.mxu0 0.0
        %3081 = vmatpush1.msra.mxu0 0.0
        %3082 = vmatprep.subr.mxu0 0.0
        %3083 = vmatpush1.msra.mxu0 0.0
        %3084 = vmatprep.subr.mxu0 0.0
        %3085 = vmatpush1.msra.mxu0 0.0
        %3086 = vmatprep.subr.mxu0 0.0
        %3087 = vmatpush1.msra.mxu0 0.0
        %3088 = vmatprep.mubr.f32.mxu0 0.0
        %3089 = vmatmul.mubr.f32.gmra.mrb[0].mxu0 %v2977
        %v3090 = vpop.f32.mrb[0].mxu0
        %v3091 = vadd.f32 0.0, %v3090
        %v3092 = vpop.f32.mrb[0].mxu0
        %v3093 = vadd.f32 0.0, %v3092
        %3094 = vmatprep.mubr.f32.mxu0 0.0
        %3095 = vmatmul.mubr.f32.gmra.mrb[0].mxu0 %v2980
        %v3096 = vpop.f32.mrb[0].mxu0
        %v3097 = vadd.f32 0.0, %v3096
        %v3098 = vpop.f32.mrb[0].mxu0
        %v3099 = vadd.f32 0.0, %v3098
        %3100 = vmatprep.mubr.f32.mxu0 0.0
        %3101 = vmatmul.mubr.f32.gmra.mrb[0].mxu0 %v2983
        %v3102 = vpop.f32.mrb[0].mxu0
        %v3103 = vadd.f32 0.0, %v3102
        %v3104 = vpop.f32.mrb[0].mxu0
        %v3105 = vadd.f32 0.0, %v3104
        %3106 = vmatprep.mubr.f32.mxu0 0.0
        %3107 = vmatmul.mubr.f32.gmra.mrb[0].mxu0 %v2986
        %v3108 = vpop.f32.mrb[0].mxu0
        %v3109 = vadd.f32 0.0, %v3108
        %v3110 = vpop.f32.mrb[0].mxu0
        %v3111 = vadd.f32 0.0, %v3110
        %3112 = vmatprep.mubr.f32.mxu0 0.0
        %3113 = vmatmul.mubr.f32.gmra.mrb[0].mxu0 %v2989
        %v3114 = vpop.f32.mrb[0].mxu0
        %v3115 = vadd.f32 0.0, %v3114
        %v3116 = vpop.f32.mrb[0].mxu0
        %v3117 = vadd.f32 0.0, %v3116
        %3118 = vmatprep.mubr.f32.mxu0 0.0
        %3119 = vmatmul.mubr.f32.gmra.mrb[0].mxu0 %v2992
        %v3120 = vpop.f32.mrb[0].mxu0
        %v3121 = vadd.f32 0.0, %v3120
        %v3122 = vpop.f32.mrb[0].mxu0
        %v3123 = vadd.f32 0.0, %v3122
        %3124 = vmatprep.mubr.f32.mxu0 0.0
        %3125 = vmatmul.mubr.f32.gmra.mrb[0].mxu0 %v2995
        %v3126 = vpop.f32.mrb[0].mxu0
        %v3127 = vadd.f32 0.0, %v3126
        %v3128 = vpop.f32.mrb[0].mxu0
        %v3129 = vadd.f32 0.0, %v3128
        %3130 = vmatprep.mubr.f32.mxu0 0.0
        %3131 = vmatmul.mubr.f32.gmra.mrb[0].mxu0 %v2998
        %v3132 = vpop.f32.mrb[0].mxu0
        %v3133 = vadd.f32 0.0, %v3132
        %v3134 = vpop.f32.mrb[0].mxu0
        %v3135 = vadd.f32 0.0, %v3134
        %3136 = vmatprep.mubr.f32.mxu0 0.0
        %3137 = vmatmul.mubr.f32.gmra.mrb[0].mxu0 %v3001
        %v3138 = vpop.f32.mrb[0].mxu0
        %v3139 = vadd.f32 0.0, %v3138
        %v3140 = vpop.f32.mrb[0].mxu0
        %v3141 = vadd.f32 0.0, %v3140
        %3142 = vmatprep.mubr.f32.mxu0 0.0
        %3143 = vmatmul.mubr.f32.gmra.mrb[0].mxu0 %v3004
        %v3144 = vpop.f32.mrb[0].mxu0
        %v3145 = vadd.f32 0.0, %v3144
        %v3146 = vpop.f32.mrb[0].mxu0
        %v3147 = vadd.f32 0.0, %v3146
        %3148 = vmatprep.mubr.f32.mxu0 0.0
        %3149 = vmatmul.mubr.f32.gmra.mrb[0].mxu0 %v3007
        %v3150 = vpop.f32.mrb[0].mxu0
        %v3151 = vadd.f32 0.0, %v3150
        %v3152 = vpop.f32.mrb[0].mxu0
        %v3153 = vadd.f32 0.0, %v3152
        %3154 = vmatprep.mubr.f32.mxu0 0.0
        %3155 = vmatmul.mubr.f32.gmra.mrb[0].mxu0 %v3010
        %v3156 = vpop.f32.mrb[0].mxu0
        %v3157 = vadd.f32 0.0, %v3156
        %v3158 = vpop.f32.mrb[0].mxu0
        %v3159 = vadd.f32 0.0, %v3158
        %3160 = vmatprep.mubr.f32.mxu0 0.0
        %3161 = vmatmul.mubr.f32.gmra.mrb[0].mxu0 %v3013
        %v3162 = vpop.f32.mrb[0].mxu0
        %v3163 = vadd.f32 0.0, %v3162
        %v3164 = vpop.f32.mrb[0].mxu0
        %v3165 = vadd.f32 0.0, %v3164
        %3166 = vmatprep.mubr.f32.mxu0 0.0
        %3167 = vmatmul.mubr.f32.gmra.mrb[0].mxu0 %v3016
        %v3168 = vpop.f32.mrb[0].mxu0
        %v3169 = vadd.f32 0.0, %v3168
        %v3170 = vpop.f32.mrb[0].mxu0
        %v3171 = vadd.f32 0.0, %v3170
        %3172 = vmatprep.mubr.f32.mxu0 0.0
        %3173 = vmatmul.mubr.f32.gmra.mrb[0].mxu0 %v3019
        %v3174 = vpop.f32.mrb[0].mxu0
        %v3175 = vadd.f32 0.0, %v3174
        %v3176 = vpop.f32.mrb[0].mxu0
        %v3177 = vadd.f32 0.0, %v3176
        %3178 = vmatprep.mubr.f32.mxu0 0.0
        %3179 = vmatmul.mubr.f32.gmra.mrb[0].mxu0 %v3022
        %v3180 = vpop.f32.mrb[0].mxu0
        %v3181 = vadd.f32 0.0, %v3180
        %v3182 = vpop.f32.mrb[0].mxu0
        %v3183 = vadd.f32 0.0, %v3182
        %3184 = vdwg.mxu0
        %v3185 = vmul.f32 %v2865, %v3091
        %v3186 = vmul.f32 %v2867, %v3093
        %v3187 = vmul.f32 %v2871, %v3097
        %v3188 = vmul.f32 %v2873, %v3099
        %v3189 = vmul.f32 %v2877, %v3103
        %v3190 = vmul.f32 %v2879, %v3105
        %v3191 = vmul.f32 %v2883, %v3109
        %v3192 = vmul.f32 %v2885, %v3111
        %v3193 = vmul.f32 %v2889, %v3115
        %v3194 = vmul.f32 %v2891, %v3117
        %v3195 = vmul.f32 %v2895, %v3121
        %v3196 = vmul.f32 %v2897, %v3123
        %v3197 = vmul.f32 %v2901, %v3127
        %v3198 = vmul.f32 %v2903, %v3129
        %v3199 = vmul.f32 %v2907, %v3133
        %v3200 = vmul.f32 %v2909, %v3135
        %v3201 = vmul.f32 %v2913, %v3139
        %v3202 = vmul.f32 %v2915, %v3141
        %v3203 = vmul.f32 %v2919, %v3145
        %v3204 = vmul.f32 %v2921, %v3147
        %v3205 = vmul.f32 %v2925, %v3151
        %v3206 = vmul.f32 %v2927, %v3153
        %v3207 = vmul.f32 %v2931, %v3157
        %v3208 = vmul.f32 %v2933, %v3159
        %v3209 = vmul.f32 %v2937, %v3163
        %v3210 = vmul.f32 %v2939, %v3165
        %v3211 = vmul.f32 %v2943, %v3169
        %v3212 = vmul.f32 %v2945, %v3171
        %v3213 = vmul.f32 %v2949, %v3175
        %v3214 = vmul.f32 %v2951, %v3177
        %v3215 = vmul.f32 %v2955, %v3181
        %v3216 = vmul.f32 %v2957, %v3183
        %3217 = vxpose.xlu0.b32.start [1/16] %v3185, 128
        %3218 = vxpose.xlu0.b32.cont [2/16] %v3187, 128
        %3219 = vxpose.xlu0.b32.cont [3/16] %v3189, 128
        %3220 = vxpose.xlu0.b32.cont [4/16] %v3191, 128
        %3221 = vxpose.xlu0.b32.cont [5/16] %v3193, 128
        %3222 = vxpose.xlu0.b32.cont [6/16] %v3195, 128
        %3223 = vxpose.xlu0.b32.cont [7/16] %v3197, 128
        %3224 = vxpose.xlu0.b32.cont [8/16] %v3199, 128
        %3225 = vxpose.xlu0.b32.cont [9/16] %v3201, 128
        %3226 = vxpose.xlu0.b32.cont [10/16] %v3203, 128
        %3227 = vxpose.xlu0.b32.cont [11/16] %v3205, 128
        %3228 = vxpose.xlu0.b32.cont [12/16] %v3207, 128
        %3229 = vxpose.xlu0.b32.cont [13/16] %v3209, 128
        %3230 = vxpose.xlu0.b32.cont [14/16] %v3211, 128
        %3231 = vxpose.xlu0.b32.cont [15/16] %v3213, 128
        %3232 = vxpose.xlu0.b32.end [16/16] %v3215, 128
        %v3233 = vpop.trf.xlu0
        %v3234 = vpop.trf.xlu0
        %v3235 = vpop.trf.xlu0
        %v3236 = vpop.trf.xlu0
        %v3237 = vpop.trf.xlu0
        %v3238 = vpop.trf.xlu0
        %v3239 = vpop.trf.xlu0
        %v3240 = vpop.trf.xlu0
        %v3241 = vpop.trf.xlu0
        %v3242 = vpop.trf.xlu0
        %v3243 = vpop.trf.xlu0
        %v3244 = vpop.trf.xlu0
        %v3245 = vpop.trf.xlu0
        %v3246 = vpop.trf.xlu0
        %v3247 = vpop.trf.xlu0
        %v3248 = vpop.trf.xlu0
        %3249 = vxpose.xlu0.b32.start [1/16] %v3186, 128
        %3250 = vxpose.xlu0.b32.cont [2/16] %v3188, 128
        %3251 = vxpose.xlu0.b32.cont [3/16] %v3190, 128
        %3252 = vxpose.xlu0.b32.cont [4/16] %v3192, 128
        %3253 = vxpose.xlu0.b32.cont [5/16] %v3194, 128
        %3254 = vxpose.xlu0.b32.cont [6/16] %v3196, 128
        %3255 = vxpose.xlu0.b32.cont [7/16] %v3198, 128
        %3256 = vxpose.xlu0.b32.cont [8/16] %v3200, 128
        %3257 = vxpose.xlu0.b32.cont [9/16] %v3202, 128
        %3258 = vxpose.xlu0.b32.cont [10/16] %v3204, 128
        %3259 = vxpose.xlu0.b32.cont [11/16] %v3206, 128
        %3260 = vxpose.xlu0.b32.cont [12/16] %v3208, 128
        %3261 = vxpose.xlu0.b32.cont [13/16] %v3210, 128
        %3262 = vxpose.xlu0.b32.cont [14/16] %v3212, 128
        %3263 = vxpose.xlu0.b32.cont [15/16] %v3214, 128
        %3264 = vxpose.xlu0.b32.end [16/16] %v3216, 128
        %v3265 = vpop.trf.xlu0
        %v3266 = vpop.trf.xlu0
        %v3267 = vpop.trf.xlu0
        %v3268 = vpop.trf.xlu0
        %v3269 = vpop.trf.xlu0
        %v3270 = vpop.trf.xlu0
        %v3271 = vpop.trf.xlu0
        %v3272 = vpop.trf.xlu0
        %v3273 = vpop.trf.xlu0
        %v3274 = vpop.trf.xlu0
        %v3275 = vpop.trf.xlu0
        %v3276 = vpop.trf.xlu0
        %v3277 = vpop.trf.xlu0
        %v3278 = vpop.trf.xlu0
        %v3279 = vpop.trf.xlu0
        %v3280 = vpop.trf.xlu0
        %3281 = vst [vmem:[%s271] sm:$0xff] %v3233
        %3282 = vst [vmem:[%s271 + $0x8] sm:$0xff] %v3234
        %3283 = vst [vmem:[%s271 + $0x10] sm:$0xff] %v3235
        %3284 = vst [vmem:[%s271 + $0x18] sm:$0xff] %v3236
        %3285 = vst [vmem:[%s271 + $0x20] sm:$0xff] %v3237
        %3286 = vst [vmem:[%s271 + $0x28] sm:$0xff] %v3238
        %3287 = vst [vmem:[%s271 + $0x30] sm:$0xff] %v3239
        %3288 = vst [vmem:[%s271 + $0x38] sm:$0xff] %v3240
        %3289 = vst [vmem:[%s271 + $0x40] sm:$0xff] %v3241
        %3290 = vst [vmem:[%s271 + $0x48] sm:$0xff] %v3242
        %3291 = vst [vmem:[%s271 + $0x50] sm:$0xff] %v3243
        %3292 = vst [vmem:[%s271 + $0x58] sm:$0xff] %v3244
        %3293 = vst [vmem:[%s271 + $0x60] sm:$0xff] %v3245
        %3294 = vst [vmem:[%s271 + $0x68] sm:$0xff] %v3246
        %3295 = vst [vmem:[%s271 + $0x70] sm:$0xff] %v3247
        %3296 = vst [vmem:[%s271 + $0x78] sm:$0xff] %v3248
        %3297 = vst [vmem:[%s271 + $0x80] sm:$0xff] %v3265
        %3298 = vst [vmem:[%s271 + $0x88] sm:$0xff] %v3266
        %3299 = vst [vmem:[%s271 + $0x90] sm:$0xff] %v3267
        %3300 = vst [vmem:[%s271 + $0x98] sm:$0xff] %v3268
        %3301 = vst [vmem:[%s271 + $0xa0] sm:$0xff] %v3269
        %3302 = vst [vmem:[%s271 + $0xa8] sm:$0xff] %v3270
        %3303 = vst [vmem:[%s271 + $0xb0] sm:$0xff] %v3271
        %3304 = vst [vmem:[%s271 + $0xb8] sm:$0xff] %v3272
        %3305 = vst [vmem:[%s271 + $0xc0] sm:$0xff] %v3273
        %3306 = vst [vmem:[%s271 + $0xc8] sm:$0xff] %v3274
        %3307 = vst [vmem:[%s271 + $0xd0] sm:$0xff] %v3275
        %3308 = vst [vmem:[%s271 + $0xd8] sm:$0xff] %v3276
        %3309 = vst [vmem:[%s271 + $0xe0] sm:$0xff] %v3277
        %3310 = vst [vmem:[%s271 + $0xe8] sm:$0xff] %v3278
        %3311 = vst [vmem:[%s271 + $0xf0] sm:$0xff] %v3279
        %3312 = vst [vmem:[%s271 + $0xf8] sm:$0xff] %v3280
        %s3313 = sand.u32 %s169, 1
        %s3314 = scalar_lea.sflag [#allocation4], %s3313
        %s3315 = sand.u32 %s169, 1
        %s3316 = smul.addr %s3315, 256
        %s3317 = scalar_lea.vmem [#allocation3], %s3316
        // Predicated region
        $region45: #{tpu_custom_call.1} parent=43 // pred_check
          %p3318 = pneg %p179
        $region46: #{tpu_custom_call.1} parent=43 // pred_check_branch
          %3320 = sbr.rel (%p3318) target = $region48
        $region47: #{tpu_custom_call.1} parent=43 // pred_region
          %s3321 = smul.u32 32, %s20
          %s3323 = ssub.s32 4096, 4096
          %3324 = vsyncadd %s3314, %s3323
          %s3325 = smul.addr %s3321, 128
          %s3326 = scalar_lea.hbm %s6, %s3325
          %s3327 = sshll.u32 %s3317, 4
          %s3328 = int_to_ptr.vmem [resolvable:$true] %s3327
          %3333 = dma.vmem_to_hbm [thread:$0]  %s3328, 4096, %s3326, %s3314, 128, 128, 8
        $region48: #{tpu_custom_call.1} parent=43 // pred_fallthru
          _
      $region44: #{tpu_custom_call.1} parent=5 // pred_fallthru
        _
      %p3334 = scmp.le.s32.totalorder 2, %s15
      // Predicated region
      $region49: #{tpu_custom_call.1} parent=5 // pred_check
        %p3335 = pneg %p3334
      $region50: #{tpu_custom_call.1} parent=5 // pred_check_branch
        %3337 = sbr.rel (%p3335) target = $region52
      $region51: #{tpu_custom_call.1} parent=5 // pred_region
        %s3338 = ssub.s32 %s15, 2
        // Predicated region
        $region53: #{tpu_custom_call.1} parent=51 // pred_check
          %p3339 = pneg %p185
        $region54: #{tpu_custom_call.1} parent=51 // pred_check_branch
          %3341 = sbr.rel (%p3339) target = $region56
        $region55: #{tpu_custom_call.1} parent=51 // pred_region
          %s3342 = sand.u32 %s170, 1
          %s3343 = scalar_lea.sflag [#allocation4], %s3342
          %s3344 = sand.u32 %s170, 1
          %s3345 = smul.addr %s3344, 256
          %s3346 = scalar_lea.vmem [#allocation3], %s3345
          %3347 = dma.done %s3343, 4096
        $region56: #{tpu_custom_call.1} parent=51 // pred_fallthru
          _
      $region52: #{tpu_custom_call.1} parent=5 // pred_fallthru
        _
    $region6: #{tpu_custom_call.1} parent=1 // loop_footer
      %s19 = sadd.s32 1, %s15
    $region7: #{tpu_custom_call.1} parent=1 // loop_footer_branch
      %14 = sbr.rel target = $region3
    $region8: #{tpu_custom_call.1} parent=1 // loop_exit
      _
    %3348 = vsyncpa [#allocation4], 1
    %s3349 = scalar_lea.sflag [#allocation4], 1
    %3350 = vsyncpa %s3349, 1

</llo_original>
